<compile_context>
chip_gen: v5e
topology: v5e:2x2
jax: 0.10.0
libtpu: 0.0.40
codegen_flags: <defaults>
</compile_context>

<pallas_src>
import functools

import jax
import jax.numpy as jnp
from jax import lax
from jax.experimental import pallas as pl
from jax.experimental.pallas import tpu as pltpu

BN_EPS = 1e-5


# ----------------------------------------------------------------------------
# Fused kernel: conv1+ReLU+BN+pool -> conv2+ReLU+BN+pool -> conv3+BN(folded)
# One grid step = one batch element.
# ----------------------------------------------------------------------------
def eye_encoder_kernel(p1_ref, w1_ref, bss1_ref, w2_ref, bss2_ref, w3_ref, b3_ref,
                       o_ref, *, H, W):
    """
    p1_ref:   (1, H*W, 49)   im2col patches of the (padded) input image
    w1_ref:   (49, C1)       conv1 weights, rows ordered (kh*7 + kw)
    bss1_ref: (3, C1)        rows: conv1 bias, bn1 scale, bn1 shift
    w2_ref:   (9*C1, C2)     conv2 weights, rows ordered (kh, kw, cin)
    bss2_ref: (3, C2)        rows: conv2 bias, bn2 scale, bn2 shift
    w3_ref:   (49, C2)       conv3 weights * bn3 scale, rows ordered (kh*7 + kw)
    b3_ref:   (1, 1)         conv3 bias * bn3 scale + bn3 shift
    o_ref:    (1, 1, H/4*W/4)
    """
    H2, W2 = H // 2, W // 2
    H4, W4 = H // 4, W // 4
    C1 = w1_ref.shape[1]
    C2 = w2_ref.shape[1]

    # ---- Layer 1: 7x7 conv (Cin=1) as a single im2col matmul + bias + ReLU + BN.
    y1 = jnp.dot(p1_ref[0], w1_ref[...], preferred_element_type=jnp.float32)  # (H*W, C1)
    y1 = jnp.maximum(y1 + bss1_ref[0:1, :], 0.0)
    y1 = y1 * bss1_ref[1:2, :] + bss1_ref[2:3, :]

    # ---- MaxPool 2x2 (rows are h*W + w, channels in lanes): reshape + max.
    t = y1.reshape(H * W2, 2, C1)
    t = jnp.maximum(t[:, 0, :], t[:, 1, :])            # pool along W -> rows h*W2 + w2
    t = t.reshape(H2, 2, W2, C1)
    x2 = jnp.maximum(t[:, 0], t[:, 1])                 # pool along H -> (H2, W2, C1)

    # ---- Layer 2: 3x3 conv (C1 -> C2) as one im2col matmul (contraction 9*C1).
    zr = jnp.zeros((1, W2, C1), jnp.float32)
    zc = jnp.zeros((H2 + 2, 1, C1), jnp.float32)
    x2p = jnp.concatenate([zr, x2, zr], axis=0)
    x2p = jnp.concatenate([zc, x2p, zc], axis=1)       # (H2+2, W2+2, C1)
    p2 = jnp.concatenate(
        [x2p[kh:kh + H2, kw:kw + W2, :].reshape(H2 * W2, C1)
         for kh in range(3) for kw in range(3)],
        axis=-1)                                       # (H2*W2, 9*C1)
    y2 = jnp.dot(p2, w2_ref[...], preferred_element_type=jnp.float32)  # (H2*W2, C2)
    y2 = jnp.maximum(y2 + bss2_ref[0:1, :], 0.0)
    y2 = y2 * bss2_ref[1:2, :] + bss2_ref[2:3, :]

    # ---- MaxPool 2x2.
    t = y2.reshape(H2 * W4, 2, C2)
    t = jnp.maximum(t[:, 0, :], t[:, 1, :])            # pool along W
    t = t.reshape(H4, 2, W4, C2)
    x3 = jnp.maximum(t[:, 0], t[:, 1])                 # (H4, W4, C2)

    # ---- Layer 3: 7x7 conv (C2 -> 1), BN folded into weights; VPU tap MAC.
    # Accumulate directly in (H4, W4, C2) layout (one reshape at the end instead
    # of one per tap), then a single lane-reduction over C2.
    zr = jnp.zeros((3, W4, C2), jnp.float32)
    zc = jnp.zeros((H4 + 6, 3, C2), jnp.float32)
    x3p = jnp.concatenate([zr, x3, zr], axis=0)
    x3p = jnp.concatenate([zc, x3p, zc], axis=1)       # (H4+6, W4+6, C2)
    acc = jnp.zeros((H4, W4, C2), jnp.float32)
    for kh in range(7):
        for kw in range(7):
            win = x3p[kh:kh + H4, kw:kw + W4, :]                       # (H4, W4, C2)
            acc = acc + win * w3_ref[kh * 7 + kw].reshape(1, 1, C2)    # per-channel tap weight
    acc_flat = acc.reshape(H4 * W4, C2)                                # single relayout
    y3 = jnp.sum(acc_flat, axis=-1).reshape(1, H4 * W4) + b3_ref[...]
    o_ref[...] = y3.reshape(1, 1, H4 * W4).astype(o_ref.dtype)


# ----------------------------------------------------------------------------
# Wrapper
# ----------------------------------------------------------------------------
def bn_scale_shift(gamma, beta, mean, var):
    scale = gamma / jnp.sqrt(var + BN_EPS)
    shift = beta - mean * scale
    return scale, shift


def eye_encoder_forward(x_nchw, params):
    """Fused Pallas forward. Input NCHW (N,1,H,W), output NCHW (N,1,H/4,W/4)."""
    N, Cin, H, W = x_nchw.shape
    assert Cin == 1 and H % 4 == 0 and W % 4 == 0
    H4, W4 = H // 4, W // 4

    x = x_nchw.astype(jnp.float32)[:, 0]                       # (N, H, W)

    # Lane-dense im2col for conv1 (7x7, 'same' padding), done once in XLA.
    xp = jnp.pad(x, ((0, 0), (3, 3), (3, 3)))                  # (N, H+6, W+6)
    patches1 = jnp.stack(
        [xp[:, kh:kh + H, kw:kw + W] for kh in range(7) for kw in range(7)],
        axis=-1).reshape(N, H * W, 49)                         # (N, H*W, 49)

    C1 = params["w1"].shape[-1]
    C2 = params["w2"].shape[-1]

    w1r = params["w1"].reshape(49, C1)                         # (49, 128)
    s1, t1 = bn_scale_shift(*params["bn1"])
    bss1 = jnp.stack([params["b1"], s1, t1])                   # (3, C1)

    w2r = params["w2"].reshape(9 * C1, C2)                     # (1152, 32)
    s2, t2 = bn_scale_shift(*params["bn2"])
    bss2 = jnp.stack([params["b2"], s2, t2])                   # (3, C2)

    # Fold BN3 into conv3 weights/bias (exact: no nonlinearity in between).
    s3, t3 = bn_scale_shift(*params["bn3"])                    # shapes (1,)
    w3f = (params["w3"][..., 0] * s3[0]).reshape(49, C2)       # (49, 32)
    b3f = (params["b3"] * s3 + t3).reshape(1, 1)               # (1, 1)

    kern = functools.partial(eye_encoder_kernel, H=H, W=W)
    out = pl.pallas_call(
        kern,
        out_shape=jax.ShapeDtypeStruct((N, 1, H4 * W4), jnp.float32),
        grid=(N,),
        in_specs=[
            pl.BlockSpec((1, H * W, 49), lambda n: (n, 0, 0)),
            pl.BlockSpec((49, C1), lambda n: (0, 0)),
            pl.BlockSpec((3, C1), lambda n: (0, 0)),
            pl.BlockSpec((9 * C1, C2), lambda n: (0, 0)),
            pl.BlockSpec((3, C2), lambda n: (0, 0)),
            pl.BlockSpec((49, C2), lambda n: (0, 0)),
            pl.BlockSpec((1, 1), lambda n: (0, 0)),
        ],
        out_specs=pl.BlockSpec((1, 1, H4 * W4), lambda n: (n, 0, 0)),
        compiler_params=pltpu.CompilerParams(dimension_semantics=("parallel",)),
    )(patches1, w1r, bss1, w2r, bss2, w3f, b3f)

    return out.reshape(N, 1, H4, W4)                           # -> NCHW


# ----------------------------------------------------------------------------
# Pure-JAX reference (for correctness check)
# ----------------------------------------------------------------------------
def ref_forward(x_nchw, params):
    x = jnp.transpose(x_nchw, (0, 2, 3, 1)).astype(jnp.float32)

    def conv(x, w, b):
        y = lax.conv_general_dilated(
            x, w, window_strides=(1, 1), padding="SAME",
            dimension_numbers=("NHWC", "HWIO", "NHWC"))
        return y + b

    def bn(x, g, bta, m, v):
        return (x - m) / jnp.sqrt(v + BN_EPS) * g + bta

    def pool(x):
        N, H, W, C = x.shape
        return x.reshape(N, H // 2, 2, W // 2, 2, C).max(axis=(2, 4))

    x = pool(bn(jax.nn.relu(conv(x, params["w1"], params["b1"])), *params["bn1"]))
    x = pool(bn(jax.nn.relu(conv(x, params["w2"], params["b2"])), *params["bn2"]))
    x = bn(conv(x, params["w3"], params["b3"]), *params["bn3"])
    return jnp.transpose(x, (0, 3, 1, 2))


# ----------------------------------------------------------------------------
# Deterministic parameter init (synthetic, matches nn.Module shapes)
# ----------------------------------------------------------------------------
def init_params():
    keys = jax.random.split(jax.random.PRNGKey(0), 16)

    def bn_params(k, c):
        k1, k2, k3, k4 = jax.random.split(k, 4)
        gamma = 1.0 + 0.1 * jax.random.normal(k1, (c,), jnp.float32)
        beta = 0.1 * jax.random.normal(k2, (c,), jnp.float32)
        mean = 0.1 * jax.random.normal(k3, (c,), jnp.float32)
        var = 1.0 + 0.1 * jax.random.uniform(k4, (c,), jnp.float32)
        return (gamma, beta, mean, var)

    return {
        # Conv2d(1, 128, 7x7) / BN(128)
        "w1": 0.1 * jax.random.normal(keys[0], (7, 7, 1, 128), jnp.float32),
        "b1": 0.1 * jax.random.normal(keys[1], (128,), jnp.float32),
        "bn1": bn_params(keys[2], 128),
        # Conv2d(128, 32, 3x3) / BN(32)
        "w2": 0.05 * jax.random.normal(keys[3], (3, 3, 128, 32), jnp.float32),
        "b2": 0.1 * jax.random.normal(keys[4], (32,), jnp.float32),
        "bn2": bn_params(keys[5], 32),
        # Conv2d(32, 1, 7x7) / BN(1)
        "w3": 0.1 * jax.random.normal(keys[6], (7, 7, 32, 1), jnp.float32),
        "b3": 0.1 * jax.random.normal(keys[7], (1,), jnp.float32),
        "bn3": bn_params(keys[8], 1),
    }


if __name__ == "__main__":
    params = init_params()

    # Input matching the PyTorch module: NCHW with 1 channel.
    x = jax.random.normal(jax.random.PRNGKey(0), (2, 1, 16, 16), jnp.float32)

    out = jax.jit(eye_encoder_forward)(x, params)
    out = jax.block_until_ready(out)

    ref = jax.block_until_ready(ref_forward(x, params))

    assert out.shape == (2, 1, 4, 4), out.shape
    assert jnp.allclose(out, ref, rtol=1e-3, atol=1e-3), float(jnp.max(jnp.abs(out - ref)))

    print("KERNEL_OK")
</pallas_src>

<mosaic_0001>
module attributes {stable_mosaic.version = 11 : i64} {
  func.func @eye_encoder_kernel(%arg0: i32, %arg1: memref<1x256x49xf32, #tpu.memory_space<vmem>>, %arg2: memref<49x128xf32, #tpu.memory_space<vmem>>, %arg3: memref<3x128xf32, #tpu.memory_space<vmem>>, %arg4: memref<1152x32xf32, #tpu.memory_space<vmem>>, %arg5: memref<3x32xf32, #tpu.memory_space<vmem>>, %arg6: memref<49x32xf32, #tpu.memory_space<vmem>>, %arg7: memref<1x1xf32, #tpu.memory_space<vmem>>, %arg8: memref<1x1x16xf32, #tpu.memory_space<vmem>>) attributes {dimension_semantics = [#tpu.dimension_semantics<parallel>], iteration_bounds = array<i64: 2>, scalar_prefetch = 0 : i64, scratch_operands = 0 : i64, tpu.core_type = #tpu.core_type<tc>, window_params = [{transform_indices = @transform_0, window_bounds = array<i64: 1, 256, 49>}, {pipeline_mode = #tpu.pipeline_mode<synchronous>, transform_indices = @transform_1, window_bounds = array<i64: 49, 128>}, {pipeline_mode = #tpu.pipeline_mode<synchronous>, transform_indices = @transform_2, window_bounds = array<i64: 3, 128>}, {pipeline_mode = #tpu.pipeline_mode<synchronous>, transform_indices = @transform_3, window_bounds = array<i64: 1152, 32>}, {pipeline_mode = #tpu.pipeline_mode<synchronous>, transform_indices = @transform_4, window_bounds = array<i64: 3, 32>}, {pipeline_mode = #tpu.pipeline_mode<synchronous>, transform_indices = @transform_5, window_bounds = array<i64: 49, 32>}, {pipeline_mode = #tpu.pipeline_mode<synchronous>, transform_indices = @transform_6, window_bounds = array<i64: 1, 1>}, {transform_indices = @transform_7, window_bounds = array<i64: 1, 1, 16>}]} {
    %c0 = arith.constant 0 : index
    %c0_0 = arith.constant 0 : index
    %c0_1 = arith.constant 0 : index
    %0 = vector.load %arg1[%c0, %c0_0, %c0_1] : memref<1x256x49xf32, #tpu.memory_space<vmem>>, vector<1x256x49xf32>
    %1 = vector.shape_cast %0 : vector<1x256x49xf32> to vector<256x49xf32>
    %c0_2 = arith.constant 0 : index
    %c0_3 = arith.constant 0 : index
    %2 = vector.load %arg2[%c0_2, %c0_3] : memref<49x128xf32, #tpu.memory_space<vmem>>, vector<49x128xf32>
    %cst = arith.constant dense<0.000000e+00> : vector<256x128xf32>
    %3 = tpu.matmul %1, %2, %cst {dimension_numbers = #tpu.dot_dimension_numbers<[1], [0], [0], [1], [0, 0, 1, 1], [], []>} : vector<256x49xf32>, vector<49x128xf32>, vector<256x128xf32> -> vector<256x128xf32>
    %c0_4 = arith.constant 0 : index
    %c0_5 = arith.constant 0 : index
    %4 = vector.load %arg3[%c0_4, %c0_5] : memref<3x128xf32, #tpu.memory_space<vmem>>, vector<1x128xf32>
    %5 = vector.broadcast %4 : vector<1x128xf32> to vector<256x128xf32>
    %6 = arith.addf %3, %5 : vector<256x128xf32>
    %cst_6 = arith.constant 0.000000e+00 : f32
    %7 = vector.broadcast %cst_6 : f32 to vector<256x128xf32>
    %8 = arith.maximumf %6, %7 : vector<256x128xf32>
    %c1 = arith.constant 1 : index
    %c0_7 = arith.constant 0 : index
    %9 = vector.load %arg3[%c1, %c0_7] : memref<3x128xf32, #tpu.memory_space<vmem>>, vector<1x128xf32>
    %10 = vector.broadcast %9 : vector<1x128xf32> to vector<256x128xf32>
    %11 = arith.mulf %8, %10 : vector<256x128xf32>
    %c2 = arith.constant 2 : index
    %c0_8 = arith.constant 0 : index
    %12 = vector.load %arg3[%c2, %c0_8] : memref<3x128xf32, #tpu.memory_space<vmem>>, vector<1x128xf32>
    %13 = vector.broadcast %12 : vector<1x128xf32> to vector<256x128xf32>
    %14 = arith.addf %11, %13 : vector<256x128xf32>
    %15 = vector.shape_cast %14 : vector<256x128xf32> to vector<128x2x128xf32>
    %16 = vector.extract_strided_slice %15 {offsets = [0, 0, 0], sizes = [128, 1, 128], strides = [1, 1, 1]} : vector<128x2x128xf32> to vector<128x1x128xf32>
    %17 = vector.shape_cast %16 : vector<128x1x128xf32> to vector<128x128xf32>
    %18 = vector.extract_strided_slice %15 {offsets = [0, 1, 0], sizes = [128, 1, 128], strides = [1, 1, 1]} : vector<128x2x128xf32> to vector<128x1x128xf32>
    %19 = vector.shape_cast %18 : vector<128x1x128xf32> to vector<128x128xf32>
    %20 = arith.maximumf %17, %19 : vector<128x128xf32>
    %21 = vector.shape_cast %20 : vector<128x128xf32> to vector<8x2x8x128xf32>
    %22 = vector.extract_strided_slice %21 {offsets = [0, 0, 0, 0], sizes = [8, 1, 8, 128], strides = [1, 1, 1, 1]} : vector<8x2x8x128xf32> to vector<8x1x8x128xf32>
    %23 = vector.shape_cast %22 : vector<8x1x8x128xf32> to vector<8x8x128xf32>
    %24 = vector.extract_strided_slice %21 {offsets = [0, 1, 0, 0], sizes = [8, 1, 8, 128], strides = [1, 1, 1, 1]} : vector<8x2x8x128xf32> to vector<8x1x8x128xf32>
    %25 = vector.shape_cast %24 : vector<8x1x8x128xf32> to vector<8x8x128xf32>
    %26 = arith.maximumf %23, %25 : vector<8x8x128xf32>
    %cst_9 = arith.constant 0.000000e+00 : f32
    %27 = vector.broadcast %cst_9 : f32 to vector<1x8x128xf32>
    %cst_10 = arith.constant 0.000000e+00 : f32
    %28 = vector.broadcast %cst_10 : f32 to vector<10x1x128xf32>
    %29 = tpu.concatenate %27, %26, %27 in 0 : vector<1x8x128xf32>, vector<8x8x128xf32>, vector<1x8x128xf32> -> vector<10x8x128xf32>
    %30 = tpu.concatenate %28, %29, %28 in 1 : vector<10x1x128xf32>, vector<10x8x128xf32>, vector<10x1x128xf32> -> vector<10x10x128xf32>
    %31 = vector.extract_strided_slice %30 {offsets = [0, 0, 0], sizes = [8, 8, 128], strides = [1, 1, 1]} : vector<10x10x128xf32> to vector<8x8x128xf32>
    %32 = vector.shape_cast %31 : vector<8x8x128xf32> to vector<64x128xf32>
    %33 = vector.extract_strided_slice %30 {offsets = [0, 1, 0], sizes = [8, 8, 128], strides = [1, 1, 1]} : vector<10x10x128xf32> to vector<8x8x128xf32>
    %34 = vector.shape_cast %33 : vector<8x8x128xf32> to vector<64x128xf32>
    %35 = vector.extract_strided_slice %30 {offsets = [0, 2, 0], sizes = [8, 8, 128], strides = [1, 1, 1]} : vector<10x10x128xf32> to vector<8x8x128xf32>
    %36 = vector.shape_cast %35 : vector<8x8x128xf32> to vector<64x128xf32>
    %37 = vector.extract_strided_slice %30 {offsets = [1, 0, 0], sizes = [8, 8, 128], strides = [1, 1, 1]} : vector<10x10x128xf32> to vector<8x8x128xf32>
    %38 = vector.shape_cast %37 : vector<8x8x128xf32> to vector<64x128xf32>
    %39 = vector.extract_strided_slice %30 {offsets = [1, 1, 0], sizes = [8, 8, 128], strides = [1, 1, 1]} : vector<10x10x128xf32> to vector<8x8x128xf32>
    %40 = vector.shape_cast %39 : vector<8x8x128xf32> to vector<64x128xf32>
    %41 = vector.extract_strided_slice %30 {offsets = [1, 2, 0], sizes = [8, 8, 128], strides = [1, 1, 1]} : vector<10x10x128xf32> to vector<8x8x128xf32>
    %42 = vector.shape_cast %41 : vector<8x8x128xf32> to vector<64x128xf32>
    %43 = vector.extract_strided_slice %30 {offsets = [2, 0, 0], sizes = [8, 8, 128], strides = [1, 1, 1]} : vector<10x10x128xf32> to vector<8x8x128xf32>
    %44 = vector.shape_cast %43 : vector<8x8x128xf32> to vector<64x128xf32>
    %45 = vector.extract_strided_slice %30 {offsets = [2, 1, 0], sizes = [8, 8, 128], strides = [1, 1, 1]} : vector<10x10x128xf32> to vector<8x8x128xf32>
    %46 = vector.shape_cast %45 : vector<8x8x128xf32> to vector<64x128xf32>
    %47 = vector.extract_strided_slice %30 {offsets = [2, 2, 0], sizes = [8, 8, 128], strides = [1, 1, 1]} : vector<10x10x128xf32> to vector<8x8x128xf32>
    %48 = vector.shape_cast %47 : vector<8x8x128xf32> to vector<64x128xf32>
    %49 = tpu.concatenate %32, %34, %36, %38, %40, %42, %44, %46, %48 in 1 : vector<64x128xf32>, vector<64x128xf32>, vector<64x128xf32>, vector<64x128xf32>, vector<64x128xf32>, vector<64x128xf32>, vector<64x128xf32>, vector<64x128xf32>, vector<64x128xf32> -> vector<64x1152xf32>
    %c0_11 = arith.constant 0 : index
    %c0_12 = arith.constant 0 : index
    %50 = vector.load %arg4[%c0_11, %c0_12] : memref<1152x32xf32, #tpu.memory_space<vmem>>, vector<1152x32xf32>
    %cst_13 = arith.constant dense<0.000000e+00> : vector<64x32xf32>
    %51 = tpu.matmul %49, %50, %cst_13 {dimension_numbers = #tpu.dot_dimension_numbers<[1], [0], [0], [1], [0, 0, 1, 1], [], []>} : vector<64x1152xf32>, vector<1152x32xf32>, vector<64x32xf32> -> vector<64x32xf32>
    %c0_14 = arith.constant 0 : index
    %c0_15 = arith.constant 0 : index
    %52 = vector.load %arg5[%c0_14, %c0_15] : memref<3x32xf32, #tpu.memory_space<vmem>>, vector<1x32xf32>
    %53 = vector.broadcast %52 : vector<1x32xf32> to vector<64x32xf32>
    %54 = arith.addf %51, %53 : vector<64x32xf32>
    %cst_16 = arith.constant 0.000000e+00 : f32
    %55 = vector.broadcast %cst_16 : f32 to vector<64x32xf32>
    %56 = arith.maximumf %54, %55 : vector<64x32xf32>
    %c1_17 = arith.constant 1 : index
    %c0_18 = arith.constant 0 : index
    %57 = vector.load %arg5[%c1_17, %c0_18] : memref<3x32xf32, #tpu.memory_space<vmem>>, vector<1x32xf32>
    %58 = vector.broadcast %57 : vector<1x32xf32> to vector<64x32xf32>
    %59 = arith.mulf %56, %58 : vector<64x32xf32>
    %c2_19 = arith.constant 2 : index
    %c0_20 = arith.constant 0 : index
    %60 = vector.load %arg5[%c2_19, %c0_20] : memref<3x32xf32, #tpu.memory_space<vmem>>, vector<1x32xf32>
    %61 = vector.broadcast %60 : vector<1x32xf32> to vector<64x32xf32>
    %62 = arith.addf %59, %61 : vector<64x32xf32>
    %63 = vector.shape_cast %62 : vector<64x32xf32> to vector<32x2x32xf32>
    %64 = vector.extract_strided_slice %63 {offsets = [0, 0, 0], sizes = [32, 1, 32], strides = [1, 1, 1]} : vector<32x2x32xf32> to vector<32x1x32xf32>
    %65 = vector.shape_cast %64 : vector<32x1x32xf32> to vector<32x32xf32>
    %66 = vector.extract_strided_slice %63 {offsets = [0, 1, 0], sizes = [32, 1, 32], strides = [1, 1, 1]} : vector<32x2x32xf32> to vector<32x1x32xf32>
    %67 = vector.shape_cast %66 : vector<32x1x32xf32> to vector<32x32xf32>
    %68 = arith.maximumf %65, %67 : vector<32x32xf32>
    %69 = vector.shape_cast %68 : vector<32x32xf32> to vector<4x2x4x32xf32>
    %70 = vector.extract_strided_slice %69 {offsets = [0, 0, 0, 0], sizes = [4, 1, 4, 32], strides = [1, 1, 1, 1]} : vector<4x2x4x32xf32> to vector<4x1x4x32xf32>
    %71 = vector.shape_cast %70 : vector<4x1x4x32xf32> to vector<4x4x32xf32>
    %72 = vector.extract_strided_slice %69 {offsets = [0, 1, 0, 0], sizes = [4, 1, 4, 32], strides = [1, 1, 1, 1]} : vector<4x2x4x32xf32> to vector<4x1x4x32xf32>
    %73 = vector.shape_cast %72 : vector<4x1x4x32xf32> to vector<4x4x32xf32>
    %74 = arith.maximumf %71, %73 : vector<4x4x32xf32>
    %cst_21 = arith.constant 0.000000e+00 : f32
    %75 = vector.broadcast %cst_21 : f32 to vector<3x4x32xf32>
    %cst_22 = arith.constant 0.000000e+00 : f32
    %76 = vector.broadcast %cst_22 : f32 to vector<10x3x32xf32>
    %77 = tpu.concatenate %75, %74, %75 in 0 : vector<3x4x32xf32>, vector<4x4x32xf32>, vector<3x4x32xf32> -> vector<10x4x32xf32>
    %78 = tpu.concatenate %76, %77, %76 in 1 : vector<10x3x32xf32>, vector<10x4x32xf32>, vector<10x3x32xf32> -> vector<10x10x32xf32>
    %cst_23 = arith.constant 0.000000e+00 : f32
    %79 = vector.broadcast %cst_23 : f32 to vector<4x4x32xf32>
    %80 = vector.extract_strided_slice %78 {offsets = [0, 0, 0], sizes = [4, 4, 32], strides = [1, 1, 1]} : vector<10x10x32xf32> to vector<4x4x32xf32>
    %c0_24 = arith.constant 0 : index
    %c0_25 = arith.constant 0 : index
    %81 = vector.load %arg6[%c0_24, %c0_25] : memref<49x32xf32, #tpu.memory_space<vmem>>, vector<1x32xf32>
    %82 = vector.shape_cast %81 : vector<1x32xf32> to vector<32xf32>
    %83 = vector.shape_cast %82 : vector<32xf32> to vector<1x1x32xf32>
    %84 = vector.broadcast %83 : vector<1x1x32xf32> to vector<4x4x32xf32>
    %85 = arith.mulf %80, %84 : vector<4x4x32xf32>
    %86 = arith.addf %79, %85 : vector<4x4x32xf32>
    %87 = vector.extract_strided_slice %78 {offsets = [0, 1, 0], sizes = [4, 4, 32], strides = [1, 1, 1]} : vector<10x10x32xf32> to vector<4x4x32xf32>
    %c1_26 = arith.constant 1 : index
    %c0_27 = arith.constant 0 : index
    %88 = vector.load %arg6[%c1_26, %c0_27] : memref<49x32xf32, #tpu.memory_space<vmem>>, vector<1x32xf32>
    %89 = vector.shape_cast %88 : vector<1x32xf32> to vector<32xf32>
    %90 = vector.shape_cast %89 : vector<32xf32> to vector<1x1x32xf32>
    %91 = vector.broadcast %90 : vector<1x1x32xf32> to vector<4x4x32xf32>
    %92 = arith.mulf %87, %91 : vector<4x4x32xf32>
    %93 = arith.addf %86, %92 : vector<4x4x32xf32>
    %94 = vector.extract_strided_slice %78 {offsets = [0, 2, 0], sizes = [4, 4, 32], strides = [1, 1, 1]} : vector<10x10x32xf32> to vector<4x4x32xf32>
    %c2_28 = arith.constant 2 : index
    %c0_29 = arith.constant 0 : index
    %95 = vector.load %arg6[%c2_28, %c0_29] : memref<49x32xf32, #tpu.memory_space<vmem>>, vector<1x32xf32>
    %96 = vector.shape_cast %95 : vector<1x32xf32> to vector<32xf32>
    %97 = vector.shape_cast %96 : vector<32xf32> to vector<1x1x32xf32>
    %98 = vector.broadcast %97 : vector<1x1x32xf32> to vector<4x4x32xf32>
    %99 = arith.mulf %94, %98 : vector<4x4x32xf32>
    %100 = arith.addf %93, %99 : vector<4x4x32xf32>
    %101 = vector.extract_strided_slice %78 {offsets = [0, 3, 0], sizes = [4, 4, 32], strides = [1, 1, 1]} : vector<10x10x32xf32> to vector<4x4x32xf32>
    %c3 = arith.constant 3 : index
    %c0_30 = arith.constant 0 : index
    %102 = vector.load %arg6[%c3, %c0_30] : memref<49x32xf32, #tpu.memory_space<vmem>>, vector<1x32xf32>
    %103 = vector.shape_cast %102 : vector<1x32xf32> to vector<32xf32>
    %104 = vector.shape_cast %103 : vector<32xf32> to vector<1x1x32xf32>
    %105 = vector.broadcast %104 : vector<1x1x32xf32> to vector<4x4x32xf32>
    %106 = arith.mulf %101, %105 : vector<4x4x32xf32>
    %107 = arith.addf %100, %106 : vector<4x4x32xf32>
    %108 = vector.extract_strided_slice %78 {offsets = [0, 4, 0], sizes = [4, 4, 32], strides = [1, 1, 1]} : vector<10x10x32xf32> to vector<4x4x32xf32>
    %c4 = arith.constant 4 : index
    %c0_31 = arith.constant 0 : index
    %109 = vector.load %arg6[%c4, %c0_31] : memref<49x32xf32, #tpu.memory_space<vmem>>, vector<1x32xf32>
    %110 = vector.shape_cast %109 : vector<1x32xf32> to vector<32xf32>
    %111 = vector.shape_cast %110 : vector<32xf32> to vector<1x1x32xf32>
    %112 = vector.broadcast %111 : vector<1x1x32xf32> to vector<4x4x32xf32>
    %113 = arith.mulf %108, %112 : vector<4x4x32xf32>
    %114 = arith.addf %107, %113 : vector<4x4x32xf32>
    %115 = vector.extract_strided_slice %78 {offsets = [0, 5, 0], sizes = [4, 4, 32], strides = [1, 1, 1]} : vector<10x10x32xf32> to vector<4x4x32xf32>
    %c5 = arith.constant 5 : index
    %c0_32 = arith.constant 0 : index
    %116 = vector.load %arg6[%c5, %c0_32] : memref<49x32xf32, #tpu.memory_space<vmem>>, vector<1x32xf32>
    %117 = vector.shape_cast %116 : vector<1x32xf32> to vector<32xf32>
    %118 = vector.shape_cast %117 : vector<32xf32> to vector<1x1x32xf32>
    %119 = vector.broadcast %118 : vector<1x1x32xf32> to vector<4x4x32xf32>
    %120 = arith.mulf %115, %119 : vector<4x4x32xf32>
    %121 = arith.addf %114, %120 : vector<4x4x32xf32>
    %122 = vector.extract_strided_slice %78 {offsets = [0, 6, 0], sizes = [4, 4, 32], strides = [1, 1, 1]} : vector<10x10x32xf32> to vector<4x4x32xf32>
    %c6 = arith.constant 6 : index
    %c0_33 = arith.constant 0 : index
    %123 = vector.load %arg6[%c6, %c0_33] : memref<49x32xf32, #tpu.memory_space<vmem>>, vector<1x32xf32>
    %124 = vector.shape_cast %123 : vector<1x32xf32> to vector<32xf32>
    %125 = vector.shape_cast %124 : vector<32xf32> to vector<1x1x32xf32>
    %126 = vector.broadcast %125 : vector<1x1x32xf32> to vector<4x4x32xf32>
    %127 = arith.mulf %122, %126 : vector<4x4x32xf32>
    %128 = arith.addf %121, %127 : vector<4x4x32xf32>
    %129 = vector.extract_strided_slice %78 {offsets = [1, 0, 0], sizes = [4, 4, 32], strides = [1, 1, 1]} : vector<10x10x32xf32> to vector<4x4x32xf32>
    %c7 = arith.constant 7 : index
    %c0_34 = arith.constant 0 : index
    %130 = vector.load %arg6[%c7, %c0_34] : memref<49x32xf32, #tpu.memory_space<vmem>>, vector<1x32xf32>
    %131 = vector.shape_cast %130 : vector<1x32xf32> to vector<32xf32>
    %132 = vector.shape_cast %131 : vector<32xf32> to vector<1x1x32xf32>
    %133 = vector.broadcast %132 : vector<1x1x32xf32> to vector<4x4x32xf32>
    %134 = arith.mulf %129, %133 : vector<4x4x32xf32>
    %135 = arith.addf %128, %134 : vector<4x4x32xf32>
    %136 = vector.extract_strided_slice %78 {offsets = [1, 1, 0], sizes = [4, 4, 32], strides = [1, 1, 1]} : vector<10x10x32xf32> to vector<4x4x32xf32>
    %c8 = arith.constant 8 : index
    %c0_35 = arith.constant 0 : index
    %137 = vector.load %arg6[%c8, %c0_35] : memref<49x32xf32, #tpu.memory_space<vmem>>, vector<1x32xf32>
    %138 = vector.shape_cast %137 : vector<1x32xf32> to vector<32xf32>
    %139 = vector.shape_cast %138 : vector<32xf32> to vector<1x1x32xf32>
    %140 = vector.broadcast %139 : vector<1x1x32xf32> to vector<4x4x32xf32>
    %141 = arith.mulf %136, %140 : vector<4x4x32xf32>
    %142 = arith.addf %135, %141 : vector<4x4x32xf32>
    %143 = vector.extract_strided_slice %78 {offsets = [1, 2, 0], sizes = [4, 4, 32], strides = [1, 1, 1]} : vector<10x10x32xf32> to vector<4x4x32xf32>
    %c9 = arith.constant 9 : index
    %c0_36 = arith.constant 0 : index
    %144 = vector.load %arg6[%c9, %c0_36] : memref<49x32xf32, #tpu.memory_space<vmem>>, vector<1x32xf32>
    %145 = vector.shape_cast %144 : vector<1x32xf32> to vector<32xf32>
    %146 = vector.shape_cast %145 : vector<32xf32> to vector<1x1x32xf32>
    %147 = vector.broadcast %146 : vector<1x1x32xf32> to vector<4x4x32xf32>
    %148 = arith.mulf %143, %147 : vector<4x4x32xf32>
    %149 = arith.addf %142, %148 : vector<4x4x32xf32>
    %150 = vector.extract_strided_slice %78 {offsets = [1, 3, 0], sizes = [4, 4, 32], strides = [1, 1, 1]} : vector<10x10x32xf32> to vector<4x4x32xf32>
    %c10 = arith.constant 10 : index
    %c0_37 = arith.constant 0 : index
    %151 = vector.load %arg6[%c10, %c0_37] : memref<49x32xf32, #tpu.memory_space<vmem>>, vector<1x32xf32>
    %152 = vector.shape_cast %151 : vector<1x32xf32> to vector<32xf32>
    %153 = vector.shape_cast %152 : vector<32xf32> to vector<1x1x32xf32>
    %154 = vector.broadcast %153 : vector<1x1x32xf32> to vector<4x4x32xf32>
    %155 = arith.mulf %150, %154 : vector<4x4x32xf32>
    %156 = arith.addf %149, %155 : vector<4x4x32xf32>
    %157 = vector.extract_strided_slice %78 {offsets = [1, 4, 0], sizes = [4, 4, 32], strides = [1, 1, 1]} : vector<10x10x32xf32> to vector<4x4x32xf32>
    %c11 = arith.constant 11 : index
    %c0_38 = arith.constant 0 : index
    %158 = vector.load %arg6[%c11, %c0_38] : memref<49x32xf32, #tpu.memory_space<vmem>>, vector<1x32xf32>
    %159 = vector.shape_cast %158 : vector<1x32xf32> to vector<32xf32>
    %160 = vector.shape_cast %159 : vector<32xf32> to vector<1x1x32xf32>
    %161 = vector.broadcast %160 : vector<1x1x32xf32> to vector<4x4x32xf32>
    %162 = arith.mulf %157, %161 : vector<4x4x32xf32>
    %163 = arith.addf %156, %162 : vector<4x4x32xf32>
    %164 = vector.extract_strided_slice %78 {offsets = [1, 5, 0], sizes = [4, 4, 32], strides = [1, 1, 1]} : vector<10x10x32xf32> to vector<4x4x32xf32>
    %c12 = arith.constant 12 : index
    %c0_39 = arith.constant 0 : index
    %165 = vector.load %arg6[%c12, %c0_39] : memref<49x32xf32, #tpu.memory_space<vmem>>, vector<1x32xf32>
    %166 = vector.shape_cast %165 : vector<1x32xf32> to vector<32xf32>
    %167 = vector.shape_cast %166 : vector<32xf32> to vector<1x1x32xf32>
    %168 = vector.broadcast %167 : vector<1x1x32xf32> to vector<4x4x32xf32>
    %169 = arith.mulf %164, %168 : vector<4x4x32xf32>
    %170 = arith.addf %163, %169 : vector<4x4x32xf32>
    %171 = vector.extract_strided_slice %78 {offsets = [1, 6, 0], sizes = [4, 4, 32], strides = [1, 1, 1]} : vector<10x10x32xf32> to vector<4x4x32xf32>
    %c13 = arith.constant 13 : index
    %c0_40 = arith.constant 0 : index
    %172 = vector.load %arg6[%c13, %c0_40] : memref<49x32xf32, #tpu.memory_space<vmem>>, vector<1x32xf32>
    %173 = vector.shape_cast %172 : vector<1x32xf32> to vector<32xf32>
    %174 = vector.shape_cast %173 : vector<32xf32> to vector<1x1x32xf32>
    %175 = vector.broadcast %174 : vector<1x1x32xf32> to vector<4x4x32xf32>
    %176 = arith.mulf %171, %175 : vector<4x4x32xf32>
    %177 = arith.addf %170, %176 : vector<4x4x32xf32>
    %178 = vector.extract_strided_slice %78 {offsets = [2, 0, 0], sizes = [4, 4, 32], strides = [1, 1, 1]} : vector<10x10x32xf32> to vector<4x4x32xf32>
    %c14 = arith.constant 14 : index
    %c0_41 = arith.constant 0 : index
    %179 = vector.load %arg6[%c14, %c0_41] : memref<49x32xf32, #tpu.memory_space<vmem>>, vector<1x32xf32>
    %180 = vector.shape_cast %179 : vector<1x32xf32> to vector<32xf32>
    %181 = vector.shape_cast %180 : vector<32xf32> to vector<1x1x32xf32>
    %182 = vector.broadcast %181 : vector<1x1x32xf32> to vector<4x4x32xf32>
    %183 = arith.mulf %178, %182 : vector<4x4x32xf32>
    %184 = arith.addf %177, %183 : vector<4x4x32xf32>
    %185 = vector.extract_strided_slice %78 {offsets = [2, 1, 0], sizes = [4, 4, 32], strides = [1, 1, 1]} : vector<10x10x32xf32> to vector<4x4x32xf32>
    %c15 = arith.constant 15 : index
    %c0_42 = arith.constant 0 : index
    %186 = vector.load %arg6[%c15, %c0_42] : memref<49x32xf32, #tpu.memory_space<vmem>>, vector<1x32xf32>
    %187 = vector.shape_cast %186 : vector<1x32xf32> to vector<32xf32>
    %188 = vector.shape_cast %187 : vector<32xf32> to vector<1x1x32xf32>
    %189 = vector.broadcast %188 : vector<1x1x32xf32> to vector<4x4x32xf32>
    %190 = arith.mulf %185, %189 : vector<4x4x32xf32>
    %191 = arith.addf %184, %190 : vector<4x4x32xf32>
    %192 = vector.extract_strided_slice %78 {offsets = [2, 2, 0], sizes = [4, 4, 32], strides = [1, 1, 1]} : vector<10x10x32xf32> to vector<4x4x32xf32>
    %c16 = arith.constant 16 : index
    %c0_43 = arith.constant 0 : index
    %193 = vector.load %arg6[%c16, %c0_43] : memref<49x32xf32, #tpu.memory_space<vmem>>, vector<1x32xf32>
    %194 = vector.shape_cast %193 : vector<1x32xf32> to vector<32xf32>
    %195 = vector.shape_cast %194 : vector<32xf32> to vector<1x1x32xf32>
    %196 = vector.broadcast %195 : vector<1x1x32xf32> to vector<4x4x32xf32>
    %197 = arith.mulf %192, %196 : vector<4x4x32xf32>
    %198 = arith.addf %191, %197 : vector<4x4x32xf32>
    %199 = vector.extract_strided_slice %78 {offsets = [2, 3, 0], sizes = [4, 4, 32], strides = [1, 1, 1]} : vector<10x10x32xf32> to vector<4x4x32xf32>
    %c17 = arith.constant 17 : index
    %c0_44 = arith.constant 0 : index
    %200 = vector.load %arg6[%c17, %c0_44] : memref<49x32xf32, #tpu.memory_space<vmem>>, vector<1x32xf32>
    %201 = vector.shape_cast %200 : vector<1x32xf32> to vector<32xf32>
    %202 = vector.shape_cast %201 : vector<32xf32> to vector<1x1x32xf32>
    %203 = vector.broadcast %202 : vector<1x1x32xf32> to vector<4x4x32xf32>
    %204 = arith.mulf %199, %203 : vector<4x4x32xf32>
    %205 = arith.addf %198, %204 : vector<4x4x32xf32>
    %206 = vector.extract_strided_slice %78 {offsets = [2, 4, 0], sizes = [4, 4, 32], strides = [1, 1, 1]} : vector<10x10x32xf32> to vector<4x4x32xf32>
    %c18 = arith.constant 18 : index
    %c0_45 = arith.constant 0 : index
    %207 = vector.load %arg6[%c18, %c0_45] : memref<49x32xf32, #tpu.memory_space<vmem>>, vector<1x32xf32>
    %208 = vector.shape_cast %207 : vector<1x32xf32> to vector<32xf32>
    %209 = vector.shape_cast %208 : vector<32xf32> to vector<1x1x32xf32>
    %210 = vector.broadcast %209 : vector<1x1x32xf32> to vector<4x4x32xf32>
    %211 = arith.mulf %206, %210 : vector<4x4x32xf32>
    %212 = arith.addf %205, %211 : vector<4x4x32xf32>
    %213 = vector.extract_strided_slice %78 {offsets = [2, 5, 0], sizes = [4, 4, 32], strides = [1, 1, 1]} : vector<10x10x32xf32> to vector<4x4x32xf32>
    %c19 = arith.constant 19 : index
    %c0_46 = arith.constant 0 : index
    %214 = vector.load %arg6[%c19, %c0_46] : memref<49x32xf32, #tpu.memory_space<vmem>>, vector<1x32xf32>
    %215 = vector.shape_cast %214 : vector<1x32xf32> to vector<32xf32>
    %216 = vector.shape_cast %215 : vector<32xf32> to vector<1x1x32xf32>
    %217 = vector.broadcast %216 : vector<1x1x32xf32> to vector<4x4x32xf32>
    %218 = arith.mulf %213, %217 : vector<4x4x32xf32>
    %219 = arith.addf %212, %218 : vector<4x4x32xf32>
    %220 = vector.extract_strided_slice %78 {offsets = [2, 6, 0], sizes = [4, 4, 32], strides = [1, 1, 1]} : vector<10x10x32xf32> to vector<4x4x32xf32>
    %c20 = arith.constant 20 : index
    %c0_47 = arith.constant 0 : index
    %221 = vector.load %arg6[%c20, %c0_47] : memref<49x32xf32, #tpu.memory_space<vmem>>, vector<1x32xf32>
    %222 = vector.shape_cast %221 : vector<1x32xf32> to vector<32xf32>
    %223 = vector.shape_cast %222 : vector<32xf32> to vector<1x1x32xf32>
    %224 = vector.broadcast %223 : vector<1x1x32xf32> to vector<4x4x32xf32>
    %225 = arith.mulf %220, %224 : vector<4x4x32xf32>
    %226 = arith.addf %219, %225 : vector<4x4x32xf32>
    %227 = vector.extract_strided_slice %78 {offsets = [3, 0, 0], sizes = [4, 4, 32], strides = [1, 1, 1]} : vector<10x10x32xf32> to vector<4x4x32xf32>
    %c21 = arith.constant 21 : index
    %c0_48 = arith.constant 0 : index
    %228 = vector.load %arg6[%c21, %c0_48] : memref<49x32xf32, #tpu.memory_space<vmem>>, vector<1x32xf32>
    %229 = vector.shape_cast %228 : vector<1x32xf32> to vector<32xf32>
    %230 = vector.shape_cast %229 : vector<32xf32> to vector<1x1x32xf32>
    %231 = vector.broadcast %230 : vector<1x1x32xf32> to vector<4x4x32xf32>
    %232 = arith.mulf %227, %231 : vector<4x4x32xf32>
    %233 = arith.addf %226, %232 : vector<4x4x32xf32>
    %234 = vector.extract_strided_slice %78 {offsets = [3, 1, 0], sizes = [4, 4, 32], strides = [1, 1, 1]} : vector<10x10x32xf32> to vector<4x4x32xf32>
    %c22 = arith.constant 22 : index
    %c0_49 = arith.constant 0 : index
    %235 = vector.load %arg6[%c22, %c0_49] : memref<49x32xf32, #tpu.memory_space<vmem>>, vector<1x32xf32>
    %236 = vector.shape_cast %235 : vector<1x32xf32> to vector<32xf32>
    %237 = vector.shape_cast %236 : vector<32xf32> to vector<1x1x32xf32>
    %238 = vector.broadcast %237 : vector<1x1x32xf32> to vector<4x4x32xf32>
    %239 = arith.mulf %234, %238 : vector<4x4x32xf32>
    %240 = arith.addf %233, %239 : vector<4x4x32xf32>
    %241 = vector.extract_strided_slice %78 {offsets = [3, 2, 0], sizes = [4, 4, 32], strides = [1, 1, 1]} : vector<10x10x32xf32> to vector<4x4x32xf32>
    %c23 = arith.constant 23 : index
    %c0_50 = arith.constant 0 : index
    %242 = vector.load %arg6[%c23, %c0_50] : memref<49x32xf32, #tpu.memory_space<vmem>>, vector<1x32xf32>
    %243 = vector.shape_cast %242 : vector<1x32xf32> to vector<32xf32>
    %244 = vector.shape_cast %243 : vector<32xf32> to vector<1x1x32xf32>
    %245 = vector.broadcast %244 : vector<1x1x32xf32> to vector<4x4x32xf32>
    %246 = arith.mulf %241, %245 : vector<4x4x32xf32>
    %247 = arith.addf %240, %246 : vector<4x4x32xf32>
    %248 = vector.extract_strided_slice %78 {offsets = [3, 3, 0], sizes = [4, 4, 32], strides = [1, 1, 1]} : vector<10x10x32xf32> to vector<4x4x32xf32>
    %c24 = arith.constant 24 : index
    %c0_51 = arith.constant 0 : index
    %249 = vector.load %arg6[%c24, %c0_51] : memref<49x32xf32, #tpu.memory_space<vmem>>, vector<1x32xf32>
    %250 = vector.shape_cast %249 : vector<1x32xf32> to vector<32xf32>
    %251 = vector.shape_cast %250 : vector<32xf32> to vector<1x1x32xf32>
    %252 = vector.broadcast %251 : vector<1x1x32xf32> to vector<4x4x32xf32>
    %253 = arith.mulf %248, %252 : vector<4x4x32xf32>
    %254 = arith.addf %247, %253 : vector<4x4x32xf32>
    %255 = vector.extract_strided_slice %78 {offsets = [3, 4, 0], sizes = [4, 4, 32], strides = [1, 1, 1]} : vector<10x10x32xf32> to vector<4x4x32xf32>
    %c25 = arith.constant 25 : index
    %c0_52 = arith.constant 0 : index
    %256 = vector.load %arg6[%c25, %c0_52] : memref<49x32xf32, #tpu.memory_space<vmem>>, vector<1x32xf32>
    %257 = vector.shape_cast %256 : vector<1x32xf32> to vector<32xf32>
    %258 = vector.shape_cast %257 : vector<32xf32> to vector<1x1x32xf32>
    %259 = vector.broadcast %258 : vector<1x1x32xf32> to vector<4x4x32xf32>
    %260 = arith.mulf %255, %259 : vector<4x4x32xf32>
    %261 = arith.addf %254, %260 : vector<4x4x32xf32>
    %262 = vector.extract_strided_slice %78 {offsets = [3, 5, 0], sizes = [4, 4, 32], strides = [1, 1, 1]} : vector<10x10x32xf32> to vector<4x4x32xf32>
    %c26 = arith.constant 26 : index
    %c0_53 = arith.constant 0 : index
    %263 = vector.load %arg6[%c26, %c0_53] : memref<49x32xf32, #tpu.memory_space<vmem>>, vector<1x32xf32>
    %264 = vector.shape_cast %263 : vector<1x32xf32> to vector<32xf32>
    %265 = vector.shape_cast %264 : vector<32xf32> to vector<1x1x32xf32>
    %266 = vector.broadcast %265 : vector<1x1x32xf32> to vector<4x4x32xf32>
    %267 = arith.mulf %262, %266 : vector<4x4x32xf32>
    %268 = arith.addf %261, %267 : vector<4x4x32xf32>
    %269 = vector.extract_strided_slice %78 {offsets = [3, 6, 0], sizes = [4, 4, 32], strides = [1, 1, 1]} : vector<10x10x32xf32> to vector<4x4x32xf32>
    %c27 = arith.constant 27 : index
    %c0_54 = arith.constant 0 : index
    %270 = vector.load %arg6[%c27, %c0_54] : memref<49x32xf32, #tpu.memory_space<vmem>>, vector<1x32xf32>
    %271 = vector.shape_cast %270 : vector<1x32xf32> to vector<32xf32>
    %272 = vector.shape_cast %271 : vector<32xf32> to vector<1x1x32xf32>
    %273 = vector.broadcast %272 : vector<1x1x32xf32> to vector<4x4x32xf32>
    %274 = arith.mulf %269, %273 : vector<4x4x32xf32>
    %275 = arith.addf %268, %274 : vector<4x4x32xf32>
    %276 = vector.extract_strided_slice %78 {offsets = [4, 0, 0], sizes = [4, 4, 32], strides = [1, 1, 1]} : vector<10x10x32xf32> to vector<4x4x32xf32>
    %c28 = arith.constant 28 : index
    %c0_55 = arith.constant 0 : index
    %277 = vector.load %arg6[%c28, %c0_55] : memref<49x32xf32, #tpu.memory_space<vmem>>, vector<1x32xf32>
    %278 = vector.shape_cast %277 : vector<1x32xf32> to vector<32xf32>
    %279 = vector.shape_cast %278 : vector<32xf32> to vector<1x1x32xf32>
    %280 = vector.broadcast %279 : vector<1x1x32xf32> to vector<4x4x32xf32>
    %281 = arith.mulf %276, %280 : vector<4x4x32xf32>
    %282 = arith.addf %275, %281 : vector<4x4x32xf32>
    %283 = vector.extract_strided_slice %78 {offsets = [4, 1, 0], sizes = [4, 4, 32], strides = [1, 1, 1]} : vector<10x10x32xf32> to vector<4x4x32xf32>
    %c29 = arith.constant 29 : index
    %c0_56 = arith.constant 0 : index
    %284 = vector.load %arg6[%c29, %c0_56] : memref<49x32xf32, #tpu.memory_space<vmem>>, vector<1x32xf32>
    %285 = vector.shape_cast %284 : vector<1x32xf32> to vector<32xf32>
    %286 = vector.shape_cast %285 : vector<32xf32> to vector<1x1x32xf32>
    %287 = vector.broadcast %286 : vector<1x1x32xf32> to vector<4x4x32xf32>
    %288 = arith.mulf %283, %287 : vector<4x4x32xf32>
    %289 = arith.addf %282, %288 : vector<4x4x32xf32>
    %290 = vector.extract_strided_slice %78 {offsets = [4, 2, 0], sizes = [4, 4, 32], strides = [1, 1, 1]} : vector<10x10x32xf32> to vector<4x4x32xf32>
    %c30 = arith.constant 30 : index
    %c0_57 = arith.constant 0 : index
    %291 = vector.load %arg6[%c30, %c0_57] : memref<49x32xf32, #tpu.memory_space<vmem>>, vector<1x32xf32>
    %292 = vector.shape_cast %291 : vector<1x32xf32> to vector<32xf32>
    %293 = vector.shape_cast %292 : vector<32xf32> to vector<1x1x32xf32>
    %294 = vector.broadcast %293 : vector<1x1x32xf32> to vector<4x4x32xf32>
    %295 = arith.mulf %290, %294 : vector<4x4x32xf32>
    %296 = arith.addf %289, %295 : vector<4x4x32xf32>
    %297 = vector.extract_strided_slice %78 {offsets = [4, 3, 0], sizes = [4, 4, 32], strides = [1, 1, 1]} : vector<10x10x32xf32> to vector<4x4x32xf32>
    %c31 = arith.constant 31 : index
    %c0_58 = arith.constant 0 : index
    %298 = vector.load %arg6[%c31, %c0_58] : memref<49x32xf32, #tpu.memory_space<vmem>>, vector<1x32xf32>
    %299 = vector.shape_cast %298 : vector<1x32xf32> to vector<32xf32>
    %300 = vector.shape_cast %299 : vector<32xf32> to vector<1x1x32xf32>
    %301 = vector.broadcast %300 : vector<1x1x32xf32> to vector<4x4x32xf32>
    %302 = arith.mulf %297, %301 : vector<4x4x32xf32>
    %303 = arith.addf %296, %302 : vector<4x4x32xf32>
    %304 = vector.extract_strided_slice %78 {offsets = [4, 4, 0], sizes = [4, 4, 32], strides = [1, 1, 1]} : vector<10x10x32xf32> to vector<4x4x32xf32>
    %c32 = arith.constant 32 : index
    %c0_59 = arith.constant 0 : index
    %305 = vector.load %arg6[%c32, %c0_59] : memref<49x32xf32, #tpu.memory_space<vmem>>, vector<1x32xf32>
    %306 = vector.shape_cast %305 : vector<1x32xf32> to vector<32xf32>
    %307 = vector.shape_cast %306 : vector<32xf32> to vector<1x1x32xf32>
    %308 = vector.broadcast %307 : vector<1x1x32xf32> to vector<4x4x32xf32>
    %309 = arith.mulf %304, %308 : vector<4x4x32xf32>
    %310 = arith.addf %303, %309 : vector<4x4x32xf32>
    %311 = vector.extract_strided_slice %78 {offsets = [4, 5, 0], sizes = [4, 4, 32], strides = [1, 1, 1]} : vector<10x10x32xf32> to vector<4x4x32xf32>
    %c33 = arith.constant 33 : index
    %c0_60 = arith.constant 0 : index
    %312 = vector.load %arg6[%c33, %c0_60] : memref<49x32xf32, #tpu.memory_space<vmem>>, vector<1x32xf32>
    %313 = vector.shape_cast %312 : vector<1x32xf32> to vector<32xf32>
    %314 = vector.shape_cast %313 : vector<32xf32> to vector<1x1x32xf32>
    %315 = vector.broadcast %314 : vector<1x1x32xf32> to vector<4x4x32xf32>
    %316 = arith.mulf %311, %315 : vector<4x4x32xf32>
    %317 = arith.addf %310, %316 : vector<4x4x32xf32>
    %318 = vector.extract_strided_slice %78 {offsets = [4, 6, 0], sizes = [4, 4, 32], strides = [1, 1, 1]} : vector<10x10x32xf32> to vector<4x4x32xf32>
    %c34 = arith.constant 34 : index
    %c0_61 = arith.constant 0 : index
    %319 = vector.load %arg6[%c34, %c0_61] : memref<49x32xf32, #tpu.memory_space<vmem>>, vector<1x32xf32>
    %320 = vector.shape_cast %319 : vector<1x32xf32> to vector<32xf32>
    %321 = vector.shape_cast %320 : vector<32xf32> to vector<1x1x32xf32>
    %322 = vector.broadcast %321 : vector<1x1x32xf32> to vector<4x4x32xf32>
    %323 = arith.mulf %318, %322 : vector<4x4x32xf32>
    %324 = arith.addf %317, %323 : vector<4x4x32xf32>
    %325 = vector.extract_strided_slice %78 {offsets = [5, 0, 0], sizes = [4, 4, 32], strides = [1, 1, 1]} : vector<10x10x32xf32> to vector<4x4x32xf32>
    %c35 = arith.constant 35 : index
    %c0_62 = arith.constant 0 : index
    %326 = vector.load %arg6[%c35, %c0_62] : memref<49x32xf32, #tpu.memory_space<vmem>>, vector<1x32xf32>
    %327 = vector.shape_cast %326 : vector<1x32xf32> to vector<32xf32>
    %328 = vector.shape_cast %327 : vector<32xf32> to vector<1x1x32xf32>
    %329 = vector.broadcast %328 : vector<1x1x32xf32> to vector<4x4x32xf32>
    %330 = arith.mulf %325, %329 : vector<4x4x32xf32>
    %331 = arith.addf %324, %330 : vector<4x4x32xf32>
    %332 = vector.extract_strided_slice %78 {offsets = [5, 1, 0], sizes = [4, 4, 32], strides = [1, 1, 1]} : vector<10x10x32xf32> to vector<4x4x32xf32>
    %c36 = arith.constant 36 : index
    %c0_63 = arith.constant 0 : index
    %333 = vector.load %arg6[%c36, %c0_63] : memref<49x32xf32, #tpu.memory_space<vmem>>, vector<1x32xf32>
    %334 = vector.shape_cast %333 : vector<1x32xf32> to vector<32xf32>
    %335 = vector.shape_cast %334 : vector<32xf32> to vector<1x1x32xf32>
    %336 = vector.broadcast %335 : vector<1x1x32xf32> to vector<4x4x32xf32>
    %337 = arith.mulf %332, %336 : vector<4x4x32xf32>
    %338 = arith.addf %331, %337 : vector<4x4x32xf32>
    %339 = vector.extract_strided_slice %78 {offsets = [5, 2, 0], sizes = [4, 4, 32], strides = [1, 1, 1]} : vector<10x10x32xf32> to vector<4x4x32xf32>
    %c37 = arith.constant 37 : index
    %c0_64 = arith.constant 0 : index
    %340 = vector.load %arg6[%c37, %c0_64] : memref<49x32xf32, #tpu.memory_space<vmem>>, vector<1x32xf32>
    %341 = vector.shape_cast %340 : vector<1x32xf32> to vector<32xf32>
    %342 = vector.shape_cast %341 : vector<32xf32> to vector<1x1x32xf32>
    %343 = vector.broadcast %342 : vector<1x1x32xf32> to vector<4x4x32xf32>
    %344 = arith.mulf %339, %343 : vector<4x4x32xf32>
    %345 = arith.addf %338, %344 : vector<4x4x32xf32>
    %346 = vector.extract_strided_slice %78 {offsets = [5, 3, 0], sizes = [4, 4, 32], strides = [1, 1, 1]} : vector<10x10x32xf32> to vector<4x4x32xf32>
    %c38 = arith.constant 38 : index
    %c0_65 = arith.constant 0 : index
    %347 = vector.load %arg6[%c38, %c0_65] : memref<49x32xf32, #tpu.memory_space<vmem>>, vector<1x32xf32>
    %348 = vector.shape_cast %347 : vector<1x32xf32> to vector<32xf32>
    %349 = vector.shape_cast %348 : vector<32xf32> to vector<1x1x32xf32>
    %350 = vector.broadcast %349 : vector<1x1x32xf32> to vector<4x4x32xf32>
    %351 = arith.mulf %346, %350 : vector<4x4x32xf32>
    %352 = arith.addf %345, %351 : vector<4x4x32xf32>
    %353 = vector.extract_strided_slice %78 {offsets = [5, 4, 0], sizes = [4, 4, 32], strides = [1, 1, 1]} : vector<10x10x32xf32> to vector<4x4x32xf32>
    %c39 = arith.constant 39 : index
    %c0_66 = arith.constant 0 : index
    %354 = vector.load %arg6[%c39, %c0_66] : memref<49x32xf32, #tpu.memory_space<vmem>>, vector<1x32xf32>
    %355 = vector.shape_cast %354 : vector<1x32xf32> to vector<32xf32>
    %356 = vector.shape_cast %355 : vector<32xf32> to vector<1x1x32xf32>
    %357 = vector.broadcast %356 : vector<1x1x32xf32> to vector<4x4x32xf32>
    %358 = arith.mulf %353, %357 : vector<4x4x32xf32>
    %359 = arith.addf %352, %358 : vector<4x4x32xf32>
    %360 = vector.extract_strided_slice %78 {offsets = [5, 5, 0], sizes = [4, 4, 32], strides = [1, 1, 1]} : vector<10x10x32xf32> to vector<4x4x32xf32>
    %c40 = arith.constant 40 : index
    %c0_67 = arith.constant 0 : index
    %361 = vector.load %arg6[%c40, %c0_67] : memref<49x32xf32, #tpu.memory_space<vmem>>, vector<1x32xf32>
    %362 = vector.shape_cast %361 : vector<1x32xf32> to vector<32xf32>
    %363 = vector.shape_cast %362 : vector<32xf32> to vector<1x1x32xf32>
    %364 = vector.broadcast %363 : vector<1x1x32xf32> to vector<4x4x32xf32>
    %365 = arith.mulf %360, %364 : vector<4x4x32xf32>
    %366 = arith.addf %359, %365 : vector<4x4x32xf32>
    %367 = vector.extract_strided_slice %78 {offsets = [5, 6, 0], sizes = [4, 4, 32], strides = [1, 1, 1]} : vector<10x10x32xf32> to vector<4x4x32xf32>
    %c41 = arith.constant 41 : index
    %c0_68 = arith.constant 0 : index
    %368 = vector.load %arg6[%c41, %c0_68] : memref<49x32xf32, #tpu.memory_space<vmem>>, vector<1x32xf32>
    %369 = vector.shape_cast %368 : vector<1x32xf32> to vector<32xf32>
    %370 = vector.shape_cast %369 : vector<32xf32> to vector<1x1x32xf32>
    %371 = vector.broadcast %370 : vector<1x1x32xf32> to vector<4x4x32xf32>
    %372 = arith.mulf %367, %371 : vector<4x4x32xf32>
    %373 = arith.addf %366, %372 : vector<4x4x32xf32>
    %374 = vector.extract_strided_slice %78 {offsets = [6, 0, 0], sizes = [4, 4, 32], strides = [1, 1, 1]} : vector<10x10x32xf32> to vector<4x4x32xf32>
    %c42 = arith.constant 42 : index
    %c0_69 = arith.constant 0 : index
    %375 = vector.load %arg6[%c42, %c0_69] : memref<49x32xf32, #tpu.memory_space<vmem>>, vector<1x32xf32>
    %376 = vector.shape_cast %375 : vector<1x32xf32> to vector<32xf32>
    %377 = vector.shape_cast %376 : vector<32xf32> to vector<1x1x32xf32>
    %378 = vector.broadcast %377 : vector<1x1x32xf32> to vector<4x4x32xf32>
    %379 = arith.mulf %374, %378 : vector<4x4x32xf32>
    %380 = arith.addf %373, %379 : vector<4x4x32xf32>
    %381 = vector.extract_strided_slice %78 {offsets = [6, 1, 0], sizes = [4, 4, 32], strides = [1, 1, 1]} : vector<10x10x32xf32> to vector<4x4x32xf32>
    %c43 = arith.constant 43 : index
    %c0_70 = arith.constant 0 : index
    %382 = vector.load %arg6[%c43, %c0_70] : memref<49x32xf32, #tpu.memory_space<vmem>>, vector<1x32xf32>
    %383 = vector.shape_cast %382 : vector<1x32xf32> to vector<32xf32>
    %384 = vector.shape_cast %383 : vector<32xf32> to vector<1x1x32xf32>
    %385 = vector.broadcast %384 : vector<1x1x32xf32> to vector<4x4x32xf32>
    %386 = arith.mulf %381, %385 : vector<4x4x32xf32>
    %387 = arith.addf %380, %386 : vector<4x4x32xf32>
    %388 = vector.extract_strided_slice %78 {offsets = [6, 2, 0], sizes = [4, 4, 32], strides = [1, 1, 1]} : vector<10x10x32xf32> to vector<4x4x32xf32>
    %c44 = arith.constant 44 : index
    %c0_71 = arith.constant 0 : index
    %389 = vector.load %arg6[%c44, %c0_71] : memref<49x32xf32, #tpu.memory_space<vmem>>, vector<1x32xf32>
    %390 = vector.shape_cast %389 : vector<1x32xf32> to vector<32xf32>
    %391 = vector.shape_cast %390 : vector<32xf32> to vector<1x1x32xf32>
    %392 = vector.broadcast %391 : vector<1x1x32xf32> to vector<4x4x32xf32>
    %393 = arith.mulf %388, %392 : vector<4x4x32xf32>
    %394 = arith.addf %387, %393 : vector<4x4x32xf32>
    %395 = vector.extract_strided_slice %78 {offsets = [6, 3, 0], sizes = [4, 4, 32], strides = [1, 1, 1]} : vector<10x10x32xf32> to vector<4x4x32xf32>
    %c45 = arith.constant 45 : index
    %c0_72 = arith.constant 0 : index
    %396 = vector.load %arg6[%c45, %c0_72] : memref<49x32xf32, #tpu.memory_space<vmem>>, vector<1x32xf32>
    %397 = vector.shape_cast %396 : vector<1x32xf32> to vector<32xf32>
    %398 = vector.shape_cast %397 : vector<32xf32> to vector<1x1x32xf32>
    %399 = vector.broadcast %398 : vector<1x1x32xf32> to vector<4x4x32xf32>
    %400 = arith.mulf %395, %399 : vector<4x4x32xf32>
    %401 = arith.addf %394, %400 : vector<4x4x32xf32>
    %402 = vector.extract_strided_slice %78 {offsets = [6, 4, 0], sizes = [4, 4, 32], strides = [1, 1, 1]} : vector<10x10x32xf32> to vector<4x4x32xf32>
    %c46 = arith.constant 46 : index
    %c0_73 = arith.constant 0 : index
    %403 = vector.load %arg6[%c46, %c0_73] : memref<49x32xf32, #tpu.memory_space<vmem>>, vector<1x32xf32>
    %404 = vector.shape_cast %403 : vector<1x32xf32> to vector<32xf32>
    %405 = vector.shape_cast %404 : vector<32xf32> to vector<1x1x32xf32>
    %406 = vector.broadcast %405 : vector<1x1x32xf32> to vector<4x4x32xf32>
    %407 = arith.mulf %402, %406 : vector<4x4x32xf32>
    %408 = arith.addf %401, %407 : vector<4x4x32xf32>
    %409 = vector.extract_strided_slice %78 {offsets = [6, 5, 0], sizes = [4, 4, 32], strides = [1, 1, 1]} : vector<10x10x32xf32> to vector<4x4x32xf32>
    %c47 = arith.constant 47 : index
    %c0_74 = arith.constant 0 : index
    %410 = vector.load %arg6[%c47, %c0_74] : memref<49x32xf32, #tpu.memory_space<vmem>>, vector<1x32xf32>
    %411 = vector.shape_cast %410 : vector<1x32xf32> to vector<32xf32>
    %412 = vector.shape_cast %411 : vector<32xf32> to vector<1x1x32xf32>
    %413 = vector.broadcast %412 : vector<1x1x32xf32> to vector<4x4x32xf32>
    %414 = arith.mulf %409, %413 : vector<4x4x32xf32>
    %415 = arith.addf %408, %414 : vector<4x4x32xf32>
    %416 = vector.extract_strided_slice %78 {offsets = [6, 6, 0], sizes = [4, 4, 32], strides = [1, 1, 1]} : vector<10x10x32xf32> to vector<4x4x32xf32>
    %c48 = arith.constant 48 : index
    %c0_75 = arith.constant 0 : index
    %417 = vector.load %arg6[%c48, %c0_75] : memref<49x32xf32, #tpu.memory_space<vmem>>, vector<1x32xf32>
    %418 = vector.shape_cast %417 : vector<1x32xf32> to vector<32xf32>
    %419 = vector.shape_cast %418 : vector<32xf32> to vector<1x1x32xf32>
    %420 = vector.broadcast %419 : vector<1x1x32xf32> to vector<4x4x32xf32>
    %421 = arith.mulf %416, %420 : vector<4x4x32xf32>
    %422 = arith.addf %415, %421 : vector<4x4x32xf32>
    %423 = vector.shape_cast %422 : vector<4x4x32xf32> to vector<16x32xf32>
    %cst_76 = arith.constant dense<0.000000e+00> : vector<16xf32>
    %424 = vector.multi_reduction <add>, %423, %cst_76 [1] : vector<16x32xf32> to vector<16xf32>
    %425 = vector.shape_cast %424 : vector<16xf32> to vector<1x16xf32>
    %c0_77 = arith.constant 0 : index
    %c0_78 = arith.constant 0 : index
    %426 = vector.load %arg7[%c0_77, %c0_78] : memref<1x1xf32, #tpu.memory_space<vmem>>, vector<1x1xf32>
    %427 = vector.broadcast %426 : vector<1x1xf32> to vector<1x16xf32>
    %428 = arith.addf %425, %427 : vector<1x16xf32>
    %429 = vector.shape_cast %428 : vector<1x16xf32> to vector<1x1x16xf32>
    %c0_79 = arith.constant 0 : index
    %c0_80 = arith.constant 0 : index
    %c0_81 = arith.constant 0 : index
    %430 = vector.load %arg8[%c0_79, %c0_80, %c0_81] : memref<1x1x16xf32, #tpu.memory_space<vmem>>, vector<1x1x16xf32>
    tpu.vector_store %arg8[%c0_79, %c0_80, %c0_81], %429 {strides = array<i32>} : memref<1x1x16xf32, #tpu.memory_space<vmem>>, vector<1x1x16xf32>,
    return
  }
  func.func @transform_0(%arg0: i32) -> (i32, i32, i32) {
    %c0_i32 = arith.constant 0 : i32
    %c0_i32_0 = arith.constant 0 : i32
    %c0_i32_1 = arith.constant 0 : i32
    return %arg0, %c0_i32, %c0_i32_0 : i32, i32, i32
  }
  func.func @transform_1(%arg0: i32) -> (i32, i32) {
    %c0_i32 = arith.constant 0 : i32
    %c0_i32_0 = arith.constant 0 : i32
    %c0_i32_1 = arith.constant 0 : i32
    return %c0_i32, %c0_i32_0 : i32, i32
  }
  func.func @transform_2(%arg0: i32) -> (i32, i32) {
    %c0_i32 = arith.constant 0 : i32
    %c0_i32_0 = arith.constant 0 : i32
    %c0_i32_1 = arith.constant 0 : i32
    return %c0_i32, %c0_i32_0 : i32, i32
  }
  func.func @transform_3(%arg0: i32) -> (i32, i32) {
    %c0_i32 = arith.constant 0 : i32
    %c0_i32_0 = arith.constant 0 : i32
    %c0_i32_1 = arith.constant 0 : i32
    return %c0_i32, %c0_i32_0 : i32, i32
  }
  func.func @transform_4(%arg0: i32) -> (i32, i32) {
    %c0_i32 = arith.constant 0 : i32
    %c0_i32_0 = arith.constant 0 : i32
    %c0_i32_1 = arith.constant 0 : i32
    return %c0_i32, %c0_i32_0 : i32, i32
  }
  func.func @transform_5(%arg0: i32) -> (i32, i32) {
    %c0_i32 = arith.constant 0 : i32
    %c0_i32_0 = arith.constant 0 : i32
    %c0_i32_1 = arith.constant 0 : i32
    return %c0_i32, %c0_i32_0 : i32, i32
  }
  func.func @transform_6(%arg0: i32) -> (i32, i32) {
    %c0_i32 = arith.constant 0 : i32
    %c0_i32_0 = arith.constant 0 : i32
    %c0_i32_1 = arith.constant 0 : i32
    return %c0_i32, %c0_i32_0 : i32, i32
  }
  func.func @transform_7(%arg0: i32) -> (i32, i32, i32) {
    %c0_i32 = arith.constant 0 : i32
    %c0_i32_0 = arith.constant 0 : i32
    %c0_i32_1 = arith.constant 0 : i32
    return %arg0, %c0_i32, %c0_i32_0 : i32, i32, i32
  }
}

</mosaic_0001>

<llo_original>
// kernel: eye_encoder_forward.1
$region0: #{eye_encoder_forward.1}
  #allocation0 [shape = 'u32[]', space=smem, size = 0x4, offset = 0x4, fixed_abs, tag = 'smem constant byte address 0x4 - core index']
  #allocation1 [shape = 'u32[72,128]{1,0:T(1,128)}', space=vmem, size = 0x9000, scoped, tag = 'internal scratch']
  #allocation2 [shape = 'f32[1,1]{1,0:T(1,128)S(1)}', space=vmem, size = 0x200, scoped, tag = 'scoped memory for eye_encoder_forward.1']
  %s0 = inlined_call_operand.vmem [shape: f32[2,256,49], index: 0, kind: input, shape index: {}]
  %s1 = inlined_call_operand.vmem [shape: f32[49,128], index: 1, kind: input, shape index: {}]
  %s2 = inlined_call_operand.vmem [shape: f32[3,128], index: 2, kind: input, shape index: {}]
  %s3 = inlined_call_operand.vmem [shape: f32[1152,32], index: 3, kind: input, shape index: {}]
  %s4 = inlined_call_operand.vmem [shape: f32[3,32], index: 4, kind: input, shape index: {}]
  %s5 = inlined_call_operand.vmem [shape: f32[49,32], index: 5, kind: input, shape index: {}]
  %s6 = inlined_call_operand.<no memory space> [shape: f32[1,1], index: 6, kind: input, shape index: {}]
  %s7 = inlined_call_operand.vmem [shape: f32[2,1,16], index: 7, kind: output, shape index: {}]
  %s8 = sld [smem:[#allocation0]]
  $region61: #{eye_encoder_forward.1} parent=0
    _
  %s10 = ssub.s32 1, %s8
  %s11 = scalar_select 0, %s10, %s8
  %v12 = vstv %s6
  %13 = vst [vmem:[#allocation2] sm:$0x1] %v12
  loop: start=0, step=1, limit=4
  $region2: #{eye_encoder_forward.1} parent=0 // loop_pre_header
    _
  $region3: #{eye_encoder_forward.1} parent=0 // loop_header
    %s15 = sphi 0, %s19
    %p16 = scmp.ge.s32.totalorder %s15, 4
    %s25 = sphi 0, %s27
    %s28 = sphi 0, %s25
    %s29 = sphi 0, %s28
    %s45 = sphi 0, %s29
    %s49 = sphi 0, %s49
    %s51 = sphi 0, %s49
    %s52 = sphi 0, %s51
    %s66 = sphi 0, %s52
    %s70 = sphi 0, %s70
    %s72 = sphi 0, %s70
    %s73 = sphi 0, %s72
    %s87 = sphi 0, %s73
    %s91 = sphi 0, %s91
    %s93 = sphi 0, %s91
    %s94 = sphi 0, %s93
    %s108 = sphi 0, %s94
    %s112 = sphi 0, %s112
    %s114 = sphi 0, %s112
    %s115 = sphi 0, %s114
    %s129 = sphi 0, %s115
    %s133 = sphi 0, %s133
    %s135 = sphi 0, %s133
    %s136 = sphi 0, %s135
    %s150 = sphi 0, %s136
    %s154 = sphi 0, %s154
    %s156 = sphi 0, %s154
    %s157 = sphi 0, %s156
    %s171 = sphi 0, %s157
    %s177 = sphi 0, %s179
    %s180 = sphi 0, %s177
    %s181 = sphi 0, %s180
    %s197 = sphi 0, %s181
  $region4: #{eye_encoder_forward.1} parent=0 // loop_header_branch
    %18 = sbr.rel (%p16) target = $region8
  $region5: #{eye_encoder_forward.1} parent=0 // loop_body
    %s20 = ssub.s32 %s15, 1
    %s21 = ssub.s32 %s15, 2
    %s22 = sadd.s32 %s15, 1
    %s23 = ssub.s32 %s15, %s22
    %p24 = scmp.eq.s32.totalorder %s23, 0
    %s26 = sadd.s32 %s25, 1
    %s27 = scalar_select %p24, %s25, %s26
    %p30 = pneg %p24
    %p31 = scmp.eq.s32.totalorder %s15, 1
    %p32 = por %p30, %p31
    %p33 = scmp.ne.s32.totalorder %s25, %s28
    %p34 = scmp.eq.s32.totalorder %s15, 0
    %p35 = por %p33, %p34
    %p36 = scmp.ne.s32.totalorder %s25, %s28
    %p37 = scmp.eq.s32.totalorder %s20, 1
    %p38 = por %p36, %p37
    %p39 = scmp.ne.s32.totalorder %s28, %s29
    %p40 = scmp.eq.s32.totalorder %s20, 0
    %p41 = por %p39, %p40
    %p42 = scmp.ne.s32.totalorder %s28, %s29
    %p43 = scmp.eq.s32.totalorder %s21, 1
    %p44 = por %p42, %p43
    %p46 = scmp.ne.s32.totalorder %s29, %s45
    %p47 = scmp.eq.s32.totalorder %s21, 0
    %p48 = por %p46, %p47
    %s50 = sadd.s32 %s49, 1
    %p53 = scmp.eq.s32.totalorder %s15, 1
    %p54 = scmp.ne.s32.totalorder %s49, %s51
    %p55 = scmp.eq.s32.totalorder %s15, 0
    %p56 = por %p54, %p55
    %p57 = scmp.ne.s32.totalorder %s49, %s51
    %p58 = scmp.eq.s32.totalorder %s20, 1
    %p59 = por %p57, %p58
    %p60 = scmp.ne.s32.totalorder %s51, %s52
    %p61 = scmp.eq.s32.totalorder %s20, 0
    %p62 = por %p60, %p61
    %p63 = scmp.ne.s32.totalorder %s51, %s52
    %p64 = scmp.eq.s32.totalorder %s21, 1
    %p65 = por %p63, %p64
    %p67 = scmp.ne.s32.totalorder %s52, %s66
    %p68 = scmp.eq.s32.totalorder %s21, 0
    %p69 = por %p67, %p68
    %s71 = sadd.s32 %s70, 1
    %p74 = scmp.eq.s32.totalorder %s15, 1
    %p75 = scmp.ne.s32.totalorder %s70, %s72
    %p76 = scmp.eq.s32.totalorder %s15, 0
    %p77 = por %p75, %p76
    %p78 = scmp.ne.s32.totalorder %s70, %s72
    %p79 = scmp.eq.s32.totalorder %s20, 1
    %p80 = por %p78, %p79
    %p81 = scmp.ne.s32.totalorder %s72, %s73
    %p82 = scmp.eq.s32.totalorder %s20, 0
    %p83 = por %p81, %p82
    %p84 = scmp.ne.s32.totalorder %s72, %s73
    %p85 = scmp.eq.s32.totalorder %s21, 1
    %p86 = por %p84, %p85
    %p88 = scmp.ne.s32.totalorder %s73, %s87
    %p89 = scmp.eq.s32.totalorder %s21, 0
    %p90 = por %p88, %p89
    %s92 = sadd.s32 %s91, 1
    %p95 = scmp.eq.s32.totalorder %s15, 1
    %p96 = scmp.ne.s32.totalorder %s91, %s93
    %p97 = scmp.eq.s32.totalorder %s15, 0
    %p98 = por %p96, %p97
    %p99 = scmp.ne.s32.totalorder %s91, %s93
    %p100 = scmp.eq.s32.totalorder %s20, 1
    %p101 = por %p99, %p100
    %p102 = scmp.ne.s32.totalorder %s93, %s94
    %p103 = scmp.eq.s32.totalorder %s20, 0
    %p104 = por %p102, %p103
    %p105 = scmp.ne.s32.totalorder %s93, %s94
    %p106 = scmp.eq.s32.totalorder %s21, 1
    %p107 = por %p105, %p106
    %p109 = scmp.ne.s32.totalorder %s94, %s108
    %p110 = scmp.eq.s32.totalorder %s21, 0
    %p111 = por %p109, %p110
    %s113 = sadd.s32 %s112, 1
    %p116 = scmp.eq.s32.totalorder %s15, 1
    %p117 = scmp.ne.s32.totalorder %s112, %s114
    %p118 = scmp.eq.s32.totalorder %s15, 0
    %p119 = por %p117, %p118
    %p120 = scmp.ne.s32.totalorder %s112, %s114
    %p121 = scmp.eq.s32.totalorder %s20, 1
    %p122 = por %p120, %p121
    %p123 = scmp.ne.s32.totalorder %s114, %s115
    %p124 = scmp.eq.s32.totalorder %s20, 0
    %p125 = por %p123, %p124
    %p126 = scmp.ne.s32.totalorder %s114, %s115
    %p127 = scmp.eq.s32.totalorder %s21, 1
    %p128 = por %p126, %p127
    %p130 = scmp.ne.s32.totalorder %s115, %s129
    %p131 = scmp.eq.s32.totalorder %s21, 0
    %p132 = por %p130, %p131
    %s134 = sadd.s32 %s133, 1
    %p137 = scmp.eq.s32.totalorder %s15, 1
    %p138 = scmp.ne.s32.totalorder %s133, %s135
    %p139 = scmp.eq.s32.totalorder %s15, 0
    %p140 = por %p138, %p139
    %p141 = scmp.ne.s32.totalorder %s133, %s135
    %p142 = scmp.eq.s32.totalorder %s20, 1
    %p143 = por %p141, %p142
    %p144 = scmp.ne.s32.totalorder %s135, %s136
    %p145 = scmp.eq.s32.totalorder %s20, 0
    %p146 = por %p144, %p145
    %p147 = scmp.ne.s32.totalorder %s135, %s136
    %p148 = scmp.eq.s32.totalorder %s21, 1
    %p149 = por %p147, %p148
    %p151 = scmp.ne.s32.totalorder %s136, %s150
    %p152 = scmp.eq.s32.totalorder %s21, 0
    %p153 = por %p151, %p152
    %s155 = sadd.s32 %s154, 1
    %p158 = scmp.eq.s32.totalorder %s15, 1
    %p159 = scmp.ne.s32.totalorder %s154, %s156
    %p160 = scmp.eq.s32.totalorder %s15, 0
    %p161 = por %p159, %p160
    %p162 = scmp.ne.s32.totalorder %s154, %s156
    %p163 = scmp.eq.s32.totalorder %s20, 1
    %p164 = por %p162, %p163
    %p165 = scmp.ne.s32.totalorder %s156, %s157
    %p166 = scmp.eq.s32.totalorder %s20, 0
    %p167 = por %p165, %p166
    %p168 = scmp.ne.s32.totalorder %s156, %s157
    %p169 = scmp.eq.s32.totalorder %s21, 1
    %p170 = por %p168, %p169
    %p172 = scmp.ne.s32.totalorder %s157, %s171
    %p173 = scmp.eq.s32.totalorder %s21, 0
    %p174 = por %p172, %p173
    %s175 = ssub.s32 %s15, %s22
    %p176 = scmp.eq.s32.totalorder %s175, 0
    %s178 = sadd.s32 %s177, 1
    %s179 = scalar_select %p176, %s177, %s178
    %p182 = pneg %p176
    %p183 = scmp.eq.s32.totalorder %s15, 1
    %p184 = por %p182, %p183
    %p185 = scmp.ne.s32.totalorder %s177, %s180
    %p186 = scmp.eq.s32.totalorder %s15, 0
    %p187 = por %p185, %p186
    %p188 = scmp.ne.s32.totalorder %s177, %s180
    %p189 = scmp.eq.s32.totalorder %s20, 1
    %p190 = por %p188, %p189
    %p191 = scmp.ne.s32.totalorder %s180, %s181
    %p192 = scmp.eq.s32.totalorder %s20, 0
    %p193 = por %p191, %p192
    %p194 = scmp.ne.s32.totalorder %s180, %s181
    %p195 = scmp.eq.s32.totalorder %s21, 1
    %p196 = por %p194, %p195
    %p198 = scmp.ne.s32.totalorder %s181, %s197
    %p199 = scmp.eq.s32.totalorder %s21, 0
    %p200 = por %p198, %p199
    %p201 = scmp.le.s32.totalorder 1, %s15
    %p202 = scmp.lt.s32.totalorder %s15, 3
    %p203 = pnand %p201, %p202
    %p204 = pneg %p203
    // Predicated region
    $region9: #{eye_encoder_forward.1} parent=5 // pred_check
      _
    $region10: #{eye_encoder_forward.1} parent=5 // pred_check_branch
      %206 = sbr.rel (%p203) target = $region12
    $region11: #{eye_encoder_forward.1} parent=5 // pred_region
      %s207 = ssub.s32 %s15, 1
      // Predicated region
      $region13: #{eye_encoder_forward.1} parent=11 // pred_check
        %p208 = pneg %p62
      $region14: #{eye_encoder_forward.1} parent=11 // pred_check_branch
        %210 = sbr.rel (%p208) target = $region16
      $region15: #{eye_encoder_forward.1} parent=11 // pred_region
        _
      $region16: #{eye_encoder_forward.1} parent=11 // pred_fallthru
        _
      // Predicated region
      $region17: #{eye_encoder_forward.1} parent=11 // pred_check
        %p211 = pneg %p83
      $region18: #{eye_encoder_forward.1} parent=11 // pred_check_branch
        %213 = sbr.rel (%p211) target = $region20
      $region19: #{eye_encoder_forward.1} parent=11 // pred_region
        _
      $region20: #{eye_encoder_forward.1} parent=11 // pred_fallthru
        _
      // Predicated region
      $region21: #{eye_encoder_forward.1} parent=11 // pred_check
        %p214 = pneg %p104
      $region22: #{eye_encoder_forward.1} parent=11 // pred_check_branch
        %216 = sbr.rel (%p214) target = $region24
      $region23: #{eye_encoder_forward.1} parent=11 // pred_region
        _
      $region24: #{eye_encoder_forward.1} parent=11 // pred_fallthru
        _
      // Predicated region
      $region25: #{eye_encoder_forward.1} parent=11 // pred_check
        %p217 = pneg %p125
      $region26: #{eye_encoder_forward.1} parent=11 // pred_check_branch
        %219 = sbr.rel (%p217) target = $region28
      $region27: #{eye_encoder_forward.1} parent=11 // pred_region
        _
      $region28: #{eye_encoder_forward.1} parent=11 // pred_fallthru
        _
      // Predicated region
      $region29: #{eye_encoder_forward.1} parent=11 // pred_check
        %p220 = pneg %p146
      $region30: #{eye_encoder_forward.1} parent=11 // pred_check_branch
        %222 = sbr.rel (%p220) target = $region32
      $region31: #{eye_encoder_forward.1} parent=11 // pred_region
        _
      $region32: #{eye_encoder_forward.1} parent=11 // pred_fallthru
        _
      // Predicated region
      $region33: #{eye_encoder_forward.1} parent=11 // pred_check
        %p223 = pneg %p167
      $region34: #{eye_encoder_forward.1} parent=11 // pred_check_branch
        %225 = sbr.rel (%p223) target = $region36
      $region35: #{eye_encoder_forward.1} parent=11 // pred_region
        _
      $region36: #{eye_encoder_forward.1} parent=11 // pred_fallthru
        _
    $region12: #{eye_encoder_forward.1} parent=5 // pred_fallthru
      _
    %p226 = scmp.lt.s32.totalorder %s15, 2
    // Predicated region
    $region37: #{eye_encoder_forward.1} parent=5 // pred_check
      %p227 = pneg %p226
    $region38: #{eye_encoder_forward.1} parent=5 // pred_check_branch
      %229 = sbr.rel (%p227) target = $region40
    $region39: #{eye_encoder_forward.1} parent=5 // pred_region
      // Predicated region
      $region41: #{eye_encoder_forward.1} parent=39 // pred_check
        %p230 = pneg %p35
      $region42: #{eye_encoder_forward.1} parent=39 // pred_check_branch
        %232 = sbr.rel (%p230) target = $region44
      $region43: #{eye_encoder_forward.1} parent=39 // pred_region
        %p233 = scmp.lt.s32.totalorder %s15, 1
        %s234 = scalar_select %p233, %s15, 1
        %s235 = smul.addr %s234, 32
        %s236 = smul.addr %s235, 8
        %s237 = scalar_lea.vmem %s0, %s236
      $region44: #{eye_encoder_forward.1} parent=39 // pred_fallthru
        _
    $region40: #{eye_encoder_forward.1} parent=5 // pred_fallthru
      _
    %p238 = scmp.le.s32.totalorder 1, %s15
    %p239 = scmp.lt.s32.totalorder %s15, 3
    %p240 = pnand %p238, %p239
    %p241 = pneg %p240
    // Predicated region
    $region45: #{eye_encoder_forward.1} parent=5 // pred_check
      _
    $region46: #{eye_encoder_forward.1} parent=5 // pred_check_branch
      %243 = sbr.rel (%p240) target = $region48
    $region47: #{eye_encoder_forward.1} parent=5 // pred_region
      %s244 = ssub.s32 %s15, 1
      %p245 = scmp.lt.s32.totalorder %s20, 1
      %s246 = scalar_select %p245, %s20, 1
      %s247 = smul.addr %s246, 32
      %s248 = smul.addr %s247, 8
      %s249 = scalar_lea.vmem %s0, %s248
      %p250 = pneg %p41
      %p251 = pneg %p38
      %p252 = pneg %p62
      %p253 = pneg %p59
      %p254 = pneg %p83
      %p255 = pneg %p80
      %p256 = pneg %p104
      %p257 = pneg %p101
      %p258 = pneg %p125
      %p259 = pneg %p122
      %p260 = pneg %p146
      %p261 = pneg %p143
      %p262 = pneg %p167
      %p263 = pneg %p164
      %p264 = pneg %p193
      %p265 = pneg %p190
      %p266 = scmp.lt.s32.totalorder %s20, 1
      %s267 = scalar_select %p266, %s20, 1
      %s268 = scalar_lea.vmem %s7, %s267
      %p269 = scmp.lt.s32.totalorder %s20, 1
      %s270 = scalar_select %p269, %s20, 1
      %s271 = smul.addr %s270, 32
      %s272 = smul.addr %s271, 8
      %s273 = scalar_lea.vmem %s0, %s272
      %p274 = scmp.lt.s32.totalorder %s20, 1
      %s275 = scalar_select %p274, %s20, 1
      %s276 = scalar_lea.vmem %s7, %s275
      %v277 = vld [vmem:[%s273] sm:$0xff]
      %v278 = vld [vmem:[%s273 + $0x8] sm:$0xff]
      %v279 = vld [vmem:[%s273 + $0x10] sm:$0xff]
      %v280 = vld [vmem:[%s273 + $0x18] sm:$0xff]
      %v281 = vld [vmem:[%s273 + $0x20] sm:$0xff]
      %v282 = vld [vmem:[%s273 + $0x28] sm:$0xff]
      %v283 = vld [vmem:[%s273 + $0x30] sm:$0xff]
      %v284 = vld [vmem:[%s273 + $0x38] sm:$0xff]
      %v285 = vld [vmem:[%s273 + $0x40] sm:$0xff]
      %v286 = vld [vmem:[%s273 + $0x48] sm:$0xff]
      %v287 = vld [vmem:[%s273 + $0x50] sm:$0xff]
      %v288 = vld [vmem:[%s273 + $0x58] sm:$0xff]
      %v289 = vld [vmem:[%s273 + $0x60] sm:$0xff]
      %v290 = vld [vmem:[%s273 + $0x68] sm:$0xff]
      %v291 = vld [vmem:[%s273 + $0x70] sm:$0xff]
      %v292 = vld [vmem:[%s273 + $0x78] sm:$0xff]
      %v293 = vld [vmem:[%s273 + $0x80] sm:$0xff]
      %v294 = vld [vmem:[%s273 + $0x88] sm:$0xff]
      %v295 = vld [vmem:[%s273 + $0x90] sm:$0xff]
      %v296 = vld [vmem:[%s273 + $0x98] sm:$0xff]
      %v297 = vld [vmem:[%s273 + $0xa0] sm:$0xff]
      %v298 = vld [vmem:[%s273 + $0xa8] sm:$0xff]
      %v299 = vld [vmem:[%s273 + $0xb0] sm:$0xff]
      %v300 = vld [vmem:[%s273 + $0xb8] sm:$0xff]
      %v301 = vld [vmem:[%s273 + $0xc0] sm:$0xff]
      %v302 = vld [vmem:[%s273 + $0xc8] sm:$0xff]
      %v303 = vld [vmem:[%s273 + $0xd0] sm:$0xff]
      %v304 = vld [vmem:[%s273 + $0xd8] sm:$0xff]
      %v305 = vld [vmem:[%s273 + $0xe0] sm:$0xff]
      %v306 = vld [vmem:[%s273 + $0xe8] sm:$0xff]
      %v307 = vld [vmem:[%s273 + $0xf0] sm:$0xff]
      %v308 = vld [vmem:[%s273 + $0xf8] sm:$0xff]
      %v309 = vld [vmem:[%s1] sm:$0xff]
      %v310 = vld [vmem:[%s1 + $0x8] sm:$0xff]
      %v311 = vld [vmem:[%s1 + $0x10] sm:$0xff]
      %v312 = vld [vmem:[%s1 + $0x18] sm:$0xff]
      %v313 = vld [vmem:[%s1 + $0x20] sm:$0xff]
      %v314 = vld [vmem:[%s1 + $0x28] sm:$0xff]
      %v315 = vld [vmem:[%s1 + $0x30] sm:$0x1]
      %v316 = vld [vmem:[%s2] sm:$0x1]
      %v317 = vperm.slane %v316, 0
      %vm318 = vcmask 400384
      %v320 = vsel %vm318, %v277, 0
      %v323 = vsel %vm318, %v278, 0
      %v326 = vsel %vm318, %v279, 0
      %v329 = vsel %vm318, %v280, 0
      %v332 = vsel %vm318, %v281, 0
      %v335 = vsel %vm318, %v282, 0
      %v338 = vsel %vm318, %v283, 0
      %v341 = vsel %vm318, %v284, 0
      %v344 = vsel %vm318, %v285, 0
      %v347 = vsel %vm318, %v286, 0
      %v350 = vsel %vm318, %v287, 0
      %v353 = vsel %vm318, %v288, 0
      %v356 = vsel %vm318, %v289, 0
      %v359 = vsel %vm318, %v290, 0
      %v362 = vsel %vm318, %v291, 0
      %v365 = vsel %vm318, %v292, 0
      %v368 = vsel %vm318, %v293, 0
      %v371 = vsel %vm318, %v294, 0
      %v374 = vsel %vm318, %v295, 0
      %v377 = vsel %vm318, %v296, 0
      %v380 = vsel %vm318, %v297, 0
      %v383 = vsel %vm318, %v298, 0
      %v386 = vsel %vm318, %v299, 0
      %v389 = vsel %vm318, %v300, 0
      %v392 = vsel %vm318, %v301, 0
      %v395 = vsel %vm318, %v302, 0
      %v398 = vsel %vm318, %v303, 0
      %v401 = vsel %vm318, %v304, 0
      %v404 = vsel %vm318, %v305, 0
      %v407 = vsel %vm318, %v306, 0
      %v410 = vsel %vm318, %v307, 0
      %v413 = vsel %vm318, %v308, 0
      %vm415 = vcmask 1040384
      %v417 = vsel %vm415, %v315, 0
      %419 = vmatpush.msra.mxu0 0.0
      %420 = vmatpush.msra.mxu0 0.0
      %421 = vmatpush.msra.mxu0 0.0
      %422 = vmatpush.msra.mxu0 0.0
      %423 = vmatpush.msra.mxu0 0.0
      %424 = vmatpush.msra.mxu0 0.0
      %425 = vmatpush.msra.mxu0 0.0
      %426 = vmatpush.msra.mxu0 0.0
      %427 = vmatpush.msra.mxu0 0.0
      %428 = vmatpush.msra.mxu0 %v417
      %429 = vmatpush.msra.mxu0 %v314
      %430 = vmatpush.msra.mxu0 %v313
      %431 = vmatpush.msra.mxu0 %v312
      %432 = vmatpush.msra.mxu0 %v311
      %433 = vmatpush.msra.mxu0 %v310
      %434 = vmatpush.msra.mxu0 %v309
      %435 = vmatmul.f32.gmra.mxu0 %v320
      %v436 = vpop.f32.mrf.mxu0
      %v437 = vadd.f32 %v317, %v436
      %438 = vmatmul.f32.gmra.mxu0 %v323
      %v439 = vpop.f32.mrf.mxu0
      %v440 = vadd.f32 %v317, %v439
      %441 = vmatmul.f32.gmra.mxu0 %v326
      %v442 = vpop.f32.mrf.mxu0
      %v443 = vadd.f32 %v317, %v442
      %444 = vmatmul.f32.gmra.mxu0 %v329
      %v445 = vpop.f32.mrf.mxu0
      %v446 = vadd.f32 %v317, %v445
      %447 = vmatmul.f32.gmra.mxu0 %v332
      %v448 = vpop.f32.mrf.mxu0
      %v449 = vadd.f32 %v317, %v448
      %450 = vmatmul.f32.gmra.mxu0 %v335
      %v451 = vpop.f32.mrf.mxu0
      %v452 = vadd.f32 %v317, %v451
      %453 = vmatmul.f32.gmra.mxu0 %v338
      %v454 = vpop.f32.mrf.mxu0
      %v455 = vadd.f32 %v317, %v454
      %456 = vmatmul.f32.gmra.mxu0 %v341
      %v457 = vpop.f32.mrf.mxu0
      %v458 = vadd.f32 %v317, %v457
      %459 = vmatmul.f32.gmra.mxu0 %v344
      %v460 = vpop.f32.mrf.mxu0
      %v461 = vadd.f32 %v317, %v460
      %462 = vmatmul.f32.gmra.mxu0 %v347
      %v463 = vpop.f32.mrf.mxu0
      %v464 = vadd.f32 %v317, %v463
      %465 = vmatmul.f32.gmra.mxu0 %v350
      %v466 = vpop.f32.mrf.mxu0
      %v467 = vadd.f32 %v317, %v466
      %468 = vmatmul.f32.gmra.mxu0 %v353
      %v469 = vpop.f32.mrf.mxu0
      %v470 = vadd.f32 %v317, %v469
      %471 = vmatmul.f32.gmra.mxu0 %v356
      %v472 = vpop.f32.mrf.mxu0
      %v473 = vadd.f32 %v317, %v472
      %474 = vmatmul.f32.gmra.mxu0 %v359
      %v475 = vpop.f32.mrf.mxu0
      %v476 = vadd.f32 %v317, %v475
      %477 = vmatmul.f32.gmra.mxu0 %v362
      %v478 = vpop.f32.mrf.mxu0
      %v479 = vadd.f32 %v317, %v478
      %480 = vmatmul.f32.gmra.mxu0 %v365
      %v481 = vpop.f32.mrf.mxu0
      %v482 = vadd.f32 %v317, %v481
      %483 = vmatmul.f32.gmra.mxu0 %v368
      %v484 = vpop.f32.mrf.mxu0
      %v485 = vadd.f32 %v317, %v484
      %486 = vmatmul.f32.gmra.mxu0 %v371
      %v487 = vpop.f32.mrf.mxu0
      %v488 = vadd.f32 %v317, %v487
      %489 = vmatmul.f32.gmra.mxu0 %v374
      %v490 = vpop.f32.mrf.mxu0
      %v491 = vadd.f32 %v317, %v490
      %492 = vmatmul.f32.gmra.mxu0 %v377
      %v493 = vpop.f32.mrf.mxu0
      %v494 = vadd.f32 %v317, %v493
      %495 = vmatmul.f32.gmra.mxu0 %v380
      %v496 = vpop.f32.mrf.mxu0
      %v497 = vadd.f32 %v317, %v496
      %498 = vmatmul.f32.gmra.mxu0 %v383
      %v499 = vpop.f32.mrf.mxu0
      %v500 = vadd.f32 %v317, %v499
      %501 = vmatmul.f32.gmra.mxu0 %v386
      %v502 = vpop.f32.mrf.mxu0
      %v503 = vadd.f32 %v317, %v502
      %504 = vmatmul.f32.gmra.mxu0 %v389
      %v505 = vpop.f32.mrf.mxu0
      %v506 = vadd.f32 %v317, %v505
      %507 = vmatmul.f32.gmra.mxu0 %v392
      %v508 = vpop.f32.mrf.mxu0
      %v509 = vadd.f32 %v317, %v508
      %510 = vmatmul.f32.gmra.mxu0 %v395
      %v511 = vpop.f32.mrf.mxu0
      %v512 = vadd.f32 %v317, %v511
      %513 = vmatmul.f32.gmra.mxu0 %v398
      %v514 = vpop.f32.mrf.mxu0
      %v515 = vadd.f32 %v317, %v514
      %516 = vmatmul.f32.gmra.mxu0 %v401
      %v517 = vpop.f32.mrf.mxu0
      %v518 = vadd.f32 %v317, %v517
      %519 = vmatmul.f32.gmra.mxu0 %v404
      %v520 = vpop.f32.mrf.mxu0
      %v521 = vadd.f32 %v317, %v520
      %522 = vmatmul.f32.gmra.mxu0 %v407
      %v523 = vpop.f32.mrf.mxu0
      %v524 = vadd.f32 %v317, %v523
      %525 = vmatmul.f32.gmra.mxu0 %v410
      %v526 = vpop.f32.mrf.mxu0
      %v527 = vadd.f32 %v317, %v526
      %528 = vmatmul.f32.gmra.mxu0 %v413
      %v529 = vpop.f32.mrf.mxu0
      %v530 = vadd.f32 %v317, %v529
      %531 = vdwg.mxu0
      %v532 = vmax.f32 %v437, 0.0
      %v533 = vmax.f32 %v440, 0.0
      %v534 = vmax.f32 %v443, 0.0
      %v535 = vmax.f32 %v446, 0.0
      %v536 = vmax.f32 %v449, 0.0
      %v537 = vmax.f32 %v452, 0.0
      %v538 = vmax.f32 %v455, 0.0
      %v539 = vmax.f32 %v458, 0.0
      %v540 = vmax.f32 %v461, 0.0
      %v541 = vmax.f32 %v464, 0.0
      %v542 = vmax.f32 %v467, 0.0
      %v543 = vmax.f32 %v470, 0.0
      %v544 = vmax.f32 %v473, 0.0
      %v545 = vmax.f32 %v476, 0.0
      %v546 = vmax.f32 %v479, 0.0
      %v547 = vmax.f32 %v482, 0.0
      %v548 = vmax.f32 %v485, 0.0
      %v549 = vmax.f32 %v488, 0.0
      %v550 = vmax.f32 %v491, 0.0
      %v551 = vmax.f32 %v494, 0.0
      %v552 = vmax.f32 %v497, 0.0
      %v553 = vmax.f32 %v500, 0.0
      %v554 = vmax.f32 %v503, 0.0
      %v555 = vmax.f32 %v506, 0.0
      %v556 = vmax.f32 %v509, 0.0
      %v557 = vmax.f32 %v512, 0.0
      %v558 = vmax.f32 %v515, 0.0
      %v559 = vmax.f32 %v518, 0.0
      %v560 = vmax.f32 %v521, 0.0
      %v561 = vmax.f32 %v524, 0.0
      %v562 = vmax.f32 %v527, 0.0
      %v563 = vmax.f32 %v530, 0.0
      %v564 = vld [vmem:[%s2 + $0x1] sm:$0x1]
      %v565 = vperm.slane %v564, 0
      %v566 = vmul.f32 %v532, %v565
      %v567 = vmul.f32 %v533, %v565
      %v568 = vmul.f32 %v534, %v565
      %v569 = vmul.f32 %v535, %v565
      %v570 = vmul.f32 %v536, %v565
      %v571 = vmul.f32 %v537, %v565
      %v572 = vmul.f32 %v538, %v565
      %v573 = vmul.f32 %v539, %v565
      %v574 = vmul.f32 %v540, %v565
      %v575 = vmul.f32 %v541, %v565
      %v576 = vmul.f32 %v542, %v565
      %v577 = vmul.f32 %v543, %v565
      %v578 = vmul.f32 %v544, %v565
      %v579 = vmul.f32 %v545, %v565
      %v580 = vmul.f32 %v546, %v565
      %v581 = vmul.f32 %v547, %v565
      %v582 = vmul.f32 %v548, %v565
      %v583 = vmul.f32 %v549, %v565
      %v584 = vmul.f32 %v550, %v565
      %v585 = vmul.f32 %v551, %v565
      %v586 = vmul.f32 %v552, %v565
      %v587 = vmul.f32 %v553, %v565
      %v588 = vmul.f32 %v554, %v565
      %v589 = vmul.f32 %v555, %v565
      %v590 = vmul.f32 %v556, %v565
      %v591 = vmul.f32 %v557, %v565
      %v592 = vmul.f32 %v558, %v565
      %v593 = vmul.f32 %v559, %v565
      %v594 = vmul.f32 %v560, %v565
      %v595 = vmul.f32 %v561, %v565
      %v596 = vmul.f32 %v562, %v565
      %v597 = vmul.f32 %v563, %v565
      %v598 = vld [vmem:[%s2 + $0x2] sm:$0x1]
      %v599 = vperm.slane %v598, 0
      %v600 = vadd.f32 %v566, %v599
      %v601 = vadd.f32 %v567, %v599
      %v602 = vadd.f32 %v568, %v599
      %v603 = vadd.f32 %v569, %v599
      %v604 = vadd.f32 %v570, %v599
      %v605 = vadd.f32 %v571, %v599
      %v606 = vadd.f32 %v572, %v599
      %v607 = vadd.f32 %v573, %v599
      %v608 = vadd.f32 %v574, %v599
      %v609 = vadd.f32 %v575, %v599
      %v610 = vadd.f32 %v576, %v599
      %v611 = vadd.f32 %v577, %v599
      %v612 = vadd.f32 %v578, %v599
      %v613 = vadd.f32 %v579, %v599
      %v614 = vadd.f32 %v580, %v599
      %v615 = vadd.f32 %v581, %v599
      %v616 = vadd.f32 %v582, %v599
      %v617 = vadd.f32 %v583, %v599
      %v618 = vadd.f32 %v584, %v599
      %v619 = vadd.f32 %v585, %v599
      %v620 = vadd.f32 %v586, %v599
      %v621 = vadd.f32 %v587, %v599
      %v622 = vadd.f32 %v588, %v599
      %v623 = vadd.f32 %v589, %v599
      %v624 = vadd.f32 %v590, %v599
      %v625 = vadd.f32 %v591, %v599
      %v626 = vadd.f32 %v592, %v599
      %v627 = vadd.f32 %v593, %v599
      %v628 = vadd.f32 %v594, %v599
      %v629 = vadd.f32 %v595, %v599
      %v630 = vadd.f32 %v596, %v599
      %v631 = vadd.f32 %v597, %v599
      %v664 = vrot.slane %v600, 2
      %v665 = vrot.slane %v600, 4
      %v666 = vrot.slane %v600, 6
      %v667 = vrot.slane %v601, 2
      %v668 = vrot.slane %v601, 4
      %v669 = vrot.slane %v601, 6
      %v670 = vrot.slane %v602, 2
      %v671 = vrot.slane %v602, 4
      %v672 = vrot.slane %v602, 6
      %v673 = vrot.slane %v603, 2
      %v674 = vrot.slane %v603, 4
      %v675 = vrot.slane %v603, 6
      %v676 = vrot.slane %v604, 2
      %v677 = vrot.slane %v604, 4
      %v678 = vrot.slane %v604, 6
      %v679 = vrot.slane %v605, 2
      %v680 = vrot.slane %v605, 4
      %v681 = vrot.slane %v605, 6
      %v682 = vrot.slane %v606, 2
      %v683 = vrot.slane %v606, 4
      %v684 = vrot.slane %v606, 6
      %v685 = vrot.slane %v607, 2
      %v686 = vrot.slane %v607, 4
      %v687 = vrot.slane %v607, 6
      %v688 = vrot.slane %v608, 2
      %v689 = vrot.slane %v608, 4
      %v690 = vrot.slane %v608, 6
      %v691 = vrot.slane %v609, 2
      %v692 = vrot.slane %v609, 4
      %v693 = vrot.slane %v609, 6
      %v694 = vrot.slane %v610, 2
      %v695 = vrot.slane %v610, 4
      %v696 = vrot.slane %v610, 6
      %v697 = vrot.slane %v611, 2
      %v698 = vrot.slane %v611, 4
      %v699 = vrot.slane %v611, 6
      %v700 = vrot.slane %v612, 2
      %v701 = vrot.slane %v612, 4
      %v702 = vrot.slane %v612, 6
      %v703 = vrot.slane %v613, 2
      %v704 = vrot.slane %v613, 4
      %v705 = vrot.slane %v613, 6
      %v706 = vrot.slane %v614, 2
      %v707 = vrot.slane %v614, 4
      %v708 = vrot.slane %v614, 6
      %v709 = vrot.slane %v615, 2
      %v710 = vrot.slane %v615, 4
      %v711 = vrot.slane %v615, 6
      %v712 = vrot.slane %v616, 2
      %v713 = vrot.slane %v616, 4
      %v714 = vrot.slane %v616, 6
      %v715 = vrot.slane %v617, 2
      %v716 = vrot.slane %v617, 4
      %v717 = vrot.slane %v617, 6
      %v718 = vrot.slane %v618, 2
      %v719 = vrot.slane %v618, 4
      %v720 = vrot.slane %v618, 6
      %v721 = vrot.slane %v619, 2
      %v722 = vrot.slane %v619, 4
      %v723 = vrot.slane %v619, 6
      %v724 = vrot.slane %v620, 2
      %v725 = vrot.slane %v620, 4
      %v726 = vrot.slane %v620, 6
      %v727 = vrot.slane %v621, 2
      %v728 = vrot.slane %v621, 4
      %v729 = vrot.slane %v621, 6
      %v730 = vrot.slane %v622, 2
      %v731 = vrot.slane %v622, 4
      %v732 = vrot.slane %v622, 6
      %v733 = vrot.slane %v623, 2
      %v734 = vrot.slane %v623, 4
      %v735 = vrot.slane %v623, 6
      %v736 = vrot.slane %v624, 2
      %v737 = vrot.slane %v624, 4
      %v738 = vrot.slane %v624, 6
      %v739 = vrot.slane %v625, 2
      %v740 = vrot.slane %v625, 4
      %v741 = vrot.slane %v625, 6
      %v742 = vrot.slane %v626, 2
      %v743 = vrot.slane %v626, 4
      %v744 = vrot.slane %v626, 6
      %v745 = vrot.slane %v627, 2
      %v746 = vrot.slane %v627, 4
      %v747 = vrot.slane %v627, 6
      %v748 = vrot.slane %v628, 2
      %v749 = vrot.slane %v628, 4
      %v750 = vrot.slane %v628, 6
      %v751 = vrot.slane %v629, 2
      %v752 = vrot.slane %v629, 4
      %v753 = vrot.slane %v629, 6
      %v754 = vrot.slane %v630, 2
      %v755 = vrot.slane %v630, 4
      %v756 = vrot.slane %v630, 6
      %v757 = vrot.slane %v631, 2
      %v758 = vrot.slane %v631, 4
      %v759 = vrot.slane %v631, 6
      %v856 = vrot.slane %v600, 7
      %v857 = vrot.slane %v856, 2
      %v858 = vrot.slane %v664, 7
      %v859 = vrot.slane %v858, 2
      %v860 = vrot.slane %v665, 7
      %v861 = vrot.slane %v860, 2
      %v862 = vrot.slane %v666, 7
      %v863 = vrot.slane %v862, 2
      %v864 = vrot.slane %v601, 7
      %v865 = vrot.slane %v864, 2
      %v866 = vrot.slane %v667, 7
      %v867 = vrot.slane %v866, 2
      %v868 = vrot.slane %v668, 7
      %v869 = vrot.slane %v868, 2
      %v870 = vrot.slane %v669, 7
      %v871 = vrot.slane %v870, 2
      %v872 = vrot.slane %v602, 7
      %v873 = vrot.slane %v872, 2
      %v874 = vrot.slane %v670, 7
      %v875 = vrot.slane %v874, 2
      %v876 = vrot.slane %v671, 7
      %v877 = vrot.slane %v876, 2
      %v878 = vrot.slane %v672, 7
      %v879 = vrot.slane %v878, 2
      %v880 = vrot.slane %v603, 7
      %v881 = vrot.slane %v880, 2
      %v882 = vrot.slane %v673, 7
      %v883 = vrot.slane %v882, 2
      %v884 = vrot.slane %v674, 7
      %v885 = vrot.slane %v884, 2
      %v886 = vrot.slane %v675, 7
      %v887 = vrot.slane %v886, 2
      %v888 = vrot.slane %v604, 7
      %v889 = vrot.slane %v888, 2
      %v890 = vrot.slane %v676, 7
      %v891 = vrot.slane %v890, 2
      %v892 = vrot.slane %v677, 7
      %v893 = vrot.slane %v892, 2
      %v894 = vrot.slane %v678, 7
      %v895 = vrot.slane %v894, 2
      %v896 = vrot.slane %v605, 7
      %v897 = vrot.slane %v896, 2
      %v898 = vrot.slane %v679, 7
      %v899 = vrot.slane %v898, 2
      %v900 = vrot.slane %v680, 7
      %v901 = vrot.slane %v900, 2
      %v902 = vrot.slane %v681, 7
      %v903 = vrot.slane %v902, 2
      %v904 = vrot.slane %v606, 7
      %v905 = vrot.slane %v904, 2
      %v906 = vrot.slane %v682, 7
      %v907 = vrot.slane %v906, 2
      %v908 = vrot.slane %v683, 7
      %v909 = vrot.slane %v908, 2
      %v910 = vrot.slane %v684, 7
      %v911 = vrot.slane %v910, 2
      %v912 = vrot.slane %v607, 7
      %v913 = vrot.slane %v912, 2
      %v914 = vrot.slane %v685, 7
      %v915 = vrot.slane %v914, 2
      %v916 = vrot.slane %v686, 7
      %v917 = vrot.slane %v916, 2
      %v918 = vrot.slane %v687, 7
      %v919 = vrot.slane %v918, 2
      %v920 = vrot.slane %v608, 7
      %v921 = vrot.slane %v920, 2
      %v922 = vrot.slane %v688, 7
      %v923 = vrot.slane %v922, 2
      %v924 = vrot.slane %v689, 7
      %v925 = vrot.slane %v924, 2
      %v926 = vrot.slane %v690, 7
      %v927 = vrot.slane %v926, 2
      %v928 = vrot.slane %v609, 7
      %v929 = vrot.slane %v928, 2
      %v930 = vrot.slane %v691, 7
      %v931 = vrot.slane %v930, 2
      %v932 = vrot.slane %v692, 7
      %v933 = vrot.slane %v932, 2
      %v934 = vrot.slane %v693, 7
      %v935 = vrot.slane %v934, 2
      %v936 = vrot.slane %v610, 7
      %v937 = vrot.slane %v936, 2
      %v938 = vrot.slane %v694, 7
      %v939 = vrot.slane %v938, 2
      %v940 = vrot.slane %v695, 7
      %v941 = vrot.slane %v940, 2
      %v942 = vrot.slane %v696, 7
      %v943 = vrot.slane %v942, 2
      %v944 = vrot.slane %v611, 7
      %v945 = vrot.slane %v944, 2
      %v946 = vrot.slane %v697, 7
      %v947 = vrot.slane %v946, 2
      %v948 = vrot.slane %v698, 7
      %v949 = vrot.slane %v948, 2
      %v950 = vrot.slane %v699, 7
      %v951 = vrot.slane %v950, 2
      %v952 = vrot.slane %v612, 7
      %v953 = vrot.slane %v952, 2
      %v954 = vrot.slane %v700, 7
      %v955 = vrot.slane %v954, 2
      %v956 = vrot.slane %v701, 7
      %v957 = vrot.slane %v956, 2
      %v958 = vrot.slane %v702, 7
      %v959 = vrot.slane %v958, 2
      %v960 = vrot.slane %v613, 7
      %v961 = vrot.slane %v960, 2
      %v962 = vrot.slane %v703, 7
      %v963 = vrot.slane %v962, 2
      %v964 = vrot.slane %v704, 7
      %v965 = vrot.slane %v964, 2
      %v966 = vrot.slane %v705, 7
      %v967 = vrot.slane %v966, 2
      %v968 = vrot.slane %v614, 7
      %v969 = vrot.slane %v968, 2
      %v970 = vrot.slane %v706, 7
      %v971 = vrot.slane %v970, 2
      %v972 = vrot.slane %v707, 7
      %v973 = vrot.slane %v972, 2
      %v974 = vrot.slane %v708, 7
      %v975 = vrot.slane %v974, 2
      %v976 = vrot.slane %v615, 7
      %v977 = vrot.slane %v976, 2
      %v978 = vrot.slane %v709, 7
      %v979 = vrot.slane %v978, 2
      %v980 = vrot.slane %v710, 7
      %v981 = vrot.slane %v980, 2
      %v982 = vrot.slane %v711, 7
      %v983 = vrot.slane %v982, 2
      %v984 = vrot.slane %v616, 7
      %v985 = vrot.slane %v984, 2
      %v986 = vrot.slane %v712, 7
      %v987 = vrot.slane %v986, 2
      %v988 = vrot.slane %v713, 7
      %v989 = vrot.slane %v988, 2
      %v990 = vrot.slane %v714, 7
      %v991 = vrot.slane %v990, 2
      %v992 = vrot.slane %v617, 7
      %v993 = vrot.slane %v992, 2
      %v994 = vrot.slane %v715, 7
      %v995 = vrot.slane %v994, 2
      %v996 = vrot.slane %v716, 7
      %v997 = vrot.slane %v996, 2
      %v998 = vrot.slane %v717, 7
      %v999 = vrot.slane %v998, 2
      %v1000 = vrot.slane %v618, 7
      %v1001 = vrot.slane %v1000, 2
      %v1002 = vrot.slane %v718, 7
      %v1003 = vrot.slane %v1002, 2
      %v1004 = vrot.slane %v719, 7
      %v1005 = vrot.slane %v1004, 2
      %v1006 = vrot.slane %v720, 7
      %v1007 = vrot.slane %v1006, 2
      %v1008 = vrot.slane %v619, 7
      %v1009 = vrot.slane %v1008, 2
      %v1010 = vrot.slane %v721, 7
      %v1011 = vrot.slane %v1010, 2
      %v1012 = vrot.slane %v722, 7
      %v1013 = vrot.slane %v1012, 2
      %v1014 = vrot.slane %v723, 7
      %v1015 = vrot.slane %v1014, 2
      %v1016 = vrot.slane %v620, 7
      %v1017 = vrot.slane %v1016, 2
      %v1018 = vrot.slane %v724, 7
      %v1019 = vrot.slane %v1018, 2
      %v1020 = vrot.slane %v725, 7
      %v1021 = vrot.slane %v1020, 2
      %v1022 = vrot.slane %v726, 7
      %v1023 = vrot.slane %v1022, 2
      %v1024 = vrot.slane %v621, 7
      %v1025 = vrot.slane %v1024, 2
      %v1026 = vrot.slane %v727, 7
      %v1027 = vrot.slane %v1026, 2
      %v1028 = vrot.slane %v728, 7
      %v1029 = vrot.slane %v1028, 2
      %v1030 = vrot.slane %v729, 7
      %v1031 = vrot.slane %v1030, 2
      %v1032 = vrot.slane %v622, 7
      %v1033 = vrot.slane %v1032, 2
      %v1034 = vrot.slane %v730, 7
      %v1035 = vrot.slane %v1034, 2
      %v1036 = vrot.slane %v731, 7
      %v1037 = vrot.slane %v1036, 2
      %v1038 = vrot.slane %v732, 7
      %v1039 = vrot.slane %v1038, 2
      %v1040 = vrot.slane %v623, 7
      %v1041 = vrot.slane %v1040, 2
      %v1042 = vrot.slane %v733, 7
      %v1043 = vrot.slane %v1042, 2
      %v1044 = vrot.slane %v734, 7
      %v1045 = vrot.slane %v1044, 2
      %v1046 = vrot.slane %v735, 7
      %v1047 = vrot.slane %v1046, 2
      %v1048 = vrot.slane %v624, 7
      %v1049 = vrot.slane %v1048, 2
      %v1050 = vrot.slane %v736, 7
      %v1051 = vrot.slane %v1050, 2
      %v1052 = vrot.slane %v737, 7
      %v1053 = vrot.slane %v1052, 2
      %v1054 = vrot.slane %v738, 7
      %v1055 = vrot.slane %v1054, 2
      %v1056 = vrot.slane %v625, 7
      %v1057 = vrot.slane %v1056, 2
      %v1058 = vrot.slane %v739, 7
      %v1059 = vrot.slane %v1058, 2
      %v1060 = vrot.slane %v740, 7
      %v1061 = vrot.slane %v1060, 2
      %v1062 = vrot.slane %v741, 7
      %v1063 = vrot.slane %v1062, 2
      %v1064 = vrot.slane %v626, 7
      %v1065 = vrot.slane %v1064, 2
      %v1066 = vrot.slane %v742, 7
      %v1067 = vrot.slane %v1066, 2
      %v1068 = vrot.slane %v743, 7
      %v1069 = vrot.slane %v1068, 2
      %v1070 = vrot.slane %v744, 7
      %v1071 = vrot.slane %v1070, 2
      %v1072 = vrot.slane %v627, 7
      %v1073 = vrot.slane %v1072, 2
      %v1074 = vrot.slane %v745, 7
      %v1075 = vrot.slane %v1074, 2
      %v1076 = vrot.slane %v746, 7
      %v1077 = vrot.slane %v1076, 2
      %v1078 = vrot.slane %v747, 7
      %v1079 = vrot.slane %v1078, 2
      %v1080 = vrot.slane %v628, 7
      %v1081 = vrot.slane %v1080, 2
      %v1082 = vrot.slane %v748, 7
      %v1083 = vrot.slane %v1082, 2
      %v1084 = vrot.slane %v749, 7
      %v1085 = vrot.slane %v1084, 2
      %v1086 = vrot.slane %v750, 7
      %v1087 = vrot.slane %v1086, 2
      %v1088 = vrot.slane %v629, 7
      %v1089 = vrot.slane %v1088, 2
      %v1090 = vrot.slane %v751, 7
      %v1091 = vrot.slane %v1090, 2
      %v1092 = vrot.slane %v752, 7
      %v1093 = vrot.slane %v1092, 2
      %v1094 = vrot.slane %v753, 7
      %v1095 = vrot.slane %v1094, 2
      %v1096 = vrot.slane %v630, 7
      %v1097 = vrot.slane %v1096, 2
      %v1098 = vrot.slane %v754, 7
      %v1099 = vrot.slane %v1098, 2
      %v1100 = vrot.slane %v755, 7
      %v1101 = vrot.slane %v1100, 2
      %v1102 = vrot.slane %v756, 7
      %v1103 = vrot.slane %v1102, 2
      %v1104 = vrot.slane %v631, 7
      %v1105 = vrot.slane %v1104, 2
      %v1106 = vrot.slane %v757, 7
      %v1107 = vrot.slane %v1106, 2
      %v1108 = vrot.slane %v758, 7
      %v1109 = vrot.slane %v1108, 2
      %v1110 = vrot.slane %v759, 7
      %v1111 = vrot.slane %v1110, 2
      %v1240 = vmax.f32 %v600, %v857
      %v1241 = vmax.f32 %v664, %v859
      %v1242 = vmax.f32 %v665, %v861
      %v1243 = vmax.f32 %v666, %v863
      %v1244 = vmax.f32 %v601, %v865
      %v1245 = vmax.f32 %v667, %v867
      %v1246 = vmax.f32 %v668, %v869
      %v1247 = vmax.f32 %v669, %v871
      %v1248 = vmax.f32 %v602, %v873
      %v1249 = vmax.f32 %v670, %v875
      %v1250 = vmax.f32 %v671, %v877
      %v1251 = vmax.f32 %v672, %v879
      %v1252 = vmax.f32 %v603, %v881
      %v1253 = vmax.f32 %v673, %v883
      %v1254 = vmax.f32 %v674, %v885
      %v1255 = vmax.f32 %v675, %v887
      %v1256 = vmax.f32 %v604, %v889
      %v1257 = vmax.f32 %v676, %v891
      %v1258 = vmax.f32 %v677, %v893
      %v1259 = vmax.f32 %v678, %v895
      %v1260 = vmax.f32 %v605, %v897
      %v1261 = vmax.f32 %v679, %v899
      %v1262 = vmax.f32 %v680, %v901
      %v1263 = vmax.f32 %v681, %v903
      %v1264 = vmax.f32 %v606, %v905
      %v1265 = vmax.f32 %v682, %v907
      %v1266 = vmax.f32 %v683, %v909
      %v1267 = vmax.f32 %v684, %v911
      %v1268 = vmax.f32 %v607, %v913
      %v1269 = vmax.f32 %v685, %v915
      %v1270 = vmax.f32 %v686, %v917
      %v1271 = vmax.f32 %v687, %v919
      %v1272 = vmax.f32 %v608, %v921
      %v1273 = vmax.f32 %v688, %v923
      %v1274 = vmax.f32 %v689, %v925
      %v1275 = vmax.f32 %v690, %v927
      %v1276 = vmax.f32 %v609, %v929
      %v1277 = vmax.f32 %v691, %v931
      %v1278 = vmax.f32 %v692, %v933
      %v1279 = vmax.f32 %v693, %v935
      %v1280 = vmax.f32 %v610, %v937
      %v1281 = vmax.f32 %v694, %v939
      %v1282 = vmax.f32 %v695, %v941
      %v1283 = vmax.f32 %v696, %v943
      %v1284 = vmax.f32 %v611, %v945
      %v1285 = vmax.f32 %v697, %v947
      %v1286 = vmax.f32 %v698, %v949
      %v1287 = vmax.f32 %v699, %v951
      %v1288 = vmax.f32 %v612, %v953
      %v1289 = vmax.f32 %v700, %v955
      %v1290 = vmax.f32 %v701, %v957
      %v1291 = vmax.f32 %v702, %v959
      %v1292 = vmax.f32 %v613, %v961
      %v1293 = vmax.f32 %v703, %v963
      %v1294 = vmax.f32 %v704, %v965
      %v1295 = vmax.f32 %v705, %v967
      %v1296 = vmax.f32 %v614, %v969
      %v1297 = vmax.f32 %v706, %v971
      %v1298 = vmax.f32 %v707, %v973
      %v1299 = vmax.f32 %v708, %v975
      %v1300 = vmax.f32 %v615, %v977
      %v1301 = vmax.f32 %v709, %v979
      %v1302 = vmax.f32 %v710, %v981
      %v1303 = vmax.f32 %v711, %v983
      %v1304 = vmax.f32 %v616, %v985
      %v1305 = vmax.f32 %v712, %v987
      %v1306 = vmax.f32 %v713, %v989
      %v1307 = vmax.f32 %v714, %v991
      %v1308 = vmax.f32 %v617, %v993
      %v1309 = vmax.f32 %v715, %v995
      %v1310 = vmax.f32 %v716, %v997
      %v1311 = vmax.f32 %v717, %v999
      %v1312 = vmax.f32 %v618, %v1001
      %v1313 = vmax.f32 %v718, %v1003
      %v1314 = vmax.f32 %v719, %v1005
      %v1315 = vmax.f32 %v720, %v1007
      %v1316 = vmax.f32 %v619, %v1009
      %v1317 = vmax.f32 %v721, %v1011
      %v1318 = vmax.f32 %v722, %v1013
      %v1319 = vmax.f32 %v723, %v1015
      %v1320 = vmax.f32 %v620, %v1017
      %v1321 = vmax.f32 %v724, %v1019
      %v1322 = vmax.f32 %v725, %v1021
      %v1323 = vmax.f32 %v726, %v1023
      %v1324 = vmax.f32 %v621, %v1025
      %v1325 = vmax.f32 %v727, %v1027
      %v1326 = vmax.f32 %v728, %v1029
      %v1327 = vmax.f32 %v729, %v1031
      %v1328 = vmax.f32 %v622, %v1033
      %v1329 = vmax.f32 %v730, %v1035
      %v1330 = vmax.f32 %v731, %v1037
      %v1331 = vmax.f32 %v732, %v1039
      %v1332 = vmax.f32 %v623, %v1041
      %v1333 = vmax.f32 %v733, %v1043
      %v1334 = vmax.f32 %v734, %v1045
      %v1335 = vmax.f32 %v735, %v1047
      %v1336 = vmax.f32 %v624, %v1049
      %v1337 = vmax.f32 %v736, %v1051
      %v1338 = vmax.f32 %v737, %v1053
      %v1339 = vmax.f32 %v738, %v1055
      %v1340 = vmax.f32 %v625, %v1057
      %v1341 = vmax.f32 %v739, %v1059
      %v1342 = vmax.f32 %v740, %v1061
      %v1343 = vmax.f32 %v741, %v1063
      %v1344 = vmax.f32 %v626, %v1065
      %v1345 = vmax.f32 %v742, %v1067
      %v1346 = vmax.f32 %v743, %v1069
      %v1347 = vmax.f32 %v744, %v1071
      %v1348 = vmax.f32 %v627, %v1073
      %v1349 = vmax.f32 %v745, %v1075
      %v1350 = vmax.f32 %v746, %v1077
      %v1351 = vmax.f32 %v747, %v1079
      %v1352 = vmax.f32 %v628, %v1081
      %v1353 = vmax.f32 %v748, %v1083
      %v1354 = vmax.f32 %v749, %v1085
      %v1355 = vmax.f32 %v750, %v1087
      %v1356 = vmax.f32 %v629, %v1089
      %v1357 = vmax.f32 %v751, %v1091
      %v1358 = vmax.f32 %v752, %v1093
      %v1359 = vmax.f32 %v753, %v1095
      %v1360 = vmax.f32 %v630, %v1097
      %v1361 = vmax.f32 %v754, %v1099
      %v1362 = vmax.f32 %v755, %v1101
      %v1363 = vmax.f32 %v756, %v1103
      %v1364 = vmax.f32 %v631, %v1105
      %v1365 = vmax.f32 %v757, %v1107
      %v1366 = vmax.f32 %v758, %v1109
      %v1367 = vmax.f32 %v759, %v1111
      %v1368 = vmax.f32 %v1240, %v1248
      %v1369 = vmax.f32 %v1241, %v1249
      %v1370 = vmax.f32 %v1242, %v1250
      %v1371 = vmax.f32 %v1243, %v1251
      %v1372 = vmax.f32 %v1244, %v1252
      %v1373 = vmax.f32 %v1245, %v1253
      %v1374 = vmax.f32 %v1246, %v1254
      %v1375 = vmax.f32 %v1247, %v1255
      %v1376 = vmax.f32 %v1256, %v1264
      %v1377 = vmax.f32 %v1257, %v1265
      %v1378 = vmax.f32 %v1258, %v1266
      %v1379 = vmax.f32 %v1259, %v1267
      %v1380 = vmax.f32 %v1260, %v1268
      %v1381 = vmax.f32 %v1261, %v1269
      %v1382 = vmax.f32 %v1262, %v1270
      %v1383 = vmax.f32 %v1263, %v1271
      %v1384 = vmax.f32 %v1272, %v1280
      %v1385 = vmax.f32 %v1273, %v1281
      %v1386 = vmax.f32 %v1274, %v1282
      %v1387 = vmax.f32 %v1275, %v1283
      %v1388 = vmax.f32 %v1276, %v1284
      %v1389 = vmax.f32 %v1277, %v1285
      %v1390 = vmax.f32 %v1278, %v1286
      %v1391 = vmax.f32 %v1279, %v1287
      %v1392 = vmax.f32 %v1288, %v1296
      %v1393 = vmax.f32 %v1289, %v1297
      %v1394 = vmax.f32 %v1290, %v1298
      %v1395 = vmax.f32 %v1291, %v1299
      %v1396 = vmax.f32 %v1292, %v1300
      %v1397 = vmax.f32 %v1293, %v1301
      %v1398 = vmax.f32 %v1294, %v1302
      %v1399 = vmax.f32 %v1295, %v1303
      %v1400 = vmax.f32 %v1304, %v1312
      %v1401 = vmax.f32 %v1305, %v1313
      %v1402 = vmax.f32 %v1306, %v1314
      %v1403 = vmax.f32 %v1307, %v1315
      %v1404 = vmax.f32 %v1308, %v1316
      %v1405 = vmax.f32 %v1309, %v1317
      %v1406 = vmax.f32 %v1310, %v1318
      %v1407 = vmax.f32 %v1311, %v1319
      %v1408 = vmax.f32 %v1320, %v1328
      %v1409 = vmax.f32 %v1321, %v1329
      %v1410 = vmax.f32 %v1322, %v1330
      %v1411 = vmax.f32 %v1323, %v1331
      %v1412 = vmax.f32 %v1324, %v1332
      %v1413 = vmax.f32 %v1325, %v1333
      %v1414 = vmax.f32 %v1326, %v1334
      %v1415 = vmax.f32 %v1327, %v1335
      %v1416 = vmax.f32 %v1336, %v1344
      %v1417 = vmax.f32 %v1337, %v1345
      %v1418 = vmax.f32 %v1338, %v1346
      %v1419 = vmax.f32 %v1339, %v1347
      %v1420 = vmax.f32 %v1340, %v1348
      %v1421 = vmax.f32 %v1341, %v1349
      %v1422 = vmax.f32 %v1342, %v1350
      %v1423 = vmax.f32 %v1343, %v1351
      %v1424 = vmax.f32 %v1352, %v1360
      %v1425 = vmax.f32 %v1353, %v1361
      %v1426 = vmax.f32 %v1354, %v1362
      %v1427 = vmax.f32 %v1355, %v1363
      %v1428 = vmax.f32 %v1356, %v1364
      %v1429 = vmax.f32 %v1357, %v1365
      %v1430 = vmax.f32 %v1358, %v1366
      %v1431 = vmax.f32 %v1359, %v1367
      %v1496 = vperm.slane %v1368, 0
      %v1497 = vperm.slane %v1369, 0
      %v1498 = vperm.slane %v1370, 0
      %v1499 = vperm.slane %v1371, 0
      %v1500 = vperm.slane %v1372, 0
      %v1501 = vperm.slane %v1373, 0
      %v1502 = vperm.slane %v1374, 0
      %v1503 = vperm.slane %v1375, 0
      %v1504 = vperm.slane %v1376, 0
      %v1505 = vperm.slane %v1377, 0
      %v1506 = vperm.slane %v1378, 0
      %v1507 = vperm.slane %v1379, 0
      %v1508 = vperm.slane %v1380, 0
      %v1509 = vperm.slane %v1381, 0
      %v1510 = vperm.slane %v1382, 0
      %v1511 = vperm.slane %v1383, 0
      %v1512 = vperm.slane %v1384, 0
      %v1513 = vperm.slane %v1385, 0
      %v1514 = vperm.slane %v1386, 0
      %v1515 = vperm.slane %v1387, 0
      %v1516 = vperm.slane %v1388, 0
      %v1517 = vperm.slane %v1389, 0
      %v1518 = vperm.slane %v1390, 0
      %v1519 = vperm.slane %v1391, 0
      %v1520 = vperm.slane %v1392, 0
      %v1521 = vperm.slane %v1393, 0
      %v1522 = vperm.slane %v1394, 0
      %v1523 = vperm.slane %v1395, 0
      %v1524 = vperm.slane %v1396, 0
      %v1525 = vperm.slane %v1397, 0
      %v1526 = vperm.slane %v1398, 0
      %v1527 = vperm.slane %v1399, 0
      %v1528 = vperm.slane %v1400, 0
      %v1529 = vperm.slane %v1401, 0
      %v1530 = vperm.slane %v1402, 0
      %v1531 = vperm.slane %v1403, 0
      %v1532 = vperm.slane %v1404, 0
      %v1533 = vperm.slane %v1405, 0
      %v1534 = vperm.slane %v1406, 0
      %v1535 = vperm.slane %v1407, 0
      %v1536 = vperm.slane %v1408, 0
      %v1537 = vperm.slane %v1409, 0
      %v1538 = vperm.slane %v1410, 0
      %v1539 = vperm.slane %v1411, 0
      %v1540 = vperm.slane %v1412, 0
      %v1541 = vperm.slane %v1413, 0
      %v1542 = vperm.slane %v1414, 0
      %v1543 = vperm.slane %v1415, 0
      %v1544 = vperm.slane %v1416, 0
      %v1545 = vperm.slane %v1417, 0
      %v1546 = vperm.slane %v1418, 0
      %v1547 = vperm.slane %v1419, 0
      %v1548 = vperm.slane %v1420, 0
      %v1549 = vperm.slane %v1421, 0
      %v1550 = vperm.slane %v1422, 0
      %v1551 = vperm.slane %v1423, 0
      %v1552 = vperm.slane %v1424, 0
      %v1553 = vperm.slane %v1425, 0
      %v1554 = vperm.slane %v1426, 0
      %v1555 = vperm.slane %v1427, 0
      %v1556 = vperm.slane %v1428, 0
      %v1557 = vperm.slane %v1429, 0
      %v1558 = vperm.slane %v1430, 0
      %v1559 = vperm.slane %v1431, 0
      %vm1560 = vcmask 1041409
      %v1561 = vsel %vm1560, %v1497, %v1496
      %vm1562 = vcmask 1042434
      %v1563 = vsel %vm1562, %v1498, %v1561
      %vm1564 = vcmask 1043459
      %v1565 = vsel %vm1564, %v1499, %v1563
      %vm1566 = vcmask 1044484
      %v1567 = vsel %vm1566, %v1500, %v1565
      %vm1568 = vcmask 1045509
      %v1569 = vsel %vm1568, %v1501, %v1567
      %vm1570 = vcmask 1046534
      %v1571 = vsel %vm1570, %v1502, %v1569
      %vm1572 = vcmask 1047559
      %v1573 = vsel %vm1572, %v1503, %v1571
      %v1574 = vsel %vm1560, %v1505, %v1504
      %v1575 = vsel %vm1562, %v1506, %v1574
      %v1576 = vsel %vm1564, %v1507, %v1575
      %v1577 = vsel %vm1566, %v1508, %v1576
      %v1578 = vsel %vm1568, %v1509, %v1577
      %v1579 = vsel %vm1570, %v1510, %v1578
      %v1580 = vsel %vm1572, %v1511, %v1579
      %v1581 = vsel %vm1560, %v1513, %v1512
      %v1582 = vsel %vm1562, %v1514, %v1581
      %v1583 = vsel %vm1564, %v1515, %v1582
      %v1584 = vsel %vm1566, %v1516, %v1583
      %v1585 = vsel %vm1568, %v1517, %v1584
      %v1586 = vsel %vm1570, %v1518, %v1585
      %v1587 = vsel %vm1572, %v1519, %v1586
      %v1588 = vsel %vm1560, %v1521, %v1520
      %v1589 = vsel %vm1562, %v1522, %v1588
      %v1590 = vsel %vm1564, %v1523, %v1589
      %v1591 = vsel %vm1566, %v1524, %v1590
      %v1592 = vsel %vm1568, %v1525, %v1591
      %v1593 = vsel %vm1570, %v1526, %v1592
      %v1594 = vsel %vm1572, %v1527, %v1593
      %v1595 = vsel %vm1560, %v1529, %v1528
      %v1596 = vsel %vm1562, %v1530, %v1595
      %v1597 = vsel %vm1564, %v1531, %v1596
      %v1598 = vsel %vm1566, %v1532, %v1597
      %v1599 = vsel %vm1568, %v1533, %v1598
      %v1600 = vsel %vm1570, %v1534, %v1599
      %v1601 = vsel %vm1572, %v1535, %v1600
      %v1602 = vsel %vm1560, %v1537, %v1536
      %v1603 = vsel %vm1562, %v1538, %v1602
      %v1604 = vsel %vm1564, %v1539, %v1603
      %v1605 = vsel %vm1566, %v1540, %v1604
      %v1606 = vsel %vm1568, %v1541, %v1605
      %v1607 = vsel %vm1570, %v1542, %v1606
      %v1608 = vsel %vm1572, %v1543, %v1607
      %v1609 = vsel %vm1560, %v1545, %v1544
      %v1610 = vsel %vm1562, %v1546, %v1609
      %v1611 = vsel %vm1564, %v1547, %v1610
      %v1612 = vsel %vm1566, %v1548, %v1611
      %v1613 = vsel %vm1568, %v1549, %v1612
      %v1614 = vsel %vm1570, %v1550, %v1613
      %v1615 = vsel %vm1572, %v1551, %v1614
      %v1616 = vsel %vm1560, %v1553, %v1552
      %v1617 = vsel %vm1562, %v1554, %v1616
      %v1618 = vsel %vm1564, %v1555, %v1617
      %v1619 = vsel %vm1566, %v1556, %v1618
      %v1620 = vsel %vm1568, %v1557, %v1619
      %v1621 = vsel %vm1570, %v1558, %v1620
      %v1622 = vsel %vm1572, %v1559, %v1621
      %v1624 = vrot.slane 0.0, 7
      %v1625 = vrot.slane %v1573, 7
      %v1626 = vrot.slane %v1580, 7
      %v1627 = vrot.slane %v1587, 7
      %v1628 = vrot.slane %v1594, 7
      %v1629 = vrot.slane %v1601, 7
      %v1630 = vrot.slane %v1608, 7
      %v1631 = vrot.slane %v1615, 7
      %v1632 = vrot.slane %v1622, 7
      %v1642 = vsel %vm415, 0.0, %v1624
      %v1643 = vsel %vm415, 0.0, %v1625
      %v1644 = vsel %vm415, 0.0, %v1626
      %v1645 = vsel %vm415, 0.0, %v1627
      %v1646 = vsel %vm415, 0.0, %v1628
      %v1647 = vsel %vm415, 0.0, %v1629
      %v1648 = vsel %vm415, 0.0, %v1630
      %v1649 = vsel %vm415, 0.0, %v1631
      %v1650 = vsel %vm415, 0.0, %v1632
      %v1651 = vsel %vm415, %v1624, 0.0
      %v1652 = vsel %vm415, %v1625, 0.0
      %v1653 = vsel %vm415, %v1626, 0.0
      %v1654 = vsel %vm415, %v1627, 0.0
      %v1655 = vsel %vm415, %v1628, 0.0
      %v1656 = vsel %vm415, %v1629, 0.0
      %v1657 = vsel %vm415, %v1630, 0.0
      %v1658 = vsel %vm415, %v1631, 0.0
      %v1659 = vsel %vm415, %v1632, 0.0
      %vm1676 = vcmask 1046528
      %v1677 = vrot.slane %v1642, 1
      %v1678 = vrot.slane %v1651, 1
      %v1679 = vsel %vm1676, %v1677, %v1678
      %v1680 = vrot.slane %v1643, 1
      %v1681 = vrot.slane %v1652, 1
      %v1682 = vsel %vm1676, %v1680, %v1681
      %v1683 = vrot.slane %v1644, 1
      %v1684 = vrot.slane %v1653, 1
      %v1685 = vsel %vm1676, %v1683, %v1684
      %v1686 = vrot.slane %v1645, 1
      %v1687 = vrot.slane %v1654, 1
      %v1688 = vsel %vm1676, %v1686, %v1687
      %v1689 = vrot.slane %v1646, 1
      %v1690 = vrot.slane %v1655, 1
      %v1691 = vsel %vm1676, %v1689, %v1690
      %v1692 = vrot.slane %v1647, 1
      %v1693 = vrot.slane %v1656, 1
      %v1694 = vsel %vm1676, %v1692, %v1693
      %v1695 = vrot.slane %v1648, 1
      %v1696 = vrot.slane %v1657, 1
      %v1697 = vsel %vm1676, %v1695, %v1696
      %v1698 = vrot.slane %v1649, 1
      %v1699 = vrot.slane %v1658, 1
      %v1700 = vsel %vm1676, %v1698, %v1699
      %vm1709 = vcmask 1045504
      %v1710 = vrot.slane %v1642, 2
      %v1711 = vrot.slane %v1651, 2
      %v1712 = vsel %vm1709, %v1710, %v1711
      %v1713 = vrot.slane %v1643, 2
      %v1714 = vrot.slane %v1652, 2
      %v1715 = vsel %vm1709, %v1713, %v1714
      %v1716 = vrot.slane %v1644, 2
      %v1717 = vrot.slane %v1653, 2
      %v1718 = vsel %vm1709, %v1716, %v1717
      %v1719 = vrot.slane %v1645, 2
      %v1720 = vrot.slane %v1654, 2
      %v1721 = vsel %vm1709, %v1719, %v1720
      %v1722 = vrot.slane %v1646, 2
      %v1723 = vrot.slane %v1655, 2
      %v1724 = vsel %vm1709, %v1722, %v1723
      %v1725 = vrot.slane %v1647, 2
      %v1726 = vrot.slane %v1656, 2
      %v1727 = vsel %vm1709, %v1725, %v1726
      %v1728 = vrot.slane %v1648, 2
      %v1729 = vrot.slane %v1657, 2
      %v1730 = vsel %vm1709, %v1728, %v1729
      %v1731 = vrot.slane %v1649, 2
      %v1732 = vrot.slane %v1658, 2
      %v1733 = vsel %vm1709, %v1731, %v1732
      %v1744 = vrot.slane %v1650, 1
      %v1745 = vrot.slane %v1659, 1
      %v1746 = vsel %vm1676, %v1744, %v1745
      %v1748 = vrot.slane %v1650, 2
      %v1749 = vrot.slane %v1659, 2
      %v1750 = vsel %vm1709, %v1748, %v1749
      %v1752 = vld [vmem:[%s3] sm:$0xff]
      %v1753 = vld [vmem:[%s3 + $0x8] sm:$0xff]
      %v1754 = vld [vmem:[%s3 + $0x10] sm:$0xff]
      %v1755 = vld [vmem:[%s3 + $0x18] sm:$0xff]
      %v1756 = vld [vmem:[%s3 + $0x20] sm:$0xff]
      %v1757 = vld [vmem:[%s3 + $0x28] sm:$0xff]
      %v1758 = vld [vmem:[%s3 + $0x30] sm:$0xff]
      %v1759 = vld [vmem:[%s3 + $0x38] sm:$0xff]
      %v1760 = vld [vmem:[%s3 + $0x40] sm:$0xff]
      %v1761 = vld [vmem:[%s3 + $0x48] sm:$0xff]
      %v1762 = vld [vmem:[%s3 + $0x50] sm:$0xff]
      %v1763 = vld [vmem:[%s3 + $0x58] sm:$0xff]
      %v1764 = vld [vmem:[%s3 + $0x60] sm:$0xff]
      %v1765 = vld [vmem:[%s3 + $0x68] sm:$0xff]
      %v1766 = vld [vmem:[%s3 + $0x70] sm:$0xff]
      %v1767 = vld [vmem:[%s3 + $0x78] sm:$0xff]
      %v1768 = vld [vmem:[%s3 + $0x80] sm:$0xff]
      %v1769 = vld [vmem:[%s3 + $0x88] sm:$0xff]
      %v1770 = vld [vmem:[%s3 + $0x90] sm:$0xff]
      %v1771 = vld [vmem:[%s3 + $0x98] sm:$0xff]
      %v1772 = vld [vmem:[%s3 + $0xa0] sm:$0xff]
      %v1773 = vld [vmem:[%s3 + $0xa8] sm:$0xff]
      %v1774 = vld [vmem:[%s3 + $0xb0] sm:$0xff]
      %v1775 = vld [vmem:[%s3 + $0xb8] sm:$0xff]
      %v1776 = vld [vmem:[%s3 + $0xc0] sm:$0xff]
      %v1777 = vld [vmem:[%s3 + $0xc8] sm:$0xff]
      %v1778 = vld [vmem:[%s3 + $0xd0] sm:$0xff]
      %v1779 = vld [vmem:[%s3 + $0xd8] sm:$0xff]
      %v1780 = vld [vmem:[%s3 + $0xe0] sm:$0xff]
      %v1781 = vld [vmem:[%s3 + $0xe8] sm:$0xff]
      %v1782 = vld [vmem:[%s3 + $0xf0] sm:$0xff]
      %v1783 = vld [vmem:[%s3 + $0xf8] sm:$0xff]
      %v1784 = vld [vmem:[%s3 + $0x100] sm:$0xff]
      %v1785 = vld [vmem:[%s3 + $0x108] sm:$0xff]
      %v1786 = vld [vmem:[%s3 + $0x110] sm:$0xff]
      %v1787 = vld [vmem:[%s3 + $0x118] sm:$0xff]
      %v1788 = vld [vmem:[%s3 + $0x120] sm:$0xff]
      %v1789 = vld [vmem:[%s3 + $0x128] sm:$0xff]
      %v1790 = vld [vmem:[%s3 + $0x130] sm:$0xff]
      %v1791 = vld [vmem:[%s3 + $0x138] sm:$0xff]
      %v1792 = vld [vmem:[%s3 + $0x140] sm:$0xff]
      %v1793 = vld [vmem:[%s3 + $0x148] sm:$0xff]
      %v1794 = vld [vmem:[%s3 + $0x150] sm:$0xff]
      %v1795 = vld [vmem:[%s3 + $0x158] sm:$0xff]
      %v1796 = vld [vmem:[%s3 + $0x160] sm:$0xff]
      %v1797 = vld [vmem:[%s3 + $0x168] sm:$0xff]
      %v1798 = vld [vmem:[%s3 + $0x170] sm:$0xff]
      %v1799 = vld [vmem:[%s3 + $0x178] sm:$0xff]
      %v1800 = vld [vmem:[%s3 + $0x180] sm:$0xff]
      %v1801 = vld [vmem:[%s3 + $0x188] sm:$0xff]
      %v1802 = vld [vmem:[%s3 + $0x190] sm:$0xff]
      %v1803 = vld [vmem:[%s3 + $0x198] sm:$0xff]
      %v1804 = vld [vmem:[%s3 + $0x1a0] sm:$0xff]
      %v1805 = vld [vmem:[%s3 + $0x1a8] sm:$0xff]
      %v1806 = vld [vmem:[%s3 + $0x1b0] sm:$0xff]
      %v1807 = vld [vmem:[%s3 + $0x1b8] sm:$0xff]
      %v1808 = vld [vmem:[%s3 + $0x1c0] sm:$0xff]
      %v1809 = vld [vmem:[%s3 + $0x1c8] sm:$0xff]
      %v1810 = vld [vmem:[%s3 + $0x1d0] sm:$0xff]
      %v1811 = vld [vmem:[%s3 + $0x1d8] sm:$0xff]
      %v1812 = vld [vmem:[%s3 + $0x1e0] sm:$0xff]
      %v1813 = vld [vmem:[%s3 + $0x1e8] sm:$0xff]
      %v1814 = vld [vmem:[%s3 + $0x1f0] sm:$0xff]
      %v1815 = vld [vmem:[%s3 + $0x1f8] sm:$0xff]
      %v1816 = vld [vmem:[%s3 + $0x200] sm:$0xff]
      %v1817 = vld [vmem:[%s3 + $0x208] sm:$0xff]
      %v1818 = vld [vmem:[%s3 + $0x210] sm:$0xff]
      %v1819 = vld [vmem:[%s3 + $0x218] sm:$0xff]
      %v1820 = vld [vmem:[%s3 + $0x220] sm:$0xff]
      %v1821 = vld [vmem:[%s3 + $0x228] sm:$0xff]
      %v1822 = vld [vmem:[%s3 + $0x230] sm:$0xff]
      %v1823 = vld [vmem:[%s3 + $0x238] sm:$0xff]
      %v1824 = vld [vmem:[%s3 + $0x240] sm:$0xff]
      %v1825 = vld [vmem:[%s3 + $0x248] sm:$0xff]
      %v1826 = vld [vmem:[%s3 + $0x250] sm:$0xff]
      %v1827 = vld [vmem:[%s3 + $0x258] sm:$0xff]
      %v1828 = vld [vmem:[%s3 + $0x260] sm:$0xff]
      %v1829 = vld [vmem:[%s3 + $0x268] sm:$0xff]
      %v1830 = vld [vmem:[%s3 + $0x270] sm:$0xff]
      %v1831 = vld [vmem:[%s3 + $0x278] sm:$0xff]
      %v1832 = vld [vmem:[%s3 + $0x280] sm:$0xff]
      %v1833 = vld [vmem:[%s3 + $0x288] sm:$0xff]
      %v1834 = vld [vmem:[%s3 + $0x290] sm:$0xff]
      %v1835 = vld [vmem:[%s3 + $0x298] sm:$0xff]
      %v1836 = vld [vmem:[%s3 + $0x2a0] sm:$0xff]
      %v1837 = vld [vmem:[%s3 + $0x2a8] sm:$0xff]
      %v1838 = vld [vmem:[%s3 + $0x2b0] sm:$0xff]
      %v1839 = vld [vmem:[%s3 + $0x2b8] sm:$0xff]
      %v1840 = vld [vmem:[%s3 + $0x2c0] sm:$0xff]
      %v1841 = vld [vmem:[%s3 + $0x2c8] sm:$0xff]
      %v1842 = vld [vmem:[%s3 + $0x2d0] sm:$0xff]
      %v1843 = vld [vmem:[%s3 + $0x2d8] sm:$0xff]
      %v1844 = vld [vmem:[%s3 + $0x2e0] sm:$0xff]
      %v1845 = vld [vmem:[%s3 + $0x2e8] sm:$0xff]
      %v1846 = vld [vmem:[%s3 + $0x2f0] sm:$0xff]
      %v1847 = vld [vmem:[%s3 + $0x2f8] sm:$0xff]
      %v1848 = vld [vmem:[%s3 + $0x300] sm:$0xff]
      %v1849 = vld [vmem:[%s3 + $0x308] sm:$0xff]
      %v1850 = vld [vmem:[%s3 + $0x310] sm:$0xff]
      %v1851 = vld [vmem:[%s3 + $0x318] sm:$0xff]
      %v1852 = vld [vmem:[%s3 + $0x320] sm:$0xff]
      %v1853 = vld [vmem:[%s3 + $0x328] sm:$0xff]
      %v1854 = vld [vmem:[%s3 + $0x330] sm:$0xff]
      %v1855 = vld [vmem:[%s3 + $0x338] sm:$0xff]
      %v1856 = vld [vmem:[%s3 + $0x340] sm:$0xff]
      %v1857 = vld [vmem:[%s3 + $0x348] sm:$0xff]
      %v1858 = vld [vmem:[%s3 + $0x350] sm:$0xff]
      %v1859 = vld [vmem:[%s3 + $0x358] sm:$0xff]
      %v1860 = vld [vmem:[%s3 + $0x360] sm:$0xff]
      %v1861 = vld [vmem:[%s3 + $0x368] sm:$0xff]
      %v1862 = vld [vmem:[%s3 + $0x370] sm:$0xff]
      %v1863 = vld [vmem:[%s3 + $0x378] sm:$0xff]
      %v1864 = vld [vmem:[%s3 + $0x380] sm:$0xff]
      %v1865 = vld [vmem:[%s3 + $0x388] sm:$0xff]
      %v1866 = vld [vmem:[%s3 + $0x390] sm:$0xff]
      %v1867 = vld [vmem:[%s3 + $0x398] sm:$0xff]
      %v1868 = vld [vmem:[%s3 + $0x3a0] sm:$0xff]
      %v1869 = vld [vmem:[%s3 + $0x3a8] sm:$0xff]
      %v1870 = vld [vmem:[%s3 + $0x3b0] sm:$0xff]
      %v1871 = vld [vmem:[%s3 + $0x3b8] sm:$0xff]
      %v1872 = vld [vmem:[%s3 + $0x3c0] sm:$0xff]
      %v1873 = vld [vmem:[%s3 + $0x3c8] sm:$0xff]
      %v1874 = vld [vmem:[%s3 + $0x3d0] sm:$0xff]
      %v1875 = vld [vmem:[%s3 + $0x3d8] sm:$0xff]
      %v1876 = vld [vmem:[%s3 + $0x3e0] sm:$0xff]
      %v1877 = vld [vmem:[%s3 + $0x3e8] sm:$0xff]
      %v1878 = vld [vmem:[%s3 + $0x3f0] sm:$0xff]
      %v1879 = vld [vmem:[%s3 + $0x3f8] sm:$0xff]
      %v1880 = vld [vmem:[%s3 + $0x400] sm:$0xff]
      %v1881 = vld [vmem:[%s3 + $0x408] sm:$0xff]
      %v1882 = vld [vmem:[%s3 + $0x410] sm:$0xff]
      %v1883 = vld [vmem:[%s3 + $0x418] sm:$0xff]
      %v1884 = vld [vmem:[%s3 + $0x420] sm:$0xff]
      %v1885 = vld [vmem:[%s3 + $0x428] sm:$0xff]
      %v1886 = vld [vmem:[%s3 + $0x430] sm:$0xff]
      %v1887 = vld [vmem:[%s3 + $0x438] sm:$0xff]
      %v1888 = vld [vmem:[%s3 + $0x440] sm:$0xff]
      %v1889 = vld [vmem:[%s3 + $0x448] sm:$0xff]
      %v1890 = vld [vmem:[%s3 + $0x450] sm:$0xff]
      %v1891 = vld [vmem:[%s3 + $0x458] sm:$0xff]
      %v1892 = vld [vmem:[%s3 + $0x460] sm:$0xff]
      %v1893 = vld [vmem:[%s3 + $0x468] sm:$0xff]
      %v1894 = vld [vmem:[%s3 + $0x470] sm:$0xff]
      %v1895 = vld [vmem:[%s3 + $0x478] sm:$0xff]
      %v1896 = vld [vmem:[%s4] sm:$0x1]
      %v1897 = vperm.slane %v1896, 0
      %1898 = vmatpush.msra.mxu0 %v1767
      %1899 = vmatpush.msra.mxu0 %v1766
      %1900 = vmatpush.msra.mxu0 %v1765
      %1901 = vmatpush.msra.mxu0 %v1764
      %1902 = vmatpush.msra.mxu0 %v1763
      %1903 = vmatpush.msra.mxu0 %v1762
      %1904 = vmatpush.msra.mxu0 %v1761
      %1905 = vmatpush.msra.mxu0 %v1760
      %1906 = vmatpush.msra.mxu0 %v1759
      %1907 = vmatpush.msra.mxu0 %v1758
      %1908 = vmatpush.msra.mxu0 %v1757
      %1909 = vmatpush.msra.mxu0 %v1756
      %1910 = vmatpush.msra.mxu0 %v1755
      %1911 = vmatpush.msra.mxu0 %v1754
      %1912 = vmatpush.msra.mxu0 %v1753
      %1913 = vmatpush.msra.mxu0 %v1752
      %1914 = vmatmul.f32.gmra.mxu0 %v1642
      %v1915 = vpop.f32.mrf.mxu0
      %v1916 = vadd.f32 %v1897, %v1915
      %1917 = vmatmul.f32.gmra.mxu0 %v1643
      %v1918 = vpop.f32.mrf.mxu0
      %v1919 = vadd.f32 %v1897, %v1918
      %1920 = vmatmul.f32.gmra.mxu0 %v1644
      %v1921 = vpop.f32.mrf.mxu0
      %v1922 = vadd.f32 %v1897, %v1921
      %1923 = vmatmul.f32.gmra.mxu0 %v1645
      %v1924 = vpop.f32.mrf.mxu0
      %v1925 = vadd.f32 %v1897, %v1924
      %1926 = vmatmul.f32.gmra.mxu0 %v1646
      %v1927 = vpop.f32.mrf.mxu0
      %v1928 = vadd.f32 %v1897, %v1927
      %1929 = vmatmul.f32.gmra.mxu0 %v1647
      %v1930 = vpop.f32.mrf.mxu0
      %v1931 = vadd.f32 %v1897, %v1930
      %1932 = vmatmul.f32.gmra.mxu0 %v1648
      %v1933 = vpop.f32.mrf.mxu0
      %v1934 = vadd.f32 %v1897, %v1933
      %1935 = vmatmul.f32.gmra.mxu0 %v1649
      %v1936 = vpop.f32.mrf.mxu0
      %v1937 = vadd.f32 %v1897, %v1936
      %1938 = vdwg.mxu0
      %1939 = vmatpush.msra.mxu0 %v1783
      %1940 = vmatpush.msra.mxu0 %v1782
      %1941 = vmatpush.msra.mxu0 %v1781
      %1942 = vmatpush.msra.mxu0 %v1780
      %1943 = vmatpush.msra.mxu0 %v1779
      %1944 = vmatpush.msra.mxu0 %v1778
      %1945 = vmatpush.msra.mxu0 %v1777
      %1946 = vmatpush.msra.mxu0 %v1776
      %1947 = vmatpush.msra.mxu0 %v1775
      %1948 = vmatpush.msra.mxu0 %v1774
      %1949 = vmatpush.msra.mxu0 %v1773
      %1950 = vmatpush.msra.mxu0 %v1772
      %1951 = vmatpush.msra.mxu0 %v1771
      %1952 = vmatpush.msra.mxu0 %v1770
      %1953 = vmatpush.msra.mxu0 %v1769
      %1954 = vmatpush.msra.mxu0 %v1768
      %1955 = vmatmul.f32.gmra.mxu0 %v1679
      %v1956 = vpop.f32.mrf.mxu0
      %v1957 = vadd.f32 %v1916, %v1956
      %1958 = vmatmul.f32.gmra.mxu0 %v1682
      %v1959 = vpop.f32.mrf.mxu0
      %v1960 = vadd.f32 %v1919, %v1959
      %1961 = vmatmul.f32.gmra.mxu0 %v1685
      %v1962 = vpop.f32.mrf.mxu0
      %v1963 = vadd.f32 %v1922, %v1962
      %1964 = vmatmul.f32.gmra.mxu0 %v1688
      %v1965 = vpop.f32.mrf.mxu0
      %v1966 = vadd.f32 %v1925, %v1965
      %1967 = vmatmul.f32.gmra.mxu0 %v1691
      %v1968 = vpop.f32.mrf.mxu0
      %v1969 = vadd.f32 %v1928, %v1968
      %1970 = vmatmul.f32.gmra.mxu0 %v1694
      %v1971 = vpop.f32.mrf.mxu0
      %v1972 = vadd.f32 %v1931, %v1971
      %1973 = vmatmul.f32.gmra.mxu0 %v1697
      %v1974 = vpop.f32.mrf.mxu0
      %v1975 = vadd.f32 %v1934, %v1974
      %1976 = vmatmul.f32.gmra.mxu0 %v1700
      %v1977 = vpop.f32.mrf.mxu0
      %v1978 = vadd.f32 %v1937, %v1977
      %1979 = vdwg.mxu0
      %1980 = vmatpush.msra.mxu0 %v1799
      %1981 = vmatpush.msra.mxu0 %v1798
      %1982 = vmatpush.msra.mxu0 %v1797
      %1983 = vmatpush.msra.mxu0 %v1796
      %1984 = vmatpush.msra.mxu0 %v1795
      %1985 = vmatpush.msra.mxu0 %v1794
      %1986 = vmatpush.msra.mxu0 %v1793
      %1987 = vmatpush.msra.mxu0 %v1792
      %1988 = vmatpush.msra.mxu0 %v1791
      %1989 = vmatpush.msra.mxu0 %v1790
      %1990 = vmatpush.msra.mxu0 %v1789
      %1991 = vmatpush.msra.mxu0 %v1788
      %1992 = vmatpush.msra.mxu0 %v1787
      %1993 = vmatpush.msra.mxu0 %v1786
      %1994 = vmatpush.msra.mxu0 %v1785
      %1995 = vmatpush.msra.mxu0 %v1784
      %1996 = vmatmul.f32.gmra.mxu0 %v1712
      %v1997 = vpop.f32.mrf.mxu0
      %v1998 = vadd.f32 %v1957, %v1997
      %1999 = vmatmul.f32.gmra.mxu0 %v1715
      %v2000 = vpop.f32.mrf.mxu0
      %v2001 = vadd.f32 %v1960, %v2000
      %2002 = vmatmul.f32.gmra.mxu0 %v1718
      %v2003 = vpop.f32.mrf.mxu0
      %v2004 = vadd.f32 %v1963, %v2003
      %2005 = vmatmul.f32.gmra.mxu0 %v1721
      %v2006 = vpop.f32.mrf.mxu0
      %v2007 = vadd.f32 %v1966, %v2006
      %2008 = vmatmul.f32.gmra.mxu0 %v1724
      %v2009 = vpop.f32.mrf.mxu0
      %v2010 = vadd.f32 %v1969, %v2009
      %2011 = vmatmul.f32.gmra.mxu0 %v1727
      %v2012 = vpop.f32.mrf.mxu0
      %v2013 = vadd.f32 %v1972, %v2012
      %2014 = vmatmul.f32.gmra.mxu0 %v1730
      %v2015 = vpop.f32.mrf.mxu0
      %v2016 = vadd.f32 %v1975, %v2015
      %2017 = vmatmul.f32.gmra.mxu0 %v1733
      %v2018 = vpop.f32.mrf.mxu0
      %v2019 = vadd.f32 %v1978, %v2018
      %2020 = vdwg.mxu0
      %2021 = vmatpush.msra.mxu0 %v1815
      %2022 = vmatpush.msra.mxu0 %v1814
      %2023 = vmatpush.msra.mxu0 %v1813
      %2024 = vmatpush.msra.mxu0 %v1812
      %2025 = vmatpush.msra.mxu0 %v1811
      %2026 = vmatpush.msra.mxu0 %v1810
      %2027 = vmatpush.msra.mxu0 %v1809
      %2028 = vmatpush.msra.mxu0 %v1808
      %2029 = vmatpush.msra.mxu0 %v1807
      %2030 = vmatpush.msra.mxu0 %v1806
      %2031 = vmatpush.msra.mxu0 %v1805
      %2032 = vmatpush.msra.mxu0 %v1804
      %2033 = vmatpush.msra.mxu0 %v1803
      %2034 = vmatpush.msra.mxu0 %v1802
      %2035 = vmatpush.msra.mxu0 %v1801
      %2036 = vmatpush.msra.mxu0 %v1800
      %2037 = vmatmul.f32.gmra.mxu0 %v1643
      %v2038 = vpop.f32.mrf.mxu0
      %v2039 = vadd.f32 %v1998, %v2038
      %2040 = vmatmul.f32.gmra.mxu0 %v1644
      %v2041 = vpop.f32.mrf.mxu0
      %v2042 = vadd.f32 %v2001, %v2041
      %2043 = vmatmul.f32.gmra.mxu0 %v1645
      %v2044 = vpop.f32.mrf.mxu0
      %v2045 = vadd.f32 %v2004, %v2044
      %2046 = vmatmul.f32.gmra.mxu0 %v1646
      %v2047 = vpop.f32.mrf.mxu0
      %v2048 = vadd.f32 %v2007, %v2047
      %2049 = vmatmul.f32.gmra.mxu0 %v1647
      %v2050 = vpop.f32.mrf.mxu0
      %v2051 = vadd.f32 %v2010, %v2050
      %2052 = vmatmul.f32.gmra.mxu0 %v1648
      %v2053 = vpop.f32.mrf.mxu0
      %v2054 = vadd.f32 %v2013, %v2053
      %2055 = vmatmul.f32.gmra.mxu0 %v1649
      %v2056 = vpop.f32.mrf.mxu0
      %v2057 = vadd.f32 %v2016, %v2056
      %2058 = vmatmul.f32.gmra.mxu0 %v1650
      %v2059 = vpop.f32.mrf.mxu0
      %v2060 = vadd.f32 %v2019, %v2059
      %2061 = vdwg.mxu0
      %2062 = vmatpush.msra.mxu0 %v1831
      %2063 = vmatpush.msra.mxu0 %v1830
      %2064 = vmatpush.msra.mxu0 %v1829
      %2065 = vmatpush.msra.mxu0 %v1828
      %2066 = vmatpush.msra.mxu0 %v1827
      %2067 = vmatpush.msra.mxu0 %v1826
      %2068 = vmatpush.msra.mxu0 %v1825
      %2069 = vmatpush.msra.mxu0 %v1824
      %2070 = vmatpush.msra.mxu0 %v1823
      %2071 = vmatpush.msra.mxu0 %v1822
      %2072 = vmatpush.msra.mxu0 %v1821
      %2073 = vmatpush.msra.mxu0 %v1820
      %2074 = vmatpush.msra.mxu0 %v1819
      %2075 = vmatpush.msra.mxu0 %v1818
      %2076 = vmatpush.msra.mxu0 %v1817
      %2077 = vmatpush.msra.mxu0 %v1816
      %2078 = vmatmul.f32.gmra.mxu0 %v1682
      %v2079 = vpop.f32.mrf.mxu0
      %v2080 = vadd.f32 %v2039, %v2079
      %2081 = vmatmul.f32.gmra.mxu0 %v1685
      %v2082 = vpop.f32.mrf.mxu0
      %v2083 = vadd.f32 %v2042, %v2082
      %2084 = vmatmul.f32.gmra.mxu0 %v1688
      %v2085 = vpop.f32.mrf.mxu0
      %v2086 = vadd.f32 %v2045, %v2085
      %2087 = vmatmul.f32.gmra.mxu0 %v1691
      %v2088 = vpop.f32.mrf.mxu0
      %v2089 = vadd.f32 %v2048, %v2088
      %2090 = vmatmul.f32.gmra.mxu0 %v1694
      %v2091 = vpop.f32.mrf.mxu0
      %v2092 = vadd.f32 %v2051, %v2091
      %2093 = vmatmul.f32.gmra.mxu0 %v1697
      %v2094 = vpop.f32.mrf.mxu0
      %v2095 = vadd.f32 %v2054, %v2094
      %2096 = vmatmul.f32.gmra.mxu0 %v1700
      %v2097 = vpop.f32.mrf.mxu0
      %v2098 = vadd.f32 %v2057, %v2097
      %2099 = vmatmul.f32.gmra.mxu0 %v1746
      %v2100 = vpop.f32.mrf.mxu0
      %v2101 = vadd.f32 %v2060, %v2100
      %2102 = vdwg.mxu0
      %2103 = vmatpush.msra.mxu0 %v1847
      %2104 = vmatpush.msra.mxu0 %v1846
      %2105 = vmatpush.msra.mxu0 %v1845
      %2106 = vmatpush.msra.mxu0 %v1844
      %2107 = vmatpush.msra.mxu0 %v1843
      %2108 = vmatpush.msra.mxu0 %v1842
      %2109 = vmatpush.msra.mxu0 %v1841
      %2110 = vmatpush.msra.mxu0 %v1840
      %2111 = vmatpush.msra.mxu0 %v1839
      %2112 = vmatpush.msra.mxu0 %v1838
      %2113 = vmatpush.msra.mxu0 %v1837
      %2114 = vmatpush.msra.mxu0 %v1836
      %2115 = vmatpush.msra.mxu0 %v1835
      %2116 = vmatpush.msra.mxu0 %v1834
      %2117 = vmatpush.msra.mxu0 %v1833
      %2118 = vmatpush.msra.mxu0 %v1832
      %2119 = vmatmul.f32.gmra.mxu0 %v1715
      %v2120 = vpop.f32.mrf.mxu0
      %v2121 = vadd.f32 %v2080, %v2120
      %2122 = vmatmul.f32.gmra.mxu0 %v1718
      %v2123 = vpop.f32.mrf.mxu0
      %v2124 = vadd.f32 %v2083, %v2123
      %2125 = vmatmul.f32.gmra.mxu0 %v1721
      %v2126 = vpop.f32.mrf.mxu0
      %v2127 = vadd.f32 %v2086, %v2126
      %2128 = vmatmul.f32.gmra.mxu0 %v1724
      %v2129 = vpop.f32.mrf.mxu0
      %v2130 = vadd.f32 %v2089, %v2129
      %2131 = vmatmul.f32.gmra.mxu0 %v1727
      %v2132 = vpop.f32.mrf.mxu0
      %v2133 = vadd.f32 %v2092, %v2132
      %2134 = vmatmul.f32.gmra.mxu0 %v1730
      %v2135 = vpop.f32.mrf.mxu0
      %v2136 = vadd.f32 %v2095, %v2135
      %2137 = vmatmul.f32.gmra.mxu0 %v1733
      %v2138 = vpop.f32.mrf.mxu0
      %v2139 = vadd.f32 %v2098, %v2138
      %2140 = vmatmul.f32.gmra.mxu0 %v1750
      %v2141 = vpop.f32.mrf.mxu0
      %v2142 = vadd.f32 %v2101, %v2141
      %2143 = vdwg.mxu0
      %2144 = vmatpush.msra.mxu0 %v1863
      %2145 = vmatpush.msra.mxu0 %v1862
      %2146 = vmatpush.msra.mxu0 %v1861
      %2147 = vmatpush.msra.mxu0 %v1860
      %2148 = vmatpush.msra.mxu0 %v1859
      %2149 = vmatpush.msra.mxu0 %v1858
      %2150 = vmatpush.msra.mxu0 %v1857
      %2151 = vmatpush.msra.mxu0 %v1856
      %2152 = vmatpush.msra.mxu0 %v1855
      %2153 = vmatpush.msra.mxu0 %v1854
      %2154 = vmatpush.msra.mxu0 %v1853
      %2155 = vmatpush.msra.mxu0 %v1852
      %2156 = vmatpush.msra.mxu0 %v1851
      %2157 = vmatpush.msra.mxu0 %v1850
      %2158 = vmatpush.msra.mxu0 %v1849
      %2159 = vmatpush.msra.mxu0 %v1848
      %2160 = vmatmul.f32.gmra.mxu0 %v1644
      %v2161 = vpop.f32.mrf.mxu0
      %v2162 = vadd.f32 %v2121, %v2161
      %2163 = vmatmul.f32.gmra.mxu0 %v1645
      %v2164 = vpop.f32.mrf.mxu0
      %v2165 = vadd.f32 %v2124, %v2164
      %2166 = vmatmul.f32.gmra.mxu0 %v1646
      %v2167 = vpop.f32.mrf.mxu0
      %v2168 = vadd.f32 %v2127, %v2167
      %2169 = vmatmul.f32.gmra.mxu0 %v1647
      %v2170 = vpop.f32.mrf.mxu0
      %v2171 = vadd.f32 %v2130, %v2170
      %2172 = vmatmul.f32.gmra.mxu0 %v1648
      %v2173 = vpop.f32.mrf.mxu0
      %v2174 = vadd.f32 %v2133, %v2173
      %2175 = vmatmul.f32.gmra.mxu0 %v1649
      %v2176 = vpop.f32.mrf.mxu0
      %v2177 = vadd.f32 %v2136, %v2176
      %2178 = vmatmul.f32.gmra.mxu0 %v1650
      %v2179 = vpop.f32.mrf.mxu0
      %v2180 = vadd.f32 %v2139, %v2179
      %2181 = vmatmul.f32.gmra.mxu0 %v1642
      %v2182 = vpop.f32.mrf.mxu0
      %v2183 = vadd.f32 %v2142, %v2182
      %2184 = vdwg.mxu0
      %2185 = vmatpush.msra.mxu0 %v1879
      %2186 = vmatpush.msra.mxu0 %v1878
      %2187 = vmatpush.msra.mxu0 %v1877
      %2188 = vmatpush.msra.mxu0 %v1876
      %2189 = vmatpush.msra.mxu0 %v1875
      %2190 = vmatpush.msra.mxu0 %v1874
      %2191 = vmatpush.msra.mxu0 %v1873
      %2192 = vmatpush.msra.mxu0 %v1872
      %2193 = vmatpush.msra.mxu0 %v1871
      %2194 = vmatpush.msra.mxu0 %v1870
      %2195 = vmatpush.msra.mxu0 %v1869
      %2196 = vmatpush.msra.mxu0 %v1868
      %2197 = vmatpush.msra.mxu0 %v1867
      %2198 = vmatpush.msra.mxu0 %v1866
      %2199 = vmatpush.msra.mxu0 %v1865
      %2200 = vmatpush.msra.mxu0 %v1864
      %2201 = vmatmul.f32.gmra.mxu0 %v1685
      %v2202 = vpop.f32.mrf.mxu0
      %v2203 = vadd.f32 %v2162, %v2202
      %2204 = vmatmul.f32.gmra.mxu0 %v1688
      %v2205 = vpop.f32.mrf.mxu0
      %v2206 = vadd.f32 %v2165, %v2205
      %2207 = vmatmul.f32.gmra.mxu0 %v1691
      %v2208 = vpop.f32.mrf.mxu0
      %v2209 = vadd.f32 %v2168, %v2208
      %2210 = vmatmul.f32.gmra.mxu0 %v1694
      %v2211 = vpop.f32.mrf.mxu0
      %v2212 = vadd.f32 %v2171, %v2211
      %2213 = vmatmul.f32.gmra.mxu0 %v1697
      %v2214 = vpop.f32.mrf.mxu0
      %v2215 = vadd.f32 %v2174, %v2214
      %2216 = vmatmul.f32.gmra.mxu0 %v1700
      %v2217 = vpop.f32.mrf.mxu0
      %v2218 = vadd.f32 %v2177, %v2217
      %2219 = vmatmul.f32.gmra.mxu0 %v1746
      %v2220 = vpop.f32.mrf.mxu0
      %v2221 = vadd.f32 %v2180, %v2220
      %2222 = vmatmul.f32.gmra.mxu0 %v1679
      %v2223 = vpop.f32.mrf.mxu0
      %v2224 = vadd.f32 %v2183, %v2223
      %2225 = vdwg.mxu0
      %2226 = vmatpush.msra.mxu0 %v1895
      %2227 = vmatpush.msra.mxu0 %v1894
      %2228 = vmatpush.msra.mxu0 %v1893
      %2229 = vmatpush.msra.mxu0 %v1892
      %2230 = vmatpush.msra.mxu0 %v1891
      %2231 = vmatpush.msra.mxu0 %v1890
      %2232 = vmatpush.msra.mxu0 %v1889
      %2233 = vmatpush.msra.mxu0 %v1888
      %2234 = vmatpush.msra.mxu0 %v1887
      %2235 = vmatpush.msra.mxu0 %v1886
      %2236 = vmatpush.msra.mxu0 %v1885
      %2237 = vmatpush.msra.mxu0 %v1884
      %2238 = vmatpush.msra.mxu0 %v1883
      %2239 = vmatpush.msra.mxu0 %v1882
      %2240 = vmatpush.msra.mxu0 %v1881
      %2241 = vmatpush.msra.mxu0 %v1880
      %2242 = vmatmul.f32.gmra.mxu0 %v1718
      %v2243 = vpop.f32.mrf.mxu0
      %v2244 = vadd.f32 %v2203, %v2243
      %2245 = vmatmul.f32.gmra.mxu0 %v1721
      %v2246 = vpop.f32.mrf.mxu0
      %v2247 = vadd.f32 %v2206, %v2246
      %2248 = vmatmul.f32.gmra.mxu0 %v1724
      %v2249 = vpop.f32.mrf.mxu0
      %v2250 = vadd.f32 %v2209, %v2249
      %2251 = vmatmul.f32.gmra.mxu0 %v1727
      %v2252 = vpop.f32.mrf.mxu0
      %v2253 = vadd.f32 %v2212, %v2252
      %2254 = vmatmul.f32.gmra.mxu0 %v1730
      %v2255 = vpop.f32.mrf.mxu0
      %v2256 = vadd.f32 %v2215, %v2255
      %2257 = vmatmul.f32.gmra.mxu0 %v1733
      %v2258 = vpop.f32.mrf.mxu0
      %v2259 = vadd.f32 %v2218, %v2258
      %2260 = vmatmul.f32.gmra.mxu0 %v1750
      %v2261 = vpop.f32.mrf.mxu0
      %v2262 = vadd.f32 %v2221, %v2261
      %2263 = vmatmul.f32.gmra.mxu0 %v1712
      %v2264 = vpop.f32.mrf.mxu0
      %v2265 = vadd.f32 %v2224, %v2264
      %2266 = vdwg.mxu0
      %v2267 = vmax.f32 %v2244, 0.0
      %v2268 = vmax.f32 %v2247, 0.0
      %v2269 = vmax.f32 %v2250, 0.0
      %v2270 = vmax.f32 %v2253, 0.0
      %v2271 = vmax.f32 %v2256, 0.0
      %v2272 = vmax.f32 %v2259, 0.0
      %v2273 = vmax.f32 %v2262, 0.0
      %v2274 = vmax.f32 %v2265, 0.0
      %v2275 = vld [vmem:[%s4 + $0x1] sm:$0x1]
      %v2276 = vperm.slane %v2275, 0
      %v2277 = vmul.f32 %v2267, %v2276
      %v2278 = vmul.f32 %v2268, %v2276
      %v2279 = vmul.f32 %v2269, %v2276
      %v2280 = vmul.f32 %v2270, %v2276
      %v2281 = vmul.f32 %v2271, %v2276
      %v2282 = vmul.f32 %v2272, %v2276
      %v2283 = vmul.f32 %v2273, %v2276
      %v2284 = vmul.f32 %v2274, %v2276
      %v2285 = vld [vmem:[%s4 + $0x2] sm:$0x1]
      %v2286 = vperm.slane %v2285, 0
      %v2287 = vadd.f32 %v2277, %v2286
      %v2288 = vadd.f32 %v2278, %v2286
      %v2289 = vadd.f32 %v2279, %v2286
      %v2290 = vadd.f32 %v2280, %v2286
      %v2291 = vadd.f32 %v2281, %v2286
      %v2292 = vadd.f32 %v2282, %v2286
      %v2293 = vadd.f32 %v2283, %v2286
      %v2294 = vadd.f32 %v2284, %v2286
      %v2303 = vrot.slane %v2287, 2
      %v2304 = vrot.slane %v2287, 4
      %v2305 = vrot.slane %v2287, 6
      %v2306 = vrot.slane %v2288, 2
      %v2307 = vrot.slane %v2288, 4
      %v2308 = vrot.slane %v2288, 6
      %v2309 = vrot.slane %v2289, 2
      %v2310 = vrot.slane %v2289, 4
      %v2311 = vrot.slane %v2289, 6
      %v2312 = vrot.slane %v2290, 2
      %v2313 = vrot.slane %v2290, 4
      %v2314 = vrot.slane %v2290, 6
      %v2315 = vrot.slane %v2291, 2
      %v2316 = vrot.slane %v2291, 4
      %v2317 = vrot.slane %v2291, 6
      %v2318 = vrot.slane %v2292, 2
      %v2319 = vrot.slane %v2292, 4
      %v2320 = vrot.slane %v2292, 6
      %v2321 = vrot.slane %v2293, 2
      %v2322 = vrot.slane %v2293, 4
      %v2323 = vrot.slane %v2293, 6
      %v2324 = vrot.slane %v2294, 2
      %v2325 = vrot.slane %v2294, 4
      %v2326 = vrot.slane %v2294, 6
      %v2351 = vrot.slane %v2287, 7
      %v2352 = vrot.slane %v2351, 2
      %v2353 = vrot.slane %v2303, 7
      %v2354 = vrot.slane %v2353, 2
      %v2355 = vrot.slane %v2304, 7
      %v2356 = vrot.slane %v2355, 2
      %v2357 = vrot.slane %v2305, 7
      %v2358 = vrot.slane %v2357, 2
      %v2359 = vrot.slane %v2288, 7
      %v2360 = vrot.slane %v2359, 2
      %v2361 = vrot.slane %v2306, 7
      %v2362 = vrot.slane %v2361, 2
      %v2363 = vrot.slane %v2307, 7
      %v2364 = vrot.slane %v2363, 2
      %v2365 = vrot.slane %v2308, 7
      %v2366 = vrot.slane %v2365, 2
      %v2367 = vrot.slane %v2289, 7
      %v2368 = vrot.slane %v2367, 2
      %v2369 = vrot.slane %v2309, 7
      %v2370 = vrot.slane %v2369, 2
      %v2371 = vrot.slane %v2310, 7
      %v2372 = vrot.slane %v2371, 2
      %v2373 = vrot.slane %v2311, 7
      %v2374 = vrot.slane %v2373, 2
      %v2375 = vrot.slane %v2290, 7
      %v2376 = vrot.slane %v2375, 2
      %v2377 = vrot.slane %v2312, 7
      %v2378 = vrot.slane %v2377, 2
      %v2379 = vrot.slane %v2313, 7
      %v2380 = vrot.slane %v2379, 2
      %v2381 = vrot.slane %v2314, 7
      %v2382 = vrot.slane %v2381, 2
      %v2383 = vrot.slane %v2291, 7
      %v2384 = vrot.slane %v2383, 2
      %v2385 = vrot.slane %v2315, 7
      %v2386 = vrot.slane %v2385, 2
      %v2387 = vrot.slane %v2316, 7
      %v2388 = vrot.slane %v2387, 2
      %v2389 = vrot.slane %v2317, 7
      %v2390 = vrot.slane %v2389, 2
      %v2391 = vrot.slane %v2292, 7
      %v2392 = vrot.slane %v2391, 2
      %v2393 = vrot.slane %v2318, 7
      %v2394 = vrot.slane %v2393, 2
      %v2395 = vrot.slane %v2319, 7
      %v2396 = vrot.slane %v2395, 2
      %v2397 = vrot.slane %v2320, 7
      %v2398 = vrot.slane %v2397, 2
      %v2399 = vrot.slane %v2293, 7
      %v2400 = vrot.slane %v2399, 2
      %v2401 = vrot.slane %v2321, 7
      %v2402 = vrot.slane %v2401, 2
      %v2403 = vrot.slane %v2322, 7
      %v2404 = vrot.slane %v2403, 2
      %v2405 = vrot.slane %v2323, 7
      %v2406 = vrot.slane %v2405, 2
      %v2407 = vrot.slane %v2294, 7
      %v2408 = vrot.slane %v2407, 2
      %v2409 = vrot.slane %v2324, 7
      %v2410 = vrot.slane %v2409, 2
      %v2411 = vrot.slane %v2325, 7
      %v2412 = vrot.slane %v2411, 2
      %v2413 = vrot.slane %v2326, 7
      %v2414 = vrot.slane %v2413, 2
      %v2447 = vmax.f32 %v2287, %v2352
      %v2448 = vmax.f32 %v2303, %v2354
      %v2449 = vmax.f32 %v2304, %v2356
      %v2450 = vmax.f32 %v2305, %v2358
      %v2451 = vmax.f32 %v2288, %v2360
      %v2452 = vmax.f32 %v2306, %v2362
      %v2453 = vmax.f32 %v2307, %v2364
      %v2454 = vmax.f32 %v2308, %v2366
      %v2455 = vmax.f32 %v2289, %v2368
      %v2456 = vmax.f32 %v2309, %v2370
      %v2457 = vmax.f32 %v2310, %v2372
      %v2458 = vmax.f32 %v2311, %v2374
      %v2459 = vmax.f32 %v2290, %v2376
      %v2460 = vmax.f32 %v2312, %v2378
      %v2461 = vmax.f32 %v2313, %v2380
      %v2462 = vmax.f32 %v2314, %v2382
      %v2463 = vmax.f32 %v2291, %v2384
      %v2464 = vmax.f32 %v2315, %v2386
      %v2465 = vmax.f32 %v2316, %v2388
      %v2466 = vmax.f32 %v2317, %v2390
      %v2467 = vmax.f32 %v2292, %v2392
      %v2468 = vmax.f32 %v2318, %v2394
      %v2469 = vmax.f32 %v2319, %v2396
      %v2470 = vmax.f32 %v2320, %v2398
      %v2471 = vmax.f32 %v2293, %v2400
      %v2472 = vmax.f32 %v2321, %v2402
      %v2473 = vmax.f32 %v2322, %v2404
      %v2474 = vmax.f32 %v2323, %v2406
      %v2475 = vmax.f32 %v2294, %v2408
      %v2476 = vmax.f32 %v2324, %v2410
      %v2477 = vmax.f32 %v2325, %v2412
      %v2478 = vmax.f32 %v2326, %v2414
      %v2479 = vmax.f32 %v2447, %v2451
      %v2480 = vmax.f32 %v2448, %v2452
      %v2481 = vmax.f32 %v2449, %v2453
      %v2482 = vmax.f32 %v2450, %v2454
      %v2483 = vmax.f32 %v2455, %v2459
      %v2484 = vmax.f32 %v2456, %v2460
      %v2485 = vmax.f32 %v2457, %v2461
      %v2486 = vmax.f32 %v2458, %v2462
      %v2487 = vmax.f32 %v2463, %v2467
      %v2488 = vmax.f32 %v2464, %v2468
      %v2489 = vmax.f32 %v2465, %v2469
      %v2490 = vmax.f32 %v2466, %v2470
      %v2491 = vmax.f32 %v2471, %v2475
      %v2492 = vmax.f32 %v2472, %v2476
      %v2493 = vmax.f32 %v2473, %v2477
      %v2494 = vmax.f32 %v2474, %v2478
      %v2511 = vperm.slane %v2479, 0
      %v2512 = vperm.slane %v2480, 0
      %v2513 = vperm.slane %v2481, 0
      %v2514 = vperm.slane %v2482, 0
      %v2515 = vperm.slane %v2483, 0
      %v2516 = vperm.slane %v2484, 0
      %v2517 = vperm.slane %v2485, 0
      %v2518 = vperm.slane %v2486, 0
      %v2519 = vperm.slane %v2487, 0
      %v2520 = vperm.slane %v2488, 0
      %v2521 = vperm.slane %v2489, 0
      %v2522 = vperm.slane %v2490, 0
      %v2523 = vperm.slane %v2491, 0
      %v2524 = vperm.slane %v2492, 0
      %v2525 = vperm.slane %v2493, 0
      %v2526 = vperm.slane %v2494, 0
      %v2527 = vsel %vm1560, %v2512, %v2511
      %v2528 = vsel %vm1562, %v2513, %v2527
      %v2529 = vsel %vm1564, %v2514, %v2528
      %v2530 = vsel %vm1560, %v2516, %v2515
      %v2531 = vsel %vm1562, %v2517, %v2530
      %v2532 = vsel %vm1564, %v2518, %v2531
      %v2533 = vsel %vm1560, %v2520, %v2519
      %v2534 = vsel %vm1562, %v2521, %v2533
      %v2535 = vsel %vm1564, %v2522, %v2534
      %v2536 = vsel %vm1560, %v2524, %v2523
      %v2537 = vsel %vm1562, %v2525, %v2536
      %v2538 = vsel %vm1564, %v2526, %v2537
      %v2539 = vrot.slane 0.0, 5
      %v2540 = vrot.slane %v2529, 5
      %v2541 = vrot.slane %v2532, 5
      %v2542 = vrot.slane %v2535, 5
      %v2543 = vrot.slane %v2538, 5
      %vm2549 = vcmask 1042432
      %v2550 = vsel %vm2549, 0.0, %v2539
      %v2551 = vsel %vm2549, 0.0, %v2540
      %v2552 = vsel %vm2549, 0.0, %v2541
      %v2553 = vsel %vm2549, 0.0, %v2542
      %v2554 = vsel %vm2549, 0.0, %v2543
      %v2555 = vsel %vm1676, %v2550, 0.0
      %v2556 = vsel %vm1676, %v2551, 0.0
      %v2557 = vsel %vm1676, %v2552, 0.0
      %v2558 = vsel %vm1676, %v2553, 0.0
      %v2559 = vsel %vm1676, %v2554, 0.0
      %v2560 = vld [vmem:[%s5] sm:$0x1]
      %v2561 = vperm.slane %v2560, 0
      %v2562 = vmul.f32 %v2555, %v2561
      %v2563 = vmul.f32 %v2556, %v2561
      %v2564 = vadd.f32 %v2562, 0.0
      %v2565 = vadd.f32 %v2563, 0.0
      %v2566 = vld [vmem:[%s5 + $0x1] sm:$0x1]
      %v2567 = vperm.slane %v2566, 0
      %v2568 = vmul.f32 %v2555, %v2567
      %v2569 = vmul.f32 %v2556, %v2567
      %v2572 = vrot.slane %v2568, 1
      %v2573 = vrot.slane %v2569, 1
      %v2576 = vadd.f32 %v2564, %v2572
      %v2577 = vadd.f32 %v2565, %v2573
      %v2578 = vld [vmem:[%s5 + $0x2] sm:$0x1]
      %v2579 = vperm.slane %v2578, 0
      %v2580 = vmul.f32 %v2555, %v2579
      %v2581 = vmul.f32 %v2556, %v2579
      %v2584 = vrot.slane %v2580, 2
      %v2585 = vrot.slane %v2581, 2
      %v2588 = vadd.f32 %v2576, %v2584
      %v2589 = vadd.f32 %v2577, %v2585
      %v2590 = vld [vmem:[%s5 + $0x3] sm:$0x1]
      %v2591 = vperm.slane %v2590, 0
      %v2592 = vmul.f32 %v2555, %v2591
      %v2593 = vmul.f32 %v2556, %v2591
      %v2596 = vrot.slane %v2592, 3
      %v2597 = vrot.slane %v2593, 3
      %v2600 = vadd.f32 %v2588, %v2596
      %v2601 = vadd.f32 %v2589, %v2597
      %v2602 = vld [vmem:[%s5 + $0x4] sm:$0x1]
      %v2603 = vperm.slane %v2602, 0
      %v2604 = vmul.f32 %v2555, %v2603
      %v2605 = vmul.f32 %v2556, %v2603
      %v2608 = vrot.slane %v2604, 4
      %v2609 = vrot.slane %v2605, 4
      %v2612 = vadd.f32 %v2600, %v2608
      %v2613 = vadd.f32 %v2601, %v2609
      %v2614 = vld [vmem:[%s5 + $0x5] sm:$0x1]
      %v2615 = vperm.slane %v2614, 0
      %v2616 = vmul.f32 %v2555, %v2615
      %v2617 = vmul.f32 %v2615, 0.0
      %v2618 = vmul.f32 %v2556, %v2615
      %v2622 = vrot.slane %v2616, 5
      %v2623 = vrot.slane %v2617, 5
      %v2624 = vsel %vm2549, %v2622, %v2623
      %v2625 = vrot.slane %v2618, 5
      %v2626 = vsel %vm2549, %v2625, %v2623
      %v2629 = vadd.f32 %v2612, %v2624
      %v2630 = vadd.f32 %v2613, %v2626
      %v2631 = vld [vmem:[%s5 + $0x6] sm:$0x1]
      %v2632 = vperm.slane %v2631, 0
      %v2633 = vmul.f32 %v2555, %v2632
      %v2634 = vmul.f32 %v2632, 0.0
      %v2635 = vmul.f32 %v2556, %v2632
      %vm2639 = vcmask 1041408
      %v2640 = vrot.slane %v2633, 6
      %v2641 = vrot.slane %v2634, 6
      %v2642 = vsel %vm2639, %v2640, %v2641
      %v2643 = vrot.slane %v2635, 6
      %v2644 = vsel %vm2639, %v2643, %v2641
      %v2647 = vadd.f32 %v2629, %v2642
      %v2648 = vadd.f32 %v2630, %v2644
      %v2649 = vld [vmem:[%s5 + $0x7] sm:$0x1]
      %v2650 = vperm.slane %v2649, 0
      %v2651 = vmul.f32 %v2555, %v2650
      %v2652 = vmul.f32 %v2556, %v2650
      %v2653 = vmul.f32 %v2557, %v2650
      %v2654 = vadd.f32 %v2647, %v2651
      %v2655 = vadd.f32 %v2647, %v2652
      %v2656 = vadd.f32 %v2648, %v2653
      %v2657 = vld [vmem:[%s5 + $0x8] sm:$0x1]
      %v2658 = vperm.slane %v2657, 0
      %v2659 = vmul.f32 %v2555, %v2658
      %v2660 = vmul.f32 %v2556, %v2658
      %v2661 = vmul.f32 %v2557, %v2658
      %v2665 = vrot.slane %v2659, 1
      %v2666 = vrot.slane %v2660, 1
      %v2667 = vrot.slane %v2661, 1
      %v2671 = vadd.f32 %v2654, %v2665
      %v2672 = vadd.f32 %v2655, %v2666
      %v2673 = vadd.f32 %v2656, %v2667
      %v2674 = vld [vmem:[%s5 + $0x9] sm:$0x1]
      %v2675 = vperm.slane %v2674, 0
      %v2676 = vmul.f32 %v2555, %v2675
      %v2677 = vmul.f32 %v2556, %v2675
      %v2678 = vmul.f32 %v2557, %v2675
      %v2682 = vrot.slane %v2676, 2
      %v2683 = vrot.slane %v2677, 2
      %v2684 = vrot.slane %v2678, 2
      %v2688 = vadd.f32 %v2671, %v2682
      %v2689 = vadd.f32 %v2672, %v2683
      %v2690 = vadd.f32 %v2673, %v2684
      %v2691 = vld [vmem:[%s5 + $0xa] sm:$0x1]
      %v2692 = vperm.slane %v2691, 0
      %v2693 = vmul.f32 %v2555, %v2692
      %v2694 = vmul.f32 %v2556, %v2692
      %v2695 = vmul.f32 %v2557, %v2692
      %v2699 = vrot.slane %v2693, 3
      %v2700 = vrot.slane %v2694, 3
      %v2701 = vrot.slane %v2695, 3
      %v2705 = vadd.f32 %v2688, %v2699
      %v2706 = vadd.f32 %v2689, %v2700
      %v2707 = vadd.f32 %v2690, %v2701
      %v2708 = vld [vmem:[%s5 + $0xb] sm:$0x1]
      %v2709 = vperm.slane %v2708, 0
      %v2710 = vmul.f32 %v2555, %v2709
      %v2711 = vmul.f32 %v2556, %v2709
      %v2712 = vmul.f32 %v2557, %v2709
      %v2716 = vrot.slane %v2710, 4
      %v2717 = vrot.slane %v2711, 4
      %v2718 = vrot.slane %v2712, 4
      %v2722 = vadd.f32 %v2705, %v2716
      %v2723 = vadd.f32 %v2706, %v2717
      %v2724 = vadd.f32 %v2707, %v2718
      %v2725 = vld [vmem:[%s5 + $0xc] sm:$0x1]
      %v2726 = vperm.slane %v2725, 0
      %v2727 = vmul.f32 %v2555, %v2726
      %v2728 = vmul.f32 %v2726, 0.0
      %v2729 = vmul.f32 %v2556, %v2726
      %v2730 = vmul.f32 %v2557, %v2726
      %v2735 = vrot.slane %v2727, 5
      %v2736 = vrot.slane %v2728, 5
      %v2737 = vsel %vm2549, %v2735, %v2736
      %v2738 = vrot.slane %v2729, 5
      %v2739 = vsel %vm2549, %v2738, %v2736
      %v2740 = vrot.slane %v2730, 5
      %v2741 = vsel %vm2549, %v2740, %v2736
      %v2745 = vadd.f32 %v2722, %v2737
      %v2746 = vadd.f32 %v2723, %v2739
      %v2747 = vadd.f32 %v2724, %v2741
      %v2748 = vld [vmem:[%s5 + $0xd] sm:$0x1]
      %v2749 = vperm.slane %v2748, 0
      %v2750 = vmul.f32 %v2555, %v2749
      %v2751 = vmul.f32 %v2749, 0.0
      %v2752 = vmul.f32 %v2556, %v2749
      %v2753 = vmul.f32 %v2557, %v2749
      %v2758 = vrot.slane %v2750, 6
      %v2759 = vrot.slane %v2751, 6
      %v2760 = vsel %vm2639, %v2758, %v2759
      %v2761 = vrot.slane %v2752, 6
      %v2762 = vsel %vm2639, %v2761, %v2759
      %v2763 = vrot.slane %v2753, 6
      %v2764 = vsel %vm2639, %v2763, %v2759
      %v2768 = vadd.f32 %v2745, %v2760
      %v2769 = vadd.f32 %v2746, %v2762
      %v2770 = vadd.f32 %v2747, %v2764
      %v2771 = vld [vmem:[%s5 + $0xe] sm:$0x1]
      %v2772 = vperm.slane %v2771, 0
      %v2773 = vmul.f32 %v2555, %v2772
      %v2774 = vmul.f32 %v2556, %v2772
      %v2775 = vmul.f32 %v2557, %v2772
      %v2776 = vmul.f32 %v2558, %v2772
      %v2777 = vadd.f32 %v2768, %v2773
      %v2778 = vadd.f32 %v2768, %v2774
      %v2779 = vadd.f32 %v2769, %v2775
      %v2780 = vadd.f32 %v2770, %v2776
      %v2781 = vld [vmem:[%s5 + $0xf] sm:$0x1]
      %v2782 = vperm.slane %v2781, 0
      %v2783 = vmul.f32 %v2555, %v2782
      %v2784 = vmul.f32 %v2556, %v2782
      %v2785 = vmul.f32 %v2557, %v2782
      %v2786 = vmul.f32 %v2558, %v2782
      %v2791 = vrot.slane %v2783, 1
      %v2792 = vrot.slane %v2784, 1
      %v2793 = vrot.slane %v2785, 1
      %v2794 = vrot.slane %v2786, 1
      %v2799 = vadd.f32 %v2777, %v2791
      %v2800 = vadd.f32 %v2778, %v2792
      %v2801 = vadd.f32 %v2779, %v2793
      %v2802 = vadd.f32 %v2780, %v2794
      %v2803 = vld [vmem:[%s5 + $0x10] sm:$0x1]
      %v2804 = vperm.slane %v2803, 0
      %v2805 = vmul.f32 %v2555, %v2804
      %v2806 = vmul.f32 %v2556, %v2804
      %v2807 = vmul.f32 %v2557, %v2804
      %v2808 = vmul.f32 %v2558, %v2804
      %v2813 = vrot.slane %v2805, 2
      %v2814 = vrot.slane %v2806, 2
      %v2815 = vrot.slane %v2807, 2
      %v2816 = vrot.slane %v2808, 2
      %v2821 = vadd.f32 %v2799, %v2813
      %v2822 = vadd.f32 %v2800, %v2814
      %v2823 = vadd.f32 %v2801, %v2815
      %v2824 = vadd.f32 %v2802, %v2816
      %v2825 = vld [vmem:[%s5 + $0x11] sm:$0x1]
      %v2826 = vperm.slane %v2825, 0
      %v2827 = vmul.f32 %v2555, %v2826
      %v2828 = vmul.f32 %v2556, %v2826
      %v2829 = vmul.f32 %v2557, %v2826
      %v2830 = vmul.f32 %v2558, %v2826
      %v2835 = vrot.slane %v2827, 3
      %v2836 = vrot.slane %v2828, 3
      %v2837 = vrot.slane %v2829, 3
      %v2838 = vrot.slane %v2830, 3
      %v2843 = vadd.f32 %v2821, %v2835
      %v2844 = vadd.f32 %v2822, %v2836
      %v2845 = vadd.f32 %v2823, %v2837
      %v2846 = vadd.f32 %v2824, %v2838
      %v2847 = vld [vmem:[%s5 + $0x12] sm:$0x1]
      %v2848 = vperm.slane %v2847, 0
      %v2849 = vmul.f32 %v2555, %v2848
      %v2850 = vmul.f32 %v2556, %v2848
      %v2851 = vmul.f32 %v2557, %v2848
      %v2852 = vmul.f32 %v2558, %v2848
      %v2857 = vrot.slane %v2849, 4
      %v2858 = vrot.slane %v2850, 4
      %v2859 = vrot.slane %v2851, 4
      %v2860 = vrot.slane %v2852, 4
      %v2865 = vadd.f32 %v2843, %v2857
      %v2866 = vadd.f32 %v2844, %v2858
      %v2867 = vadd.f32 %v2845, %v2859
      %v2868 = vadd.f32 %v2846, %v2860
      %v2869 = vld [vmem:[%s5 + $0x13] sm:$0x1]
      %v2870 = vperm.slane %v2869, 0
      %v2871 = vmul.f32 %v2555, %v2870
      %v2872 = vmul.f32 %v2870, 0.0
      %v2873 = vmul.f32 %v2556, %v2870
      %v2874 = vmul.f32 %v2557, %v2870
      %v2875 = vmul.f32 %v2558, %v2870
      %v2881 = vrot.slane %v2871, 5
      %v2882 = vrot.slane %v2872, 5
      %v2883 = vsel %vm2549, %v2881, %v2882
      %v2884 = vrot.slane %v2873, 5
      %v2885 = vsel %vm2549, %v2884, %v2882
      %v2886 = vrot.slane %v2874, 5
      %v2887 = vsel %vm2549, %v2886, %v2882
      %v2888 = vrot.slane %v2875, 5
      %v2889 = vsel %vm2549, %v2888, %v2882
      %v2894 = vadd.f32 %v2865, %v2883
      %v2895 = vadd.f32 %v2866, %v2885
      %v2896 = vadd.f32 %v2867, %v2887
      %v2897 = vadd.f32 %v2868, %v2889
      %v2898 = vld [vmem:[%s5 + $0x14] sm:$0x1]
      %v2899 = vperm.slane %v2898, 0
      %v2900 = vmul.f32 %v2555, %v2899
      %v2901 = vmul.f32 %v2899, 0.0
      %v2902 = vmul.f32 %v2556, %v2899
      %v2903 = vmul.f32 %v2557, %v2899
      %v2904 = vmul.f32 %v2558, %v2899
      %v2910 = vrot.slane %v2900, 6
      %v2911 = vrot.slane %v2901, 6
      %v2912 = vsel %vm2639, %v2910, %v2911
      %v2913 = vrot.slane %v2902, 6
      %v2914 = vsel %vm2639, %v2913, %v2911
      %v2915 = vrot.slane %v2903, 6
      %v2916 = vsel %vm2639, %v2915, %v2911
      %v2917 = vrot.slane %v2904, 6
      %v2918 = vsel %vm2639, %v2917, %v2911
      %v2923 = vadd.f32 %v2894, %v2912
      %v2924 = vadd.f32 %v2895, %v2914
      %v2925 = vadd.f32 %v2896, %v2916
      %v2926 = vadd.f32 %v2897, %v2918
      %v2927 = vld [vmem:[%s5 + $0x15] sm:$0x1]
      %v2928 = vperm.slane %v2927, 0
      %v2929 = vmul.f32 %v2556, %v2928
      %v2930 = vmul.f32 %v2557, %v2928
      %v2931 = vmul.f32 %v2558, %v2928
      %v2932 = vmul.f32 %v2559, %v2928
      %v2933 = vadd.f32 %v2923, %v2929
      %v2934 = vadd.f32 %v2924, %v2930
      %v2935 = vadd.f32 %v2925, %v2931
      %v2936 = vadd.f32 %v2926, %v2932
      %v2937 = vld [vmem:[%s5 + $0x16] sm:$0x1]
      %v2938 = vperm.slane %v2937, 0
      %v2939 = vmul.f32 %v2556, %v2938
      %v2940 = vmul.f32 %v2557, %v2938
      %v2941 = vmul.f32 %v2558, %v2938
      %v2942 = vmul.f32 %v2559, %v2938
      %v2947 = vrot.slane %v2939, 1
      %v2948 = vrot.slane %v2940, 1
      %v2949 = vrot.slane %v2941, 1
      %v2950 = vrot.slane %v2942, 1
      %v2955 = vadd.f32 %v2933, %v2947
      %v2956 = vadd.f32 %v2934, %v2948
      %v2957 = vadd.f32 %v2935, %v2949
      %v2958 = vadd.f32 %v2936, %v2950
      %v2959 = vld [vmem:[%s5 + $0x17] sm:$0x1]
      %v2960 = vperm.slane %v2959, 0
      %v2961 = vmul.f32 %v2556, %v2960
      %v2962 = vmul.f32 %v2557, %v2960
      %v2963 = vmul.f32 %v2558, %v2960
      %v2964 = vmul.f32 %v2559, %v2960
      %v2969 = vrot.slane %v2961, 2
      %v2970 = vrot.slane %v2962, 2
      %v2971 = vrot.slane %v2963, 2
      %v2972 = vrot.slane %v2964, 2
      %v2977 = vadd.f32 %v2955, %v2969
      %v2978 = vadd.f32 %v2956, %v2970
      %v2979 = vadd.f32 %v2957, %v2971
      %v2980 = vadd.f32 %v2958, %v2972
      %v2981 = vld [vmem:[%s5 + $0x18] sm:$0x1]
      %v2982 = vperm.slane %v2981, 0
      %v2983 = vmul.f32 %v2556, %v2982
      %v2984 = vmul.f32 %v2557, %v2982
      %v2985 = vmul.f32 %v2558, %v2982
      %v2986 = vmul.f32 %v2559, %v2982
      %v2991 = vrot.slane %v2983, 3
      %v2992 = vrot.slane %v2984, 3
      %v2993 = vrot.slane %v2985, 3
      %v2994 = vrot.slane %v2986, 3
      %v2999 = vadd.f32 %v2977, %v2991
      %v3000 = vadd.f32 %v2978, %v2992
      %v3001 = vadd.f32 %v2979, %v2993
      %v3002 = vadd.f32 %v2980, %v2994
      %v3003 = vld [vmem:[%s5 + $0x19] sm:$0x1]
      %v3004 = vperm.slane %v3003, 0
      %v3005 = vmul.f32 %v2556, %v3004
      %v3006 = vmul.f32 %v2557, %v3004
      %v3007 = vmul.f32 %v2558, %v3004
      %v3008 = vmul.f32 %v2559, %v3004
      %v3013 = vrot.slane %v3005, 4
      %v3014 = vrot.slane %v3006, 4
      %v3015 = vrot.slane %v3007, 4
      %v3016 = vrot.slane %v3008, 4
      %v3021 = vadd.f32 %v2999, %v3013
      %v3022 = vadd.f32 %v3000, %v3014
      %v3023 = vadd.f32 %v3001, %v3015
      %v3024 = vadd.f32 %v3002, %v3016
      %v3025 = vld [vmem:[%s5 + $0x1a] sm:$0x1]
      %v3026 = vperm.slane %v3025, 0
      %v3027 = vmul.f32 %v2556, %v3026
      %v3028 = vmul.f32 %v3026, 0.0
      %v3029 = vmul.f32 %v2557, %v3026
      %v3030 = vmul.f32 %v2558, %v3026
      %v3031 = vmul.f32 %v2559, %v3026
      %v3037 = vrot.slane %v3027, 5
      %v3038 = vrot.slane %v3028, 5
      %v3039 = vsel %vm2549, %v3037, %v3038
      %v3040 = vrot.slane %v3029, 5
      %v3041 = vsel %vm2549, %v3040, %v3038
      %v3042 = vrot.slane %v3030, 5
      %v3043 = vsel %vm2549, %v3042, %v3038
      %v3044 = vrot.slane %v3031, 5
      %v3045 = vsel %vm2549, %v3044, %v3038
      %v3050 = vadd.f32 %v3021, %v3039
      %v3051 = vadd.f32 %v3022, %v3041
      %v3052 = vadd.f32 %v3023, %v3043
      %v3053 = vadd.f32 %v3024, %v3045
      %v3054 = vld [vmem:[%s5 + $0x1b] sm:$0x1]
      %v3055 = vperm.slane %v3054, 0
      %v3056 = vmul.f32 %v2556, %v3055
      %v3057 = vmul.f32 %v3055, 0.0
      %v3058 = vmul.f32 %v2557, %v3055
      %v3059 = vmul.f32 %v2558, %v3055
      %v3060 = vmul.f32 %v2559, %v3055
      %v3066 = vrot.slane %v3056, 6
      %v3067 = vrot.slane %v3057, 6
      %v3068 = vsel %vm2639, %v3066, %v3067
      %v3069 = vrot.slane %v3058, 6
      %v3070 = vsel %vm2639, %v3069, %v3067
      %v3071 = vrot.slane %v3059, 6
      %v3072 = vsel %vm2639, %v3071, %v3067
      %v3073 = vrot.slane %v3060, 6
      %v3074 = vsel %vm2639, %v3073, %v3067
      %v3079 = vadd.f32 %v3050, %v3068
      %v3080 = vadd.f32 %v3051, %v3070
      %v3081 = vadd.f32 %v3052, %v3072
      %v3082 = vadd.f32 %v3053, %v3074
      %v3083 = vld [vmem:[%s5 + $0x1c] sm:$0x1]
      %v3084 = vperm.slane %v3083, 0
      %v3085 = vmul.f32 %v2557, %v3084
      %v3086 = vmul.f32 %v2558, %v3084
      %v3087 = vmul.f32 %v2559, %v3084
      %v3088 = vmul.f32 %v2555, %v3084
      %v3089 = vadd.f32 %v3079, %v3085
      %v3090 = vadd.f32 %v3080, %v3086
      %v3091 = vadd.f32 %v3081, %v3087
      %v3092 = vadd.f32 %v3082, %v3088
      %v3093 = vld [vmem:[%s5 + $0x1d] sm:$0x1]
      %v3094 = vperm.slane %v3093, 0
      %v3095 = vmul.f32 %v2557, %v3094
      %v3096 = vmul.f32 %v2558, %v3094
      %v3097 = vmul.f32 %v2559, %v3094
      %v3098 = vmul.f32 %v2555, %v3094
      %v3103 = vrot.slane %v3095, 1
      %v3104 = vrot.slane %v3096, 1
      %v3105 = vrot.slane %v3097, 1
      %v3106 = vrot.slane %v3098, 1
      %v3111 = vadd.f32 %v3089, %v3103
      %v3112 = vadd.f32 %v3090, %v3104
      %v3113 = vadd.f32 %v3091, %v3105
      %v3114 = vadd.f32 %v3092, %v3106
      %v3115 = vld [vmem:[%s5 + $0x1e] sm:$0x1]
      %v3116 = vperm.slane %v3115, 0
      %v3117 = vmul.f32 %v2557, %v3116
      %v3118 = vmul.f32 %v2558, %v3116
      %v3119 = vmul.f32 %v2559, %v3116
      %v3120 = vmul.f32 %v2555, %v3116
      %v3125 = vrot.slane %v3117, 2
      %v3126 = vrot.slane %v3118, 2
      %v3127 = vrot.slane %v3119, 2
      %v3128 = vrot.slane %v3120, 2
      %v3133 = vadd.f32 %v3111, %v3125
      %v3134 = vadd.f32 %v3112, %v3126
      %v3135 = vadd.f32 %v3113, %v3127
      %v3136 = vadd.f32 %v3114, %v3128
      %v3137 = vld [vmem:[%s5 + $0x1f] sm:$0x1]
      %v3138 = vperm.slane %v3137, 0
      %v3139 = vmul.f32 %v2557, %v3138
      %v3140 = vmul.f32 %v2558, %v3138
      %v3141 = vmul.f32 %v2559, %v3138
      %v3142 = vmul.f32 %v2555, %v3138
      %v3147 = vrot.slane %v3139, 3
      %v3148 = vrot.slane %v3140, 3
      %v3149 = vrot.slane %v3141, 3
      %v3150 = vrot.slane %v3142, 3
      %v3155 = vadd.f32 %v3133, %v3147
      %v3156 = vadd.f32 %v3134, %v3148
      %v3157 = vadd.f32 %v3135, %v3149
      %v3158 = vadd.f32 %v3136, %v3150
      %v3159 = vld [vmem:[%s5 + $0x20] sm:$0x1]
      %v3160 = vperm.slane %v3159, 0
      %v3161 = vmul.f32 %v2557, %v3160
      %v3162 = vmul.f32 %v2558, %v3160
      %v3163 = vmul.f32 %v2559, %v3160
      %v3164 = vmul.f32 %v2555, %v3160
      %v3169 = vrot.slane %v3161, 4
      %v3170 = vrot.slane %v3162, 4
      %v3171 = vrot.slane %v3163, 4
      %v3172 = vrot.slane %v3164, 4
      %v3177 = vadd.f32 %v3155, %v3169
      %v3178 = vadd.f32 %v3156, %v3170
      %v3179 = vadd.f32 %v3157, %v3171
      %v3180 = vadd.f32 %v3158, %v3172
      %v3181 = vld [vmem:[%s5 + $0x21] sm:$0x1]
      %v3182 = vperm.slane %v3181, 0
      %v3183 = vmul.f32 %v2557, %v3182
      %v3184 = vmul.f32 %v3182, 0.0
      %v3185 = vmul.f32 %v2558, %v3182
      %v3186 = vmul.f32 %v2559, %v3182
      %v3187 = vmul.f32 %v2555, %v3182
      %v3193 = vrot.slane %v3183, 5
      %v3194 = vrot.slane %v3184, 5
      %v3195 = vsel %vm2549, %v3193, %v3194
      %v3196 = vrot.slane %v3185, 5
      %v3197 = vsel %vm2549, %v3196, %v3194
      %v3198 = vrot.slane %v3186, 5
      %v3199 = vsel %vm2549, %v3198, %v3194
      %v3200 = vrot.slane %v3187, 5
      %v3201 = vsel %vm2549, %v3200, %v3194
      %v3206 = vadd.f32 %v3177, %v3195
      %v3207 = vadd.f32 %v3178, %v3197
      %v3208 = vadd.f32 %v3179, %v3199
      %v3209 = vadd.f32 %v3180, %v3201
      %v3210 = vld [vmem:[%s5 + $0x22] sm:$0x1]
      %v3211 = vperm.slane %v3210, 0
      %v3212 = vmul.f32 %v2557, %v3211
      %v3213 = vmul.f32 %v3211, 0.0
      %v3214 = vmul.f32 %v2558, %v3211
      %v3215 = vmul.f32 %v2559, %v3211
      %v3216 = vmul.f32 %v2555, %v3211
      %v3222 = vrot.slane %v3212, 6
      %v3223 = vrot.slane %v3213, 6
      %v3224 = vsel %vm2639, %v3222, %v3223
      %v3225 = vrot.slane %v3214, 6
      %v3226 = vsel %vm2639, %v3225, %v3223
      %v3227 = vrot.slane %v3215, 6
      %v3228 = vsel %vm2639, %v3227, %v3223
      %v3229 = vrot.slane %v3216, 6
      %v3230 = vsel %vm2639, %v3229, %v3223
      %v3235 = vadd.f32 %v3206, %v3224
      %v3236 = vadd.f32 %v3207, %v3226
      %v3237 = vadd.f32 %v3208, %v3228
      %v3238 = vadd.f32 %v3209, %v3230
      %v3239 = vld [vmem:[%s5 + $0x23] sm:$0x1]
      %v3240 = vperm.slane %v3239, 0
      %v3241 = vmul.f32 %v2558, %v3240
      %v3242 = vmul.f32 %v2559, %v3240
      %v3243 = vmul.f32 %v2555, %v3240
      %v3244 = vadd.f32 %v3235, %v3241
      %v3245 = vadd.f32 %v3236, %v3242
      %v3246 = vadd.f32 %v3237, %v3243
      %v3247 = vadd.f32 %v3238, %v3243
      %v3248 = vld [vmem:[%s5 + $0x24] sm:$0x1]
      %v3249 = vperm.slane %v3248, 0
      %v3250 = vmul.f32 %v2558, %v3249
      %v3251 = vmul.f32 %v2559, %v3249
      %v3252 = vmul.f32 %v2555, %v3249
      %v3256 = vrot.slane %v3250, 1
      %v3257 = vrot.slane %v3251, 1
      %v3258 = vrot.slane %v3252, 1
      %v3262 = vadd.f32 %v3244, %v3256
      %v3263 = vadd.f32 %v3245, %v3257
      %v3264 = vadd.f32 %v3246, %v3258
      %v3265 = vadd.f32 %v3247, %v3258
      %v3266 = vld [vmem:[%s5 + $0x25] sm:$0x1]
      %v3267 = vperm.slane %v3266, 0
      %v3268 = vmul.f32 %v2558, %v3267
      %v3269 = vmul.f32 %v2559, %v3267
      %v3270 = vmul.f32 %v2555, %v3267
      %v3274 = vrot.slane %v3268, 2
      %v3275 = vrot.slane %v3269, 2
      %v3276 = vrot.slane %v3270, 2
      %v3280 = vadd.f32 %v3262, %v3274
      %v3281 = vadd.f32 %v3263, %v3275
      %v3282 = vadd.f32 %v3264, %v3276
      %v3283 = vadd.f32 %v3265, %v3276
      %v3284 = vld [vmem:[%s5 + $0x26] sm:$0x1]
      %v3285 = vperm.slane %v3284, 0
      %v3286 = vmul.f32 %v2558, %v3285
      %v3287 = vmul.f32 %v2559, %v3285
      %v3288 = vmul.f32 %v2555, %v3285
      %v3292 = vrot.slane %v3286, 3
      %v3293 = vrot.slane %v3287, 3
      %v3294 = vrot.slane %v3288, 3
      %v3298 = vadd.f32 %v3280, %v3292
      %v3299 = vadd.f32 %v3281, %v3293
      %v3300 = vadd.f32 %v3282, %v3294
      %v3301 = vadd.f32 %v3283, %v3294
      %v3302 = vld [vmem:[%s5 + $0x27] sm:$0x1]
      %v3303 = vperm.slane %v3302, 0
      %v3304 = vmul.f32 %v2558, %v3303
      %v3305 = vmul.f32 %v2559, %v3303
      %v3306 = vmul.f32 %v2555, %v3303
      %v3310 = vrot.slane %v3304, 4
      %v3311 = vrot.slane %v3305, 4
      %v3312 = vrot.slane %v3306, 4
      %v3316 = vadd.f32 %v3298, %v3310
      %v3317 = vadd.f32 %v3299, %v3311
      %v3318 = vadd.f32 %v3300, %v3312
      %v3319 = vadd.f32 %v3301, %v3312
      %v3320 = vld [vmem:[%s5 + $0x28] sm:$0x1]
      %v3321 = vperm.slane %v3320, 0
      %v3322 = vmul.f32 %v2558, %v3321
      %v3323 = vmul.f32 %v3321, 0.0
      %v3324 = vmul.f32 %v2559, %v3321
      %v3325 = vmul.f32 %v2555, %v3321
      %v3330 = vrot.slane %v3322, 5
      %v3331 = vrot.slane %v3323, 5
      %v3332 = vsel %vm2549, %v3330, %v3331
      %v3333 = vrot.slane %v3324, 5
      %v3334 = vsel %vm2549, %v3333, %v3331
      %v3335 = vrot.slane %v3325, 5
      %v3336 = vsel %vm2549, %v3335, %v3331
      %v3340 = vadd.f32 %v3316, %v3332
      %v3341 = vadd.f32 %v3317, %v3334
      %v3342 = vadd.f32 %v3318, %v3336
      %v3343 = vadd.f32 %v3319, %v3336
      %v3344 = vld [vmem:[%s5 + $0x29] sm:$0x1]
      %v3345 = vperm.slane %v3344, 0
      %v3346 = vmul.f32 %v2558, %v3345
      %v3347 = vmul.f32 %v3345, 0.0
      %v3348 = vmul.f32 %v2559, %v3345
      %v3349 = vmul.f32 %v2555, %v3345
      %v3354 = vrot.slane %v3346, 6
      %v3355 = vrot.slane %v3347, 6
      %v3356 = vsel %vm2639, %v3354, %v3355
      %v3357 = vrot.slane %v3348, 6
      %v3358 = vsel %vm2639, %v3357, %v3355
      %v3359 = vrot.slane %v3349, 6
      %v3360 = vsel %vm2639, %v3359, %v3355
      %v3364 = vadd.f32 %v3340, %v3356
      %v3365 = vadd.f32 %v3341, %v3358
      %v3366 = vadd.f32 %v3342, %v3360
      %v3367 = vadd.f32 %v3343, %v3360
      %v3368 = vld [vmem:[%s5 + $0x2a] sm:$0x1]
      %v3369 = vperm.slane %v3368, 0
      %v3370 = vmul.f32 %v2559, %v3369
      %v3371 = vmul.f32 %v2555, %v3369
      %v3372 = vadd.f32 %v3364, %v3370
      %v3373 = vadd.f32 %v3365, %v3371
      %v3374 = vadd.f32 %v3366, %v3371
      %v3375 = vadd.f32 %v3367, %v3371
      %v3376 = vld [vmem:[%s5 + $0x2b] sm:$0x1]
      %v3377 = vperm.slane %v3376, 0
      %v3378 = vmul.f32 %v2559, %v3377
      %v3379 = vmul.f32 %v2555, %v3377
      %v3382 = vrot.slane %v3378, 1
      %v3383 = vrot.slane %v3379, 1
      %v3386 = vadd.f32 %v3372, %v3382
      %v3387 = vadd.f32 %v3373, %v3383
      %v3388 = vadd.f32 %v3374, %v3383
      %v3389 = vadd.f32 %v3375, %v3383
      %v3390 = vld [vmem:[%s5 + $0x2c] sm:$0x1]
      %v3391 = vperm.slane %v3390, 0
      %v3392 = vmul.f32 %v2559, %v3391
      %v3393 = vmul.f32 %v2555, %v3391
      %v3396 = vrot.slane %v3392, 2
      %v3397 = vrot.slane %v3393, 2
      %v3400 = vadd.f32 %v3386, %v3396
      %v3401 = vadd.f32 %v3387, %v3397
      %v3402 = vadd.f32 %v3388, %v3397
      %v3403 = vadd.f32 %v3389, %v3397
      %v3404 = vld [vmem:[%s5 + $0x2d] sm:$0x1]
      %v3405 = vperm.slane %v3404, 0
      %v3406 = vmul.f32 %v2559, %v3405
      %v3407 = vmul.f32 %v2555, %v3405
      %v3410 = vrot.slane %v3406, 3
      %v3411 = vrot.slane %v3407, 3
      %v3414 = vadd.f32 %v3400, %v3410
      %v3415 = vadd.f32 %v3401, %v3411
      %v3416 = vadd.f32 %v3402, %v3411
      %v3417 = vadd.f32 %v3403, %v3411
      %v3418 = vld [vmem:[%s5 + $0x2e] sm:$0x1]
      %v3419 = vperm.slane %v3418, 0
      %v3420 = vmul.f32 %v2559, %v3419
      %v3421 = vmul.f32 %v2555, %v3419
      %v3424 = vrot.slane %v3420, 4
      %v3425 = vrot.slane %v3421, 4
      %v3428 = vadd.f32 %v3414, %v3424
      %v3429 = vadd.f32 %v3415, %v3425
      %v3430 = vadd.f32 %v3416, %v3425
      %v3431 = vadd.f32 %v3417, %v3425
      %v3432 = vld [vmem:[%s5 + $0x2f] sm:$0x1]
      %v3433 = vperm.slane %v3432, 0
      %v3434 = vmul.f32 %v2559, %v3433
      %v3435 = vmul.f32 %v3433, 0.0
      %v3436 = vmul.f32 %v2555, %v3433
      %v3440 = vrot.slane %v3434, 5
      %v3441 = vrot.slane %v3435, 5
      %v3442 = vsel %vm2549, %v3440, %v3441
      %v3443 = vrot.slane %v3436, 5
      %v3444 = vsel %vm2549, %v3443, %v3441
      %v3447 = vadd.f32 %v3428, %v3442
      %v3448 = vadd.f32 %v3429, %v3444
      %v3449 = vadd.f32 %v3430, %v3444
      %v3450 = vadd.f32 %v3431, %v3444
      %v3451 = vld [vmem:[%s5 + $0x30] sm:$0x1]
      %v3452 = vperm.slane %v3451, 0
      %v3453 = vmul.f32 %v2559, %v3452
      %v3454 = vmul.f32 %v3452, 0.0
      %v3455 = vmul.f32 %v2555, %v3452
      %v3459 = vrot.slane %v3453, 6
      %v3460 = vrot.slane %v3454, 6
      %v3461 = vsel %vm2639, %v3459, %v3460
      %v3462 = vrot.slane %v3455, 6
      %v3463 = vsel %vm2639, %v3462, %v3460
      %v3466 = vadd.f32 %v3447, %v3461
      %v3467 = vadd.f32 %v3448, %v3463
      %v3468 = vadd.f32 %v3449, %v3463
      %v3469 = vadd.f32 %v3450, %v3463
      %3474 = vst [vmem:[#allocation1] ss:$2 sm:$0xff] %v3466
      %s3475 = scalar_lea.vmem [#allocation1], 1
      %3476 = vst [vmem:[%s3475] ss:$2 sm:$0xff] %v3467
      %s3477 = scalar_lea.vmem [#allocation1], 16
      %3478 = vst [vmem:[%s3477] ss:$2 sm:$0xff] %v3468
      %s3479 = scalar_lea.vmem [#allocation1], 17
      %3480 = vst [vmem:[%s3479] ss:$2 sm:$0xff] %v3469
      %v3481 = vld.sshfl [vmem:[#allocation1] sm:$0xff pattern:$0x75316420]
      %v3482 = vld.sshfl [vmem:[#allocation1 + $0x10] sm:$0xff pattern:$0x75316420]
      %vm3485 = vcmask 261120
      %v3486 = vsel %vm3485, %v3481, 0.0
      %3487 = vadd.xlane.f32.xlu0 %v3486
      %v3488 = vpop.xlane.xlu0 %3487
      %v3489 = vsel %vm3485, %v3482, 0.0
      %3490 = vadd.xlane.f32.xlu0 %v3489
      %v3491 = vpop.xlane.xlu0 %3490
      %v3492 = vld [vmem:[#allocation2] sm:$0x1]
      %3494 = vset.pattern.permute.xlu0 0
      %3495 = vperm.xlu0 %3494, %v3492
      %v3496 = vpop.permute.xlu0 %3495
      %v3498 = vperm.slane %v3496, 0
      %v3499 = vadd.f32 %v3488, %v3498
      %v3500 = vadd.f32 %v3491, %v3498
      %v3503 = vlaneseq
      %v3504 = vand.u32 %v3503, 127
      %v3505 = vperm.slane %v3499, %v3504
      %v3506 = vadd.s32 %v3504, 4294967288
      %v3507 = vperm.slane %v3500, %v3506
      %vm3508 = vcmask 130112
      %v3509 = vsel %vm3508, %v3507, %v3505
      %vm3511 = vcmask 122880
      %3512 = vst.msk [vmem:[%s276] sm:$0x1] %vm3511, %v3509
      %p3513 = scmp.lt.s32.totalorder %s20, 1
      %s3514 = scalar_select %p3513, %s20, 1
      %s3515 = scalar_lea.vmem %s7, %s3514
      // Predicated region
      $region49: #{eye_encoder_forward.1} parent=47 // pred_check
        %p3516 = pneg %p190
      $region50: #{eye_encoder_forward.1} parent=47 // pred_check_branch
        %3518 = sbr.rel (%p3516) target = $region52
      $region51: #{eye_encoder_forward.1} parent=47 // pred_region
        _
      $region52: #{eye_encoder_forward.1} parent=47 // pred_fallthru
        _
    $region48: #{eye_encoder_forward.1} parent=5 // pred_fallthru
      _
    %p3519 = scmp.le.s32.totalorder 2, %s15
    // Predicated region
    $region53: #{eye_encoder_forward.1} parent=5 // pred_check
      %p3520 = pneg %p3519
    $region54: #{eye_encoder_forward.1} parent=5 // pred_check_branch
      %3522 = sbr.rel (%p3520) target = $region56
    $region55: #{eye_encoder_forward.1} parent=5 // pred_region
      %s3523 = ssub.s32 %s15, 2
      // Predicated region
      $region57: #{eye_encoder_forward.1} parent=55 // pred_check
        %p3524 = pneg %p196
      $region58: #{eye_encoder_forward.1} parent=55 // pred_check_branch
        %3526 = sbr.rel (%p3524) target = $region60
      $region59: #{eye_encoder_forward.1} parent=55 // pred_region
        %p3527 = scmp.lt.s32.totalorder %s21, 1
        %s3528 = scalar_select %p3527, %s21, 1
        %s3529 = scalar_lea.vmem %s7, %s3528
      $region60: #{eye_encoder_forward.1} parent=55 // pred_fallthru
        _
    $region56: #{eye_encoder_forward.1} parent=5 // pred_fallthru
      _
  $region6: #{eye_encoder_forward.1} parent=0 // loop_footer
    %s19 = sadd.s32 1, %s15
  $region7: #{eye_encoder_forward.1} parent=0 // loop_footer_branch
    %14 = sbr.rel target = $region3
  $region8: #{eye_encoder_forward.1} parent=0 // loop_exit
    _

</llo_original>
